<compile_context>
chip_gen: v5e
topology: v5e:2x2
jax: 0.10.0
libtpu: 0.0.40
codegen_flags: <defaults>
</compile_context>

<pallas_src>
import jax
import jax.numpy as jnp
from jax.experimental import pallas as pl
from jax.experimental.pallas import tpu as pltpu

EPS = 1e-5
N_TAP1 = 5      # Conv1d(1, 10, 5) per branch
N_CH1 = 10
N_BRANCH = 3
N_TAP2 = 3      # Conv1d(30, 40, 3)
N_CH2 = 40


def _bn_stats(x):
    """Single-pass BN batch statistics (training mode, biased variance).
    Stats over all axes except the last (channel) axis."""
    n = 1
    s = x
    ss = x * x
    for ax in range(x.ndim - 1):            # chained single-axis sums (safe lowering)
        s = jnp.sum(s, axis=ax, keepdims=True)
        ss = jnp.sum(ss, axis=ax, keepdims=True)
        n *= x.shape[ax]
    mu = s / n
    var = jnp.maximum(ss / n - mu * mu, 0.0)   # clamp tiny negative cancellation
    return mu, var


def class_model_kernel(xcols_ref, sel_ref, w1_ref, w2_ref, wfc_ref, vecs_ref, out_ref):
    B, T1, _ = xcols_ref.shape
    QT, C2 = sel_ref.shape                    # (q*T2, 40); q*T2 == 40 by construction
    q, T2, _ = wfc_ref.shape
    f32 = jnp.float32
    bf16 = jnp.bfloat16

    # ---- packed per-channel parameter slab (one DMA) -------------------------
    vecs = vecs_ref[...]                      # (8, 128) f32
    g1 = vecs[0:1, 0:30].reshape(1, 1, 30)
    bt1 = vecs[1:2, 0:30].reshape(1, 1, 30)
    g2 = vecs[2:3, 0:40].reshape(1, 1, 40)
    bt2 = vecs[3:4, 0:40].reshape(1, 1, 40)
    g3 = vecs[4:5, 0:40].reshape(1, 1, 40)
    bt3 = vecs[5:6, 0:40]                     # (1, 40)
    wcd = vecs[6:7, 0:40]                     # (1, 40)
    bcd = vecs[7:8, 0:1]                      # (1, 1)

    # ---- stage 1: three Conv1d(1,10,5) branches as ONE im2col bf16 matmul ----
    # (conv biases omitted: cancelled by the training-mode BN that follows)
    y = jax.lax.dot_general(xcols_ref[...], w1_ref[...],
                            (((2,), (0,)), ((), ())),
                            preferred_element_type=f32)          # (B, T1, 30) f32
    mu1, var1 = _bn_stats(y)
    y = (y - mu1) * (g1 * jax.lax.rsqrt(var1 + EPS)) + bt1       # 3x BN1d(10) == BN(30)
    y = jnp.maximum(y, 0.0)
    yb = y.astype(bf16)

    # ---- stage 2: Conv1d(30,40,3) as 3 per-tap K=30 bf16 matmuls -------------
    # TODO(synk): a single K=90 im2col matmul only pays off at large B; keep 3 taps.
    z = None
    for k in range(N_TAP2):
        part = jax.lax.dot_general(yb[:, k:k + T2, :], w2_ref[k],
                                   (((2,), (0,)), ((), ())),
                                   preferred_element_type=f32)   # (B, T2, 40)
        z = part if z is None else z + part
    mu2, var2 = _bn_stats(z)
    z = (z - mu2) * (g2 * jax.lax.rsqrt(var2 + EPS)) + bt2
    z = jnp.maximum(z, 0.0)                                      # (B, T2, 40), f32
    zb = z.astype(bf16)

    # ---- stage 3: torch `combined.view(-1,40)` + Linear(40,40), fused --------
    # flat[b*T2+m, j*T2+t] = z[b, t, m*q+j]. One stacked 0/1 selection matmul
    # (broadcast to B once) produces block_all[b, j*T2+m, t]; the column placement
    # of the FC is folded into its row-blocks wfc[j].
    sel_b = jnp.broadcast_to(sel_ref[...][None, :, :], (B, QT, C2))   # bf16, hoisted
    block_all = jax.lax.dot_general(sel_b, zb,
                                    (((2,), (2,)), ((0,), (0,))),
                                    preferred_element_type=f32)       # (B, 40, T2)
    block_b = block_all.astype(bf16)                                  # exact (selection)
    h = None
    for j in range(q):
        part = jax.lax.dot_general(block_b[:, j * T2:(j + 1) * T2, :], wfc_ref[j],
                                   (((2,), (0,)), ((), ())),
                                   preferred_element_type=f32)        # (B, T2, 40)
        h = part if h is None else h + part

    # ---- stage 4: BN(40) folded into class_dec = Linear(40,1) + sigmoid ------
    mu3, var3 = _bn_stats(h)                                     # (1,1,40)
    scale3 = g3 * jax.lax.rsqrt(var3 + EPS)                      # (1,1,40)
    w_eff = scale3 * wcd.reshape(1, 1, 40)                       # (1,1,40)
    logit = jnp.sum((h - mu3) * w_eff, axis=-1)                  # (B, T2)
    const = jnp.sum(bt3 * wcd, axis=-1, keepdims=True) + bcd     # (1, 1)
    logit = logit + const
    out_ref[...] = 1.0 / (1.0 + jnp.exp(-logit))                 # lane-dense 2D store


def init_params(key):
    ks = jax.random.split(key, 22)

    def nrm(k, shape, scale=0.1):
        return scale * jax.random.normal(k, shape, jnp.float32)

    return {
        # encoder branch convs + BNs (torch shapes). Conv/FC biases are kept for
        # module fidelity but are mathematically cancelled by the training-mode BNs.
        "w_speed": nrm(ks[0], (10, 1, 5)), "b_speed": nrm(ks[1], (10,)),
        "w_sin":   nrm(ks[2], (10, 1, 5)), "b_sin":   nrm(ks[3], (10,)),
        "w_cos":   nrm(ks[4], (10, 1, 5)), "b_cos":   nrm(ks[5], (10,)),
        "g_speed": 1.0 + nrm(ks[10], (10,)), "beta_speed": nrm(ks[11], (10,)),
        "g_sin":   1.0 + nrm(ks[12], (10,)), "beta_sin":   nrm(ks[13], (10,)),
        "g_cos":   1.0 + nrm(ks[14], (10,)), "beta_cos":   nrm(ks[15], (10,)),
        # combine conv + BN
        "w_comb": nrm(ks[6], (40, 30, 3)), "b_comb": nrm(ks[7], (40,)),
        "g_comb": 1.0 + nrm(ks[16], (40,)), "beta_comb": nrm(ks[17], (40,)),
        # FC + output BN
        "w_fc": nrm(ks[8], (40, 40)), "b_fc": nrm(ks[9], (40,)),
        "g_out": 1.0 + nrm(ks[18], (40,)), "beta_out": nrm(ks[19], (40,)),
        # class_dec
        "w_cd": nrm(ks[20], (1, 40)), "b_cd": nrm(ks[21], (1,)),
    }


def class_model_forward(speed, sin, cos, params):
    # speed / sin / cos: (B, 1, L) float32 (torch NCL layout)
    B, _, L = speed.shape
    T1, T2 = L - 4, L - 6
    # TODO(synk): general T2 (40 % T2 != 0) would need the full view(-1,40)
    # re-chunking (rows straddling channels); not supported by this kernel.
    assert T2 >= 1 and 40 % T2 == 0, "kernel requires 40 % (L-6) == 0"
    q = 40 // T2
    f32, bf16 = jnp.float32, jnp.bfloat16

    # ---- weight packing (tiny, weight-only glue) ------------------------------
    w1 = jnp.zeros((N_BRANCH * N_TAP1, N_BRANCH * N_CH1), f32)    # (15, 30) block-diag
    for r, w in enumerate((params["w_speed"], params["w_sin"], params["w_cos"])):
        w1 = w1.at[r * 5:(r + 1) * 5, r * 10:(r + 1) * 10].set(w[:, 0, :].T)
    w1 = w1.astype(bf16)

    w2 = jnp.transpose(params["w_comb"], (2, 1, 0)).astype(bf16)  # (3, 30, 40) [tap,cin,cout]
    wfc = params["w_fc"].T.reshape(q, T2, 40).astype(bf16)        # row o=j*T2+t -> [j, t, :]

    # packed per-channel parameter slab: ONE (8,128) f32 input instead of ~10 tiny ones.
    g1 = jnp.concatenate([params["g_speed"], params["g_sin"], params["g_cos"]])
    bt1 = jnp.concatenate([params["beta_speed"], params["beta_sin"], params["beta_cos"]])
    vecs = jnp.zeros((8, 128), f32)
    vecs = vecs.at[0, :30].set(g1)
    vecs = vecs.at[1, :30].set(bt1)
    vecs = vecs.at[2, :40].set(params["g_comb"])
    vecs = vecs.at[3, :40].set(params["beta_comb"])
    vecs = vecs.at[4, :40].set(params["g_out"])
    vecs = vecs.at[5, :40].set(params["beta_out"])
    vecs = vecs.at[6, :40].set(params["w_cd"][0])
    vecs = vecs.at[7, 0].set(params["b_cd"][0])
    # NOTE: b_speed/b_sin/b_cos/b_comb/b_fc are cancelled exactly by the
    # training-mode BatchNorms that follow them -> intentionally not passed.

    # ---- activation glue: lane-dense bf16 im2col of the 3 inputs --------------
    chans = (speed[:, 0, :], sin[:, 0, :], cos[:, 0, :])
    xcols = jnp.stack([c[:, k:k + T1] for c in chans for k in range(N_TAP1)],
                      axis=-1).astype(bf16)                       # (B, T1, 15)

    # stacked 0/1 selection matrix realizing view(-1,40): row r=j*T2+m picks channel m*q+j
    m_idx = jnp.arange(T2, dtype=jnp.int32)
    j_idx = jnp.arange(q, dtype=jnp.int32)
    rows_c = (m_idx[None, :] * q + j_idx[:, None]).reshape(q * T2)        # (40,)
    sel = (jnp.arange(40, dtype=jnp.int32)[None, :] == rows_c[:, None]).astype(bf16)  # (40,40)

    vmem = pl.BlockSpec(memory_space=pltpu.MemorySpace.VMEM)
    out = pl.pallas_call(
        class_model_kernel,
        out_shape=jax.ShapeDtypeStruct((B, T2), f32),             # lane-dense: no size-1 dim
        in_specs=[vmem] * 6,
        out_specs=vmem,
        compiler_params=pltpu.CompilerParams(vmem_limit_bytes=32 * 1024 * 1024),
    )(xcols, sel, w1, w2, wfc, vecs)

    # rows already ordered as b*T2 + m == the torch view(-1, 40) row order
    return out.reshape(B * T2, 1)


if __name__ == "__main__":
    key = jax.random.PRNGKey(0)
    k1, k2, k3, kp = jax.random.split(key, 4)
    B, L = 8, 16                                # T2 = L - 6 = 10; 40 % 10 == 0
    speed = jax.random.normal(k1, (B, 1, L), jnp.float32)
    sin = jax.random.normal(k2, (B, 1, L), jnp.float32)
    cos = jax.random.normal(k3, (B, 1, L), jnp.float32)
    params = init_params(kp)

    out = jax.jit(class_model_forward)(speed, sin, cos, params)
    out = jax.block_until_ready(out)
    assert out.shape == (B * (L - 6), 1)
    assert bool(jnp.all(jnp.isfinite(out)))
    assert bool(jnp.all((out >= 0.0) & (out <= 1.0)))
    print("KERNEL_OK")
</pallas_src>

<mosaic_0001>
module attributes {stable_mosaic.version = 11 : i64} {
  func.func @class_model_kernel(%arg0: memref<8x12x15xbf16, #tpu.memory_space<vmem>>, %arg1: memref<40x40xbf16, #tpu.memory_space<vmem>>, %arg2: memref<15x30xbf16, #tpu.memory_space<vmem>>, %arg3: memref<3x30x40xbf16, #tpu.memory_space<vmem>>, %arg4: memref<4x10x40xbf16, #tpu.memory_space<vmem>>, %arg5: memref<8x128xf32, #tpu.memory_space<vmem>>, %arg6: memref<8x10xf32, #tpu.memory_space<vmem>>) attributes {dimension_semantics = [], scalar_prefetch = 0 : i64, scratch_operands = 0 : i64, tpu.core_type = #tpu.core_type<tc>} {
    %c0 = arith.constant 0 : index
    %c0_0 = arith.constant 0 : index
    %0 = vector.load %arg5[%c0, %c0_0] : memref<8x128xf32, #tpu.memory_space<vmem>>, vector<8x128xf32>
    %1 = vector.extract_strided_slice %0 {offsets = [0, 0], sizes = [1, 30], strides = [1, 1]} : vector<8x128xf32> to vector<1x30xf32>
    %2 = vector.shape_cast %1 : vector<1x30xf32> to vector<1x1x30xf32>
    %3 = vector.extract_strided_slice %0 {offsets = [1, 0], sizes = [1, 30], strides = [1, 1]} : vector<8x128xf32> to vector<1x30xf32>
    %4 = vector.shape_cast %3 : vector<1x30xf32> to vector<1x1x30xf32>
    %5 = vector.extract_strided_slice %0 {offsets = [2, 0], sizes = [1, 40], strides = [1, 1]} : vector<8x128xf32> to vector<1x40xf32>
    %6 = vector.shape_cast %5 : vector<1x40xf32> to vector<1x1x40xf32>
    %7 = vector.extract_strided_slice %0 {offsets = [3, 0], sizes = [1, 40], strides = [1, 1]} : vector<8x128xf32> to vector<1x40xf32>
    %8 = vector.shape_cast %7 : vector<1x40xf32> to vector<1x1x40xf32>
    %9 = vector.extract_strided_slice %0 {offsets = [4, 0], sizes = [1, 40], strides = [1, 1]} : vector<8x128xf32> to vector<1x40xf32>
    %10 = vector.shape_cast %9 : vector<1x40xf32> to vector<1x1x40xf32>
    %11 = vector.extract_strided_slice %0 {offsets = [5, 0], sizes = [1, 40], strides = [1, 1]} : vector<8x128xf32> to vector<1x40xf32>
    %12 = vector.extract_strided_slice %0 {offsets = [6, 0], sizes = [1, 40], strides = [1, 1]} : vector<8x128xf32> to vector<1x40xf32>
    %13 = vector.extract_strided_slice %0 {offsets = [7, 0], sizes = [1, 1], strides = [1, 1]} : vector<8x128xf32> to vector<1x1xf32>
    %c0_1 = arith.constant 0 : index
    %c0_2 = arith.constant 0 : index
    %c0_3 = arith.constant 0 : index
    %14 = vector.load %arg0[%c0_1, %c0_2, %c0_3] : memref<8x12x15xbf16, #tpu.memory_space<vmem>>, vector<8x12x15xbf16>
    %c0_4 = arith.constant 0 : index
    %c0_5 = arith.constant 0 : index
    %15 = vector.load %arg2[%c0_4, %c0_5] : memref<15x30xbf16, #tpu.memory_space<vmem>>, vector<15x30xbf16>
    %cst = arith.constant dense<0.000000e+00> : vector<8x12x30xf32>
    %16 = tpu.matmul %14, %15, %cst {dimension_numbers = #tpu.dot_dimension_numbers<[2], [0], [0, 1], [1], [0, 0, 0, 1, 1, 1], [], []>} : vector<8x12x15xbf16>, vector<15x30xbf16>, vector<8x12x30xf32> -> vector<8x12x30xf32>
    %17 = arith.mulf %16, %16 : vector<8x12x30xf32>
    %cst_6 = arith.constant dense<0.000000e+00> : vector<12x30xf32>
    %18 = vector.multi_reduction <add>, %16, %cst_6 [0] : vector<8x12x30xf32> to vector<12x30xf32>
    %19 = vector.shape_cast %18 : vector<12x30xf32> to vector<1x12x30xf32>
    %cst_7 = arith.constant dense<0.000000e+00> : vector<12x30xf32>
    %20 = vector.multi_reduction <add>, %17, %cst_7 [0] : vector<8x12x30xf32> to vector<12x30xf32>
    %21 = vector.shape_cast %20 : vector<12x30xf32> to vector<1x12x30xf32>
    %cst_8 = arith.constant dense<0.000000e+00> : vector<1x30xf32>
    %22 = vector.multi_reduction <add>, %19, %cst_8 [1] : vector<1x12x30xf32> to vector<1x30xf32>
    %23 = vector.shape_cast %22 : vector<1x30xf32> to vector<1x1x30xf32>
    %cst_9 = arith.constant dense<0.000000e+00> : vector<1x30xf32>
    %24 = vector.multi_reduction <add>, %21, %cst_9 [1] : vector<1x12x30xf32> to vector<1x30xf32>
    %25 = vector.shape_cast %24 : vector<1x30xf32> to vector<1x1x30xf32>
    %cst_10 = arith.constant 9.600000e+01 : f32
    %26 = vector.broadcast %cst_10 : f32 to vector<1x1x30xf32>
    %27 = arith.divf %23, %26 : vector<1x1x30xf32>
    %cst_11 = arith.constant 9.600000e+01 : f32
    %28 = vector.broadcast %cst_11 : f32 to vector<1x1x30xf32>
    %29 = arith.divf %25, %28 : vector<1x1x30xf32>
    %30 = arith.mulf %27, %27 : vector<1x1x30xf32>
    %31 = arith.subf %29, %30 : vector<1x1x30xf32>
    %cst_12 = arith.constant 0.000000e+00 : f32
    %32 = vector.broadcast %cst_12 : f32 to vector<1x1x30xf32>
    %33 = arith.maximumf %31, %32 : vector<1x1x30xf32>
    %34 = vector.broadcast %27 : vector<1x1x30xf32> to vector<8x12x30xf32>
    %35 = arith.subf %16, %34 : vector<8x12x30xf32>
    %cst_13 = arith.constant 9.99999974E-6 : f32
    %36 = vector.broadcast %cst_13 : f32 to vector<1x1x30xf32>
    %37 = arith.addf %33, %36 : vector<1x1x30xf32>
    %38 = math.rsqrt %37 : vector<1x1x30xf32>
    %39 = arith.mulf %2, %38 : vector<1x1x30xf32>
    %40 = vector.broadcast %39 : vector<1x1x30xf32> to vector<8x12x30xf32>
    %41 = arith.mulf %35, %40 : vector<8x12x30xf32>
    %42 = vector.broadcast %4 : vector<1x1x30xf32> to vector<8x12x30xf32>
    %43 = arith.addf %41, %42 : vector<8x12x30xf32>
    %cst_14 = arith.constant 0.000000e+00 : f32
    %44 = vector.broadcast %cst_14 : f32 to vector<8x12x30xf32>
    %45 = arith.maximumf %43, %44 : vector<8x12x30xf32>
    %46 = arith.truncf %45 : vector<8x12x30xf32> to vector<8x12x30xbf16>
    %47 = vector.extract_strided_slice %46 {offsets = [0, 0, 0], sizes = [8, 10, 30], strides = [1, 1, 1]} : vector<8x12x30xbf16> to vector<8x10x30xbf16>
    %c0_15 = arith.constant 0 : index
    %c0_16 = arith.constant 0 : index
    %c0_17 = arith.constant 0 : index
    %48 = vector.load %arg3[%c0_15, %c0_16, %c0_17] : memref<3x30x40xbf16, #tpu.memory_space<vmem>>, vector<1x30x40xbf16>
    %49 = vector.shape_cast %48 : vector<1x30x40xbf16> to vector<30x40xbf16>
    %cst_18 = arith.constant dense<0.000000e+00> : vector<8x10x40xf32>
    %50 = tpu.matmul %47, %49, %cst_18 {dimension_numbers = #tpu.dot_dimension_numbers<[2], [0], [0, 1], [1], [0, 0, 0, 1, 1, 1], [], []>} : vector<8x10x30xbf16>, vector<30x40xbf16>, vector<8x10x40xf32> -> vector<8x10x40xf32>
    %51 = vector.extract_strided_slice %46 {offsets = [0, 1, 0], sizes = [8, 10, 30], strides = [1, 1, 1]} : vector<8x12x30xbf16> to vector<8x10x30xbf16>
    %c1 = arith.constant 1 : index
    %c0_19 = arith.constant 0 : index
    %c0_20 = arith.constant 0 : index
    %52 = vector.load %arg3[%c1, %c0_19, %c0_20] : memref<3x30x40xbf16, #tpu.memory_space<vmem>>, vector<1x30x40xbf16>
    %53 = vector.shape_cast %52 : vector<1x30x40xbf16> to vector<30x40xbf16>
    %cst_21 = arith.constant dense<0.000000e+00> : vector<8x10x40xf32>
    %54 = tpu.matmul %51, %53, %cst_21 {dimension_numbers = #tpu.dot_dimension_numbers<[2], [0], [0, 1], [1], [0, 0, 0, 1, 1, 1], [], []>} : vector<8x10x30xbf16>, vector<30x40xbf16>, vector<8x10x40xf32> -> vector<8x10x40xf32>
    %55 = arith.addf %50, %54 : vector<8x10x40xf32>
    %56 = vector.extract_strided_slice %46 {offsets = [0, 2, 0], sizes = [8, 10, 30], strides = [1, 1, 1]} : vector<8x12x30xbf16> to vector<8x10x30xbf16>
    %c2 = arith.constant 2 : index
    %c0_22 = arith.constant 0 : index
    %c0_23 = arith.constant 0 : index
    %57 = vector.load %arg3[%c2, %c0_22, %c0_23] : memref<3x30x40xbf16, #tpu.memory_space<vmem>>, vector<1x30x40xbf16>
    %58 = vector.shape_cast %57 : vector<1x30x40xbf16> to vector<30x40xbf16>
    %cst_24 = arith.constant dense<0.000000e+00> : vector<8x10x40xf32>
    %59 = tpu.matmul %56, %58, %cst_24 {dimension_numbers = #tpu.dot_dimension_numbers<[2], [0], [0, 1], [1], [0, 0, 0, 1, 1, 1], [], []>} : vector<8x10x30xbf16>, vector<30x40xbf16>, vector<8x10x40xf32> -> vector<8x10x40xf32>
    %60 = arith.addf %55, %59 : vector<8x10x40xf32>
    %61 = arith.mulf %60, %60 : vector<8x10x40xf32>
    %cst_25 = arith.constant dense<0.000000e+00> : vector<10x40xf32>
    %62 = vector.multi_reduction <add>, %60, %cst_25 [0] : vector<8x10x40xf32> to vector<10x40xf32>
    %63 = vector.shape_cast %62 : vector<10x40xf32> to vector<1x10x40xf32>
    %cst_26 = arith.constant dense<0.000000e+00> : vector<10x40xf32>
    %64 = vector.multi_reduction <add>, %61, %cst_26 [0] : vector<8x10x40xf32> to vector<10x40xf32>
    %65 = vector.shape_cast %64 : vector<10x40xf32> to vector<1x10x40xf32>
    %cst_27 = arith.constant dense<0.000000e+00> : vector<1x40xf32>
    %66 = vector.multi_reduction <add>, %63, %cst_27 [1] : vector<1x10x40xf32> to vector<1x40xf32>
    %67 = vector.shape_cast %66 : vector<1x40xf32> to vector<1x1x40xf32>
    %cst_28 = arith.constant dense<0.000000e+00> : vector<1x40xf32>
    %68 = vector.multi_reduction <add>, %65, %cst_28 [1] : vector<1x10x40xf32> to vector<1x40xf32>
    %69 = vector.shape_cast %68 : vector<1x40xf32> to vector<1x1x40xf32>
    %cst_29 = arith.constant 8.000000e+01 : f32
    %70 = vector.broadcast %cst_29 : f32 to vector<1x1x40xf32>
    %71 = arith.divf %67, %70 : vector<1x1x40xf32>
    %cst_30 = arith.constant 8.000000e+01 : f32
    %72 = vector.broadcast %cst_30 : f32 to vector<1x1x40xf32>
    %73 = arith.divf %69, %72 : vector<1x1x40xf32>
    %74 = arith.mulf %71, %71 : vector<1x1x40xf32>
    %75 = arith.subf %73, %74 : vector<1x1x40xf32>
    %cst_31 = arith.constant 0.000000e+00 : f32
    %76 = vector.broadcast %cst_31 : f32 to vector<1x1x40xf32>
    %77 = arith.maximumf %75, %76 : vector<1x1x40xf32>
    %78 = vector.broadcast %71 : vector<1x1x40xf32> to vector<8x10x40xf32>
    %79 = arith.subf %60, %78 : vector<8x10x40xf32>
    %cst_32 = arith.constant 9.99999974E-6 : f32
    %80 = vector.broadcast %cst_32 : f32 to vector<1x1x40xf32>
    %81 = arith.addf %77, %80 : vector<1x1x40xf32>
    %82 = math.rsqrt %81 : vector<1x1x40xf32>
    %83 = arith.mulf %6, %82 : vector<1x1x40xf32>
    %84 = vector.broadcast %83 : vector<1x1x40xf32> to vector<8x10x40xf32>
    %85 = arith.mulf %79, %84 : vector<8x10x40xf32>
    %86 = vector.broadcast %8 : vector<1x1x40xf32> to vector<8x10x40xf32>
    %87 = arith.addf %85, %86 : vector<8x10x40xf32>
    %cst_33 = arith.constant 0.000000e+00 : f32
    %88 = vector.broadcast %cst_33 : f32 to vector<8x10x40xf32>
    %89 = arith.maximumf %87, %88 : vector<8x10x40xf32>
    %90 = arith.truncf %89 : vector<8x10x40xf32> to vector<8x10x40xbf16>
    %c0_34 = arith.constant 0 : index
    %c0_35 = arith.constant 0 : index
    %91 = vector.load %arg1[%c0_34, %c0_35] : memref<40x40xbf16, #tpu.memory_space<vmem>>, vector<40x40xbf16>
    %92 = vector.shape_cast %91 : vector<40x40xbf16> to vector<1x40x40xbf16>
    %93 = vector.shape_cast %92 : vector<1x40x40xbf16> to vector<1x40x40xbf16>
    %94 = vector.broadcast %93 : vector<1x40x40xbf16> to vector<8x40x40xbf16>
    %cst_36 = arith.constant dense<0.000000e+00> : vector<8x40x10xf32>
    %95 = tpu.matmul %94, %90, %cst_36 {dimension_numbers = #tpu.dot_dimension_numbers<[2], [2], [1], [1], [0, 0, 0, 1, 1, 1], [0], [0]>} : vector<8x40x40xbf16>, vector<8x10x40xbf16>, vector<8x40x10xf32> -> vector<8x40x10xf32>
    %96 = arith.truncf %95 : vector<8x40x10xf32> to vector<8x40x10xbf16>
    %97 = vector.extract_strided_slice %96 {offsets = [0, 0, 0], sizes = [8, 10, 10], strides = [1, 1, 1]} : vector<8x40x10xbf16> to vector<8x10x10xbf16>
    %c0_37 = arith.constant 0 : index
    %c0_38 = arith.constant 0 : index
    %c0_39 = arith.constant 0 : index
    %98 = vector.load %arg4[%c0_37, %c0_38, %c0_39] : memref<4x10x40xbf16, #tpu.memory_space<vmem>>, vector<1x10x40xbf16>
    %99 = vector.shape_cast %98 : vector<1x10x40xbf16> to vector<10x40xbf16>
    %cst_40 = arith.constant dense<0.000000e+00> : vector<8x10x40xf32>
    %100 = tpu.matmul %97, %99, %cst_40 {dimension_numbers = #tpu.dot_dimension_numbers<[2], [0], [0, 1], [1], [0, 0, 0, 1, 1, 1], [], []>} : vector<8x10x10xbf16>, vector<10x40xbf16>, vector<8x10x40xf32> -> vector<8x10x40xf32>
    %101 = vector.extract_strided_slice %96 {offsets = [0, 10, 0], sizes = [8, 10, 10], strides = [1, 1, 1]} : vector<8x40x10xbf16> to vector<8x10x10xbf16>
    %c1_41 = arith.constant 1 : index
    %c0_42 = arith.constant 0 : index
    %c0_43 = arith.constant 0 : index
    %102 = vector.load %arg4[%c1_41, %c0_42, %c0_43] : memref<4x10x40xbf16, #tpu.memory_space<vmem>>, vector<1x10x40xbf16>
    %103 = vector.shape_cast %102 : vector<1x10x40xbf16> to vector<10x40xbf16>
    %cst_44 = arith.constant dense<0.000000e+00> : vector<8x10x40xf32>
    %104 = tpu.matmul %101, %103, %cst_44 {dimension_numbers = #tpu.dot_dimension_numbers<[2], [0], [0, 1], [1], [0, 0, 0, 1, 1, 1], [], []>} : vector<8x10x10xbf16>, vector<10x40xbf16>, vector<8x10x40xf32> -> vector<8x10x40xf32>
    %105 = arith.addf %100, %104 : vector<8x10x40xf32>
    %106 = vector.extract_strided_slice %96 {offsets = [0, 20, 0], sizes = [8, 10, 10], strides = [1, 1, 1]} : vector<8x40x10xbf16> to vector<8x10x10xbf16>
    %c2_45 = arith.constant 2 : index
    %c0_46 = arith.constant 0 : index
    %c0_47 = arith.constant 0 : index
    %107 = vector.load %arg4[%c2_45, %c0_46, %c0_47] : memref<4x10x40xbf16, #tpu.memory_space<vmem>>, vector<1x10x40xbf16>
    %108 = vector.shape_cast %107 : vector<1x10x40xbf16> to vector<10x40xbf16>
    %cst_48 = arith.constant dense<0.000000e+00> : vector<8x10x40xf32>
    %109 = tpu.matmul %106, %108, %cst_48 {dimension_numbers = #tpu.dot_dimension_numbers<[2], [0], [0, 1], [1], [0, 0, 0, 1, 1, 1], [], []>} : vector<8x10x10xbf16>, vector<10x40xbf16>, vector<8x10x40xf32> -> vector<8x10x40xf32>
    %110 = arith.addf %105, %109 : vector<8x10x40xf32>
    %111 = vector.extract_strided_slice %96 {offsets = [0, 30, 0], sizes = [8, 10, 10], strides = [1, 1, 1]} : vector<8x40x10xbf16> to vector<8x10x10xbf16>
    %c3 = arith.constant 3 : index
    %c0_49 = arith.constant 0 : index
    %c0_50 = arith.constant 0 : index
    %112 = vector.load %arg4[%c3, %c0_49, %c0_50] : memref<4x10x40xbf16, #tpu.memory_space<vmem>>, vector<1x10x40xbf16>
    %113 = vector.shape_cast %112 : vector<1x10x40xbf16> to vector<10x40xbf16>
    %cst_51 = arith.constant dense<0.000000e+00> : vector<8x10x40xf32>
    %114 = tpu.matmul %111, %113, %cst_51 {dimension_numbers = #tpu.dot_dimension_numbers<[2], [0], [0, 1], [1], [0, 0, 0, 1, 1, 1], [], []>} : vector<8x10x10xbf16>, vector<10x40xbf16>, vector<8x10x40xf32> -> vector<8x10x40xf32>
    %115 = arith.addf %110, %114 : vector<8x10x40xf32>
    %116 = arith.mulf %115, %115 : vector<8x10x40xf32>
    %cst_52 = arith.constant dense<0.000000e+00> : vector<10x40xf32>
    %117 = vector.multi_reduction <add>, %115, %cst_52 [0] : vector<8x10x40xf32> to vector<10x40xf32>
    %118 = vector.shape_cast %117 : vector<10x40xf32> to vector<1x10x40xf32>
    %cst_53 = arith.constant dense<0.000000e+00> : vector<10x40xf32>
    %119 = vector.multi_reduction <add>, %116, %cst_53 [0] : vector<8x10x40xf32> to vector<10x40xf32>
    %120 = vector.shape_cast %119 : vector<10x40xf32> to vector<1x10x40xf32>
    %cst_54 = arith.constant dense<0.000000e+00> : vector<1x40xf32>
    %121 = vector.multi_reduction <add>, %118, %cst_54 [1] : vector<1x10x40xf32> to vector<1x40xf32>
    %122 = vector.shape_cast %121 : vector<1x40xf32> to vector<1x1x40xf32>
    %cst_55 = arith.constant dense<0.000000e+00> : vector<1x40xf32>
    %123 = vector.multi_reduction <add>, %120, %cst_55 [1] : vector<1x10x40xf32> to vector<1x40xf32>
    %124 = vector.shape_cast %123 : vector<1x40xf32> to vector<1x1x40xf32>
    %cst_56 = arith.constant 8.000000e+01 : f32
    %125 = vector.broadcast %cst_56 : f32 to vector<1x1x40xf32>
    %126 = arith.divf %122, %125 : vector<1x1x40xf32>
    %cst_57 = arith.constant 8.000000e+01 : f32
    %127 = vector.broadcast %cst_57 : f32 to vector<1x1x40xf32>
    %128 = arith.divf %124, %127 : vector<1x1x40xf32>
    %129 = arith.mulf %126, %126 : vector<1x1x40xf32>
    %130 = arith.subf %128, %129 : vector<1x1x40xf32>
    %cst_58 = arith.constant 0.000000e+00 : f32
    %131 = vector.broadcast %cst_58 : f32 to vector<1x1x40xf32>
    %132 = arith.maximumf %130, %131 : vector<1x1x40xf32>
    %cst_59 = arith.constant 9.99999974E-6 : f32
    %133 = vector.broadcast %cst_59 : f32 to vector<1x1x40xf32>
    %134 = arith.addf %132, %133 : vector<1x1x40xf32>
    %135 = math.rsqrt %134 : vector<1x1x40xf32>
    %136 = arith.mulf %10, %135 : vector<1x1x40xf32>
    %137 = vector.shape_cast %12 : vector<1x40xf32> to vector<1x1x40xf32>
    %138 = arith.mulf %136, %137 : vector<1x1x40xf32>
    %139 = vector.broadcast %126 : vector<1x1x40xf32> to vector<8x10x40xf32>
    %140 = arith.subf %115, %139 : vector<8x10x40xf32>
    %141 = vector.broadcast %138 : vector<1x1x40xf32> to vector<8x10x40xf32>
    %142 = arith.mulf %140, %141 : vector<8x10x40xf32>
    %cst_60 = arith.constant dense<0.000000e+00> : vector<8x10xf32>
    %143 = vector.multi_reduction <add>, %142, %cst_60 [2] : vector<8x10x40xf32> to vector<8x10xf32>
    %144 = arith.mulf %11, %12 : vector<1x40xf32>
    %cst_61 = arith.constant dense<0.000000e+00> : vector<1xf32>
    %145 = vector.multi_reduction <add>, %144, %cst_61 [1] : vector<1x40xf32> to vector<1xf32>
    %146 = vector.shape_cast %145 : vector<1xf32> to vector<1x1xf32>
    %147 = arith.addf %146, %13 : vector<1x1xf32>
    %148 = vector.broadcast %147 : vector<1x1xf32> to vector<8x10xf32>
    %149 = arith.addf %143, %148 : vector<8x10xf32>
    %cst_62 = arith.constant 0.000000e+00 : f32
    %150 = vector.broadcast %cst_62 : f32 to vector<8x10xf32>
    %151 = arith.subf %150, %149 : vector<8x10xf32>
    %152 = math.exp %151 : vector<8x10xf32>
    %cst_63 = arith.constant 1.000000e+00 : f32
    %153 = vector.broadcast %cst_63 : f32 to vector<8x10xf32>
    %154 = arith.addf %153, %152 : vector<8x10xf32>
    %cst_64 = arith.constant 1.000000e+00 : f32
    %155 = vector.broadcast %cst_64 : f32 to vector<8x10xf32>
    %156 = arith.divf %155, %154 : vector<8x10xf32>
    %c0_65 = arith.constant 0 : index
    %c0_66 = arith.constant 0 : index
    %157 = vector.load %arg6[%c0_65, %c0_66] : memref<8x10xf32, #tpu.memory_space<vmem>>, vector<8x10xf32>
    tpu.vector_store %arg6[%c0_65, %c0_66], %156 {strides = array<i32>} : memref<8x10xf32, #tpu.memory_space<vmem>>, vector<8x10xf32>,
    return
  }
}

</mosaic_0001>

<llo_original>
// kernel: class_model_forward.1
$region0: #{class_model_forward.1}
  #allocation0 [shape = 'u32[]', space=smem, size = 0x4, offset = 0x4, fixed_abs, tag = 'smem constant byte address 0x4 - core index']
  #allocation1 [shape = 'u32[72,128]{1,0:T(1,128)}', space=vmem, size = 0x9000, scoped, tag = 'internal scratch']
  %s0 = inlined_call_operand.vmem [shape: bf16[8,12,15], index: 0, kind: input, shape index: {}]
  %s1 = inlined_call_operand.vmem [shape: bf16[40,40], index: 1, kind: input, shape index: {}]
  %s2 = inlined_call_operand.vmem [shape: bf16[15,30], index: 2, kind: input, shape index: {}]
  %s3 = inlined_call_operand.vmem [shape: bf16[3,30,40], index: 3, kind: input, shape index: {}]
  %s4 = inlined_call_operand.vmem [shape: bf16[4,10,40], index: 4, kind: input, shape index: {}]
  %s5 = inlined_call_operand.vmem [shape: f32[8,128], index: 5, kind: input, shape index: {}]
  %s6 = inlined_call_operand.vmem [shape: f32[8,10], index: 6, kind: output, shape index: {}]
  %s7 = sld [smem:[#allocation0]]
  $region34: #{class_model_forward.1} parent=0
    _
  %s9 = ssub.s32 1, %s7
  %s10 = scalar_select 0, %s9, %s7
  // Predicated region
  $region2: #{class_model_forward.1} parent=0 // pred_check
    _
  $region3: #{class_model_forward.1} parent=0 // pred_check_branch
    %12 = sbr.rel (0) target = $region5
  $region4: #{class_model_forward.1} parent=0 // pred_region
    _
  $region5: #{class_model_forward.1} parent=0 // pred_fallthru
    _
  // Predicated region
  $region6: #{class_model_forward.1} parent=0 // pred_check
    _
  $region7: #{class_model_forward.1} parent=0 // pred_check_branch
    %14 = sbr.rel (0) target = $region9
  $region8: #{class_model_forward.1} parent=0 // pred_region
    _
  $region9: #{class_model_forward.1} parent=0 // pred_fallthru
    _
  // Predicated region
  $region10: #{class_model_forward.1} parent=0 // pred_check
    _
  $region11: #{class_model_forward.1} parent=0 // pred_check_branch
    %16 = sbr.rel (0) target = $region13
  $region12: #{class_model_forward.1} parent=0 // pred_region
    _
  $region13: #{class_model_forward.1} parent=0 // pred_fallthru
    _
  // Predicated region
  $region14: #{class_model_forward.1} parent=0 // pred_check
    _
  $region15: #{class_model_forward.1} parent=0 // pred_check_branch
    %18 = sbr.rel (0) target = $region17
  $region16: #{class_model_forward.1} parent=0 // pred_region
    _
  $region17: #{class_model_forward.1} parent=0 // pred_fallthru
    _
  // Predicated region
  $region18: #{class_model_forward.1} parent=0 // pred_check
    _
  $region19: #{class_model_forward.1} parent=0 // pred_check_branch
    %20 = sbr.rel (0) target = $region21
  $region20: #{class_model_forward.1} parent=0 // pred_region
    _
  $region21: #{class_model_forward.1} parent=0 // pred_fallthru
    _
  // Predicated region
  $region22: #{class_model_forward.1} parent=0 // pred_check
    _
  $region23: #{class_model_forward.1} parent=0 // pred_check_branch
    %22 = sbr.rel (0) target = $region25
  $region24: #{class_model_forward.1} parent=0 // pred_region
    _
  $region25: #{class_model_forward.1} parent=0 // pred_fallthru
    _
  %v24 = vld [vmem:[%s5] sm:$0xff]
  %v25 = vld [vmem:[%s0] sm:$0xf]
  %v26 = vld [vmem:[%s0 + $0x4] sm:$0x3]
  %v27 = vld [vmem:[%s0 + $0x8] sm:$0xf]
  %v28 = vld [vmem:[%s0 + $0xc] sm:$0x3]
  %v29 = vld [vmem:[%s0 + $0x10] sm:$0xf]
  %v30 = vld [vmem:[%s0 + $0x14] sm:$0x3]
  %v31 = vld [vmem:[%s0 + $0x18] sm:$0xf]
  %v32 = vld [vmem:[%s0 + $0x1c] sm:$0x3]
  %v33 = vld [vmem:[%s0 + $0x20] sm:$0xf]
  %v34 = vld [vmem:[%s0 + $0x24] sm:$0x3]
  %v35 = vld [vmem:[%s0 + $0x28] sm:$0xf]
  %v36 = vld [vmem:[%s0 + $0x2c] sm:$0x3]
  %v37 = vld [vmem:[%s0 + $0x30] sm:$0xf]
  %v38 = vld [vmem:[%s0 + $0x34] sm:$0x3]
  %v39 = vld [vmem:[%s0 + $0x38] sm:$0xf]
  %v40 = vld [vmem:[%s0 + $0x3c] sm:$0x3]
  %v41 = vld [vmem:[%s2] sm:$0xf]
  %v42 = vld [vmem:[%s2 + $0x4] sm:$0xf]
  %v59 = vrot.slane %v25, 2
  %v60 = vrot.slane %v26, 2
  %v61 = vrot.slane %v27, 2
  %v62 = vrot.slane %v28, 2
  %v63 = vrot.slane %v29, 2
  %v64 = vrot.slane %v30, 2
  %v65 = vrot.slane %v31, 2
  %v66 = vrot.slane %v32, 2
  %v67 = vrot.slane %v33, 2
  %v68 = vrot.slane %v34, 2
  %v69 = vrot.slane %v35, 2
  %v70 = vrot.slane %v36, 2
  %v71 = vrot.slane %v37, 2
  %v72 = vrot.slane %v38, 2
  %v73 = vrot.slane %v39, 2
  %v74 = vrot.slane %v40, 2
  %vm75 = vcmask 1041408
  %v78 = vsel %vm75, %v25, %v59
  %vm79 = vcmask 1043458
  %v80 = vsel %vm79, %v25, %v59
  %v82 = vrot.slane %v80, 2
  %v85 = vsel %vm75, %v26, %v60
  %v88 = vsel %vm75, %v27, %v61
  %v89 = vsel %vm79, %v27, %v61
  %v91 = vrot.slane %v89, 2
  %v94 = vsel %vm75, %v28, %v62
  %v97 = vsel %vm75, %v29, %v63
  %v98 = vsel %vm79, %v29, %v63
  %v100 = vrot.slane %v98, 2
  %v103 = vsel %vm75, %v30, %v64
  %v106 = vsel %vm75, %v31, %v65
  %v107 = vsel %vm79, %v31, %v65
  %v109 = vrot.slane %v107, 2
  %v112 = vsel %vm75, %v32, %v66
  %v115 = vsel %vm75, %v33, %v67
  %v116 = vsel %vm79, %v33, %v67
  %v118 = vrot.slane %v116, 2
  %v121 = vsel %vm75, %v34, %v68
  %v124 = vsel %vm75, %v35, %v69
  %v125 = vsel %vm79, %v35, %v69
  %v127 = vrot.slane %v125, 2
  %v130 = vsel %vm75, %v36, %v70
  %v133 = vsel %vm75, %v37, %v71
  %v134 = vsel %vm79, %v37, %v71
  %v136 = vrot.slane %v134, 2
  %v139 = vsel %vm75, %v38, %v72
  %v142 = vsel %vm75, %v39, %v73
  %v143 = vsel %vm79, %v39, %v73
  %v145 = vrot.slane %v143, 2
  %v148 = vsel %vm75, %v40, %v74
  %149 = vst [vmem:[#allocation1] ss:$4 sm:$0xff] %v78
  %s151 = scalar_lea.vmem [#allocation1], 1
  %152 = vst [vmem:[%s151] ss:$4 sm:$0xff] %v82
  %s153 = scalar_lea.vmem [#allocation1], 2
  %154 = vst [vmem:[%s153] ss:$4 sm:$0xff] %v85
  %s155 = scalar_lea.vmem [#allocation1], 3
  %156 = vst [vmem:[%s155] ss:$4 sm:$0xff] %v88
  %s158 = scalar_lea.vmem [#allocation1], 32
  %159 = vst [vmem:[%s158] ss:$4 sm:$0xff] %v91
  %s160 = scalar_lea.vmem [#allocation1], 33
  %161 = vst [vmem:[%s160] ss:$4 sm:$0xff] %v94
  %s162 = scalar_lea.vmem [#allocation1], 34
  %163 = vst [vmem:[%s162] ss:$4 sm:$0xff] %v97
  %s165 = scalar_lea.vmem [#allocation1], 35
  %166 = vst [vmem:[%s165] ss:$4 sm:$0xff] %v100
  %v167 = vld.sshfl [vmem:[#allocation1] sm:$0xff pattern:$0x73625140]
  %v168 = vld.sshfl [vmem:[#allocation1 + $0x20] sm:$0xff pattern:$0x73625140]
  %169 = vst [vmem:[#allocation1] ss:$4 sm:$0xff] %v103
  %170 = vst [vmem:[%s151] ss:$4 sm:$0xff] %v106
  %172 = vst [vmem:[%s153] ss:$4 sm:$0xff] %v109
  %173 = vst [vmem:[%s155] ss:$4 sm:$0xff] %v112
  %174 = vst [vmem:[%s158] ss:$4 sm:$0xff] %v115
  %176 = vst [vmem:[%s160] ss:$4 sm:$0xff] %v118
  %177 = vst [vmem:[%s162] ss:$4 sm:$0xff] %v121
  %178 = vst [vmem:[%s165] ss:$4 sm:$0xff] %v124
  %v179 = vld.sshfl [vmem:[#allocation1] sm:$0xff pattern:$0x73625140]
  %v180 = vld.sshfl [vmem:[#allocation1 + $0x20] sm:$0xff pattern:$0x73625140]
  %182 = vst [vmem:[#allocation1] ss:$4 sm:$0xff] %v127
  %183 = vst [vmem:[%s151] ss:$4 sm:$0xff] %v130
  %184 = vst [vmem:[%s153] ss:$4 sm:$0xff] %v133
  %186 = vst [vmem:[%s155] ss:$4 sm:$0xff] %v136
  %187 = vst [vmem:[%s158] ss:$4 sm:$0xff] %v139
  %188 = vst [vmem:[%s160] ss:$4 sm:$0xff] %v142
  %190 = vst [vmem:[%s162] ss:$4 sm:$0xff] %v145
  %191 = vst [vmem:[%s165] ss:$4 sm:$0xff] %v148
  %v192 = vld.sshfl [vmem:[#allocation1] sm:$0xff pattern:$0x73625140]
  %v193 = vld.sshfl [vmem:[#allocation1 + $0x20] sm:$0xff pattern:$0x73625140]
  %v196 = vunpack.c.l.b16 %v41
  %v197 = vunpack.c.l.b16 %v42
  %v198 = vpack.c.b16 %v197, %v196
  %vm199 = vcmask 121856
  %v200 = vsel %vm199, %v167, 0
  %v202 = vsel %vm199, %v168, 0
  %v204 = vsel %vm199, %v179, 0
  %v206 = vsel %vm199, %v180, 0
  %v208 = vsel %vm199, %v192, 0
  %v210 = vsel %vm199, %v193, 0
  %vm212 = vcmask 1046528
  %vm213 = vcmask 1047552
  %v214 = vsel %vm212, 4294967295, 65535
  %v215 = vsel %vm213, %v214, 0
  %v217 = vand.u32 %v198, %v215
  %219 = vmatpush.bf16.msra.mxu0 0
  %220 = vmatpush.bf16.msra.mxu0 0
  %221 = vmatpush.bf16.msra.mxu0 0
  %222 = vmatpush.bf16.msra.mxu0 0
  %223 = vmatpush.bf16.msra.mxu0 0
  %224 = vmatpush.bf16.msra.mxu0 0
  %225 = vmatpush.bf16.msra.mxu0 0
  %226 = vmatpush.bf16.msra.mxu0 %v217
  %227 = vmatmul.bf16.gmra.mxu0 %v200
  %v228 = vpop.f32.mrf.mxu0
  %v229 = vadd.f32 0.0, %v228
  %v230 = vpop.f32.mrf.mxu0
  %v231 = vadd.f32 0.0, %v230
  %232 = vmatmul.bf16.gmra.mxu0 %v202
  %v233 = vpop.f32.mrf.mxu0
  %v234 = vadd.f32 0.0, %v233
  %v235 = vpop.f32.mrf.mxu0
  %v236 = vadd.f32 0.0, %v235
  %237 = vmatmul.bf16.gmra.mxu0 %v204
  %v238 = vpop.f32.mrf.mxu0
  %v239 = vadd.f32 0.0, %v238
  %v240 = vpop.f32.mrf.mxu0
  %v241 = vadd.f32 0.0, %v240
  %242 = vmatmul.bf16.gmra.mxu0 %v206
  %v243 = vpop.f32.mrf.mxu0
  %v244 = vadd.f32 0.0, %v243
  %v245 = vpop.f32.mrf.mxu0
  %v246 = vadd.f32 0.0, %v245
  %247 = vmatmul.bf16.gmra.mxu0 %v208
  %v248 = vpop.f32.mrf.mxu0
  %v249 = vadd.f32 0.0, %v248
  %v250 = vpop.f32.mrf.mxu0
  %v251 = vadd.f32 0.0, %v250
  %252 = vmatmul.bf16.gmra.mxu0 %v210
  %v253 = vpop.f32.mrf.mxu0
  %v254 = vadd.f32 0.0, %v253
  %v255 = vpop.f32.mrf.mxu0
  %v256 = vadd.f32 0.0, %v255
  %257 = vdwg.mxu0
  %v270 = vrot.slane %v229, 4
  %v271 = vrot.slane %v231, 4
  %v272 = vrot.slane %v234, 4
  %v273 = vrot.slane %v236, 4
  %v274 = vrot.slane %v239, 4
  %v275 = vrot.slane %v241, 4
  %v276 = vrot.slane %v244, 4
  %v277 = vrot.slane %v246, 4
  %v278 = vrot.slane %v249, 4
  %v279 = vrot.slane %v251, 4
  %v280 = vrot.slane %v254, 4
  %v281 = vrot.slane %v256, 4
  %v294 = vmul.f32 %v229, %v229
  %v295 = vmul.f32 %v270, %v270
  %v296 = vmul.f32 %v231, %v231
  %v297 = vmul.f32 %v271, %v271
  %v298 = vmul.f32 %v234, %v234
  %v299 = vmul.f32 %v272, %v272
  %v300 = vmul.f32 %v236, %v236
  %v301 = vmul.f32 %v273, %v273
  %v302 = vmul.f32 %v239, %v239
  %v303 = vmul.f32 %v274, %v274
  %v304 = vmul.f32 %v241, %v241
  %v305 = vmul.f32 %v275, %v275
  %v306 = vmul.f32 %v244, %v244
  %v307 = vmul.f32 %v276, %v276
  %v308 = vmul.f32 %v246, %v246
  %v309 = vmul.f32 %v277, %v277
  %v310 = vmul.f32 %v249, %v249
  %v311 = vmul.f32 %v278, %v278
  %v312 = vmul.f32 %v251, %v251
  %v313 = vmul.f32 %v279, %v279
  %v314 = vmul.f32 %v254, %v254
  %v315 = vmul.f32 %v280, %v280
  %v316 = vmul.f32 %v256, %v256
  %v317 = vmul.f32 %v281, %v281
  %318 = vst [vmem:[#allocation1] ss:$2 sm:$0xff] %v229
  %s319 = scalar_lea.vmem [#allocation1], 1
  %320 = vst [vmem:[%s319] ss:$2 sm:$0xff] %v270
  %s321 = scalar_lea.vmem [#allocation1], 16
  %322 = vst [vmem:[%s321] ss:$2 sm:$0xff] %v231
  %v323 = vld.sshfl [vmem:[#allocation1] sm:$0xff pattern:$0x75316420]
  %v324 = vld.sshfl [vmem:[#allocation1 + $0x10] sm:$0xff pattern:$0x75316420]
  %s325 = scalar_lea.vmem [#allocation1], 32
  %326 = vst [vmem:[%s325] ss:$2 sm:$0xff] %v271
  %s327 = scalar_lea.vmem [#allocation1], 33
  %328 = vst [vmem:[%s327] ss:$2 sm:$0xff] %v234
  %s329 = scalar_lea.vmem [#allocation1], 48
  %330 = vst [vmem:[%s329] ss:$2 sm:$0xff] %v272
  %v331 = vld.sshfl [vmem:[#allocation1 + $0x20] sm:$0xff pattern:$0x75316420]
  %v332 = vld.sshfl [vmem:[#allocation1 + $0x30] sm:$0xff pattern:$0x75316420]
  %333 = vst [vmem:[#allocation1] ss:$2 sm:$0xff] %v236
  %334 = vst [vmem:[%s319] ss:$2 sm:$0xff] %v273
  %335 = vst [vmem:[%s321] ss:$2 sm:$0xff] %v239
  %v336 = vld.sshfl [vmem:[#allocation1] sm:$0xff pattern:$0x75316420]
  %v337 = vld.sshfl [vmem:[#allocation1 + $0x10] sm:$0xff pattern:$0x75316420]
  %338 = vst [vmem:[%s325] ss:$2 sm:$0xff] %v274
  %339 = vst [vmem:[%s327] ss:$2 sm:$0xff] %v241
  %340 = vst [vmem:[%s329] ss:$2 sm:$0xff] %v275
  %v341 = vld.sshfl [vmem:[#allocation1 + $0x20] sm:$0xff pattern:$0x75316420]
  %v342 = vld.sshfl [vmem:[#allocation1 + $0x30] sm:$0xff pattern:$0x75316420]
  %343 = vst [vmem:[#allocation1] ss:$2 sm:$0xff] %v244
  %344 = vst [vmem:[%s319] ss:$2 sm:$0xff] %v276
  %345 = vst [vmem:[%s321] ss:$2 sm:$0xff] %v246
  %v346 = vld.sshfl [vmem:[#allocation1] sm:$0xff pattern:$0x75316420]
  %v347 = vld.sshfl [vmem:[#allocation1 + $0x10] sm:$0xff pattern:$0x75316420]
  %348 = vst [vmem:[%s325] ss:$2 sm:$0xff] %v277
  %349 = vst [vmem:[%s327] ss:$2 sm:$0xff] %v249
  %350 = vst [vmem:[%s329] ss:$2 sm:$0xff] %v278
  %v351 = vld.sshfl [vmem:[#allocation1 + $0x20] sm:$0xff pattern:$0x75316420]
  %v352 = vld.sshfl [vmem:[#allocation1 + $0x30] sm:$0xff pattern:$0x75316420]
  %353 = vst [vmem:[#allocation1] ss:$2 sm:$0xff] %v251
  %354 = vst [vmem:[%s319] ss:$2 sm:$0xff] %v279
  %355 = vst [vmem:[%s321] ss:$2 sm:$0xff] %v254
  %v356 = vld.sshfl [vmem:[#allocation1] sm:$0xff pattern:$0x75316420]
  %v357 = vld.sshfl [vmem:[#allocation1 + $0x10] sm:$0xff pattern:$0x75316420]
  %358 = vst [vmem:[%s325] ss:$2 sm:$0xff] %v280
  %359 = vst [vmem:[%s327] ss:$2 sm:$0xff] %v256
  %360 = vst [vmem:[%s329] ss:$2 sm:$0xff] %v281
  %v361 = vld.sshfl [vmem:[#allocation1 + $0x20] sm:$0xff pattern:$0x75316420]
  %v362 = vld.sshfl [vmem:[#allocation1 + $0x30] sm:$0xff pattern:$0x75316420]
  %vm379 = vcmask 244736
  %v380 = vsel %vm379, %v323, 0.0
  %v381 = vsel %vm379, %v331, 0.0
  %v382 = vadd.f32 %v380, %v381
  %v383 = vsel %vm379, %v336, 0.0
  %v384 = vadd.f32 %v382, %v383
  %v385 = vsel %vm379, %v341, 0.0
  %v386 = vadd.f32 %v384, %v385
  %v387 = vsel %vm379, %v346, 0.0
  %v388 = vadd.f32 %v386, %v387
  %v389 = vsel %vm379, %v351, 0.0
  %v390 = vadd.f32 %v388, %v389
  %v391 = vsel %vm379, %v356, 0.0
  %v392 = vadd.f32 %v390, %v391
  %v393 = vsel %vm379, %v361, 0.0
  %v394 = vadd.f32 %v392, %v393
  %vm395 = vcmask 240640
  %v396 = vsel %vm395, %v324, 0.0
  %v397 = vsel %vm395, %v332, 0.0
  %v398 = vadd.f32 %v396, %v397
  %v399 = vsel %vm395, %v337, 0.0
  %v400 = vadd.f32 %v398, %v399
  %v401 = vsel %vm395, %v342, 0.0
  %v402 = vadd.f32 %v400, %v401
  %v403 = vsel %vm395, %v347, 0.0
  %v404 = vadd.f32 %v402, %v403
  %v405 = vsel %vm395, %v352, 0.0
  %v406 = vadd.f32 %v404, %v405
  %v407 = vsel %vm395, %v357, 0.0
  %v408 = vadd.f32 %v406, %v407
  %v409 = vsel %vm395, %v362, 0.0
  %v410 = vadd.f32 %v408, %v409
  %435 = vst [vmem:[#allocation1] ss:$2 sm:$0xff] %v294
  %s436 = scalar_lea.vmem [#allocation1], 1
  %437 = vst [vmem:[%s436] ss:$2 sm:$0xff] %v295
  %s438 = scalar_lea.vmem [#allocation1], 16
  %439 = vst [vmem:[%s438] ss:$2 sm:$0xff] %v296
  %v440 = vld.sshfl [vmem:[#allocation1] sm:$0xff pattern:$0x75316420]
  %v441 = vld.sshfl [vmem:[#allocation1 + $0x10] sm:$0xff pattern:$0x75316420]
  %s442 = scalar_lea.vmem [#allocation1], 32
  %443 = vst [vmem:[%s442] ss:$2 sm:$0xff] %v297
  %s444 = scalar_lea.vmem [#allocation1], 33
  %445 = vst [vmem:[%s444] ss:$2 sm:$0xff] %v298
  %s446 = scalar_lea.vmem [#allocation1], 48
  %447 = vst [vmem:[%s446] ss:$2 sm:$0xff] %v299
  %v448 = vld.sshfl [vmem:[#allocation1 + $0x20] sm:$0xff pattern:$0x75316420]
  %v449 = vld.sshfl [vmem:[#allocation1 + $0x30] sm:$0xff pattern:$0x75316420]
  %450 = vst [vmem:[#allocation1] ss:$2 sm:$0xff] %v300
  %451 = vst [vmem:[%s436] ss:$2 sm:$0xff] %v301
  %452 = vst [vmem:[%s438] ss:$2 sm:$0xff] %v302
  %v453 = vld.sshfl [vmem:[#allocation1] sm:$0xff pattern:$0x75316420]
  %v454 = vld.sshfl [vmem:[#allocation1 + $0x10] sm:$0xff pattern:$0x75316420]
  %455 = vst [vmem:[%s442] ss:$2 sm:$0xff] %v303
  %456 = vst [vmem:[%s444] ss:$2 sm:$0xff] %v304
  %457 = vst [vmem:[%s446] ss:$2 sm:$0xff] %v305
  %v458 = vld.sshfl [vmem:[#allocation1 + $0x20] sm:$0xff pattern:$0x75316420]
  %v459 = vld.sshfl [vmem:[#allocation1 + $0x30] sm:$0xff pattern:$0x75316420]
  %460 = vst [vmem:[#allocation1] ss:$2 sm:$0xff] %v306
  %461 = vst [vmem:[%s436] ss:$2 sm:$0xff] %v307
  %462 = vst [vmem:[%s438] ss:$2 sm:$0xff] %v308
  %v463 = vld.sshfl [vmem:[#allocation1] sm:$0xff pattern:$0x75316420]
  %v464 = vld.sshfl [vmem:[#allocation1 + $0x10] sm:$0xff pattern:$0x75316420]
  %465 = vst [vmem:[%s442] ss:$2 sm:$0xff] %v309
  %466 = vst [vmem:[%s444] ss:$2 sm:$0xff] %v310
  %467 = vst [vmem:[%s446] ss:$2 sm:$0xff] %v311
  %v468 = vld.sshfl [vmem:[#allocation1 + $0x20] sm:$0xff pattern:$0x75316420]
  %v469 = vld.sshfl [vmem:[#allocation1 + $0x30] sm:$0xff pattern:$0x75316420]
  %470 = vst [vmem:[#allocation1] ss:$2 sm:$0xff] %v312
  %471 = vst [vmem:[%s436] ss:$2 sm:$0xff] %v313
  %472 = vst [vmem:[%s438] ss:$2 sm:$0xff] %v314
  %v473 = vld.sshfl [vmem:[#allocation1] sm:$0xff pattern:$0x75316420]
  %v474 = vld.sshfl [vmem:[#allocation1 + $0x10] sm:$0xff pattern:$0x75316420]
  %475 = vst [vmem:[%s442] ss:$2 sm:$0xff] %v315
  %476 = vst [vmem:[%s444] ss:$2 sm:$0xff] %v316
  %477 = vst [vmem:[%s446] ss:$2 sm:$0xff] %v317
  %v478 = vld.sshfl [vmem:[#allocation1 + $0x20] sm:$0xff pattern:$0x75316420]
  %v479 = vld.sshfl [vmem:[#allocation1 + $0x30] sm:$0xff pattern:$0x75316420]
  %v496 = vsel %vm379, %v440, 0.0
  %v497 = vsel %vm379, %v448, 0.0
  %v498 = vadd.f32 %v496, %v497
  %v499 = vsel %vm379, %v453, 0.0
  %v500 = vadd.f32 %v498, %v499
  %v501 = vsel %vm379, %v458, 0.0
  %v502 = vadd.f32 %v500, %v501
  %v503 = vsel %vm379, %v463, 0.0
  %v504 = vadd.f32 %v502, %v503
  %v505 = vsel %vm379, %v468, 0.0
  %v506 = vadd.f32 %v504, %v505
  %v507 = vsel %vm379, %v473, 0.0
  %v508 = vadd.f32 %v506, %v507
  %v509 = vsel %vm379, %v478, 0.0
  %v510 = vadd.f32 %v508, %v509
  %v511 = vsel %vm395, %v441, 0.0
  %v512 = vsel %vm395, %v449, 0.0
  %v513 = vadd.f32 %v511, %v512
  %v514 = vsel %vm395, %v454, 0.0
  %v515 = vadd.f32 %v513, %v514
  %v516 = vsel %vm395, %v459, 0.0
  %v517 = vadd.f32 %v515, %v516
  %v518 = vsel %vm395, %v464, 0.0
  %v519 = vadd.f32 %v517, %v518
  %v520 = vsel %vm395, %v469, 0.0
  %v521 = vadd.f32 %v519, %v520
  %v522 = vsel %vm395, %v474, 0.0
  %v523 = vadd.f32 %v521, %v522
  %v524 = vsel %vm395, %v479, 0.0
  %v525 = vadd.f32 %v523, %v524
  %v526 = vsel %vm379, %v394, 0.0
  %v527 = vsel %vm395, %v410, 0.0
  %v528 = vadd.f32 %v526, %v527
  %v529 = vrot.slane %v528, 4
  %v530 = vadd.f32 %v528, %v529
  %v531 = vrot.slane %v530, 2
  %v532 = vadd.f32 %v530, %v531
  %v533 = vrot.slane %v532, 1
  %v534 = vadd.f32 %v532, %v533
  %v535 = vsel %vm379, %v510, 0.0
  %v536 = vsel %vm395, %v525, 0.0
  %v537 = vadd.f32 %v535, %v536
  %v538 = vrot.slane %v537, 4
  %v539 = vadd.f32 %v537, %v538
  %v540 = vrot.slane %v539, 2
  %v541 = vadd.f32 %v539, %v540
  %v542 = vrot.slane %v541, 1
  %v543 = vadd.f32 %v541, %v542
  %v544 = vrcp.pop 96.0
  %v545 = vmul.f32 96.0, %v544
  %v546 = vsub.f32 1.0, %v545
  %v547 = vmul.f32 %v544, %v546
  %v548 = vadd.f32 %v544, %v547
  %vm549 = vweird.f32 %v544
  %v550 = vsel %vm549, %v544, %v548
  %v551 = vmul.f32 %v534, %v550
  %v552 = vmul.f32 %v543, %v550
  %v553 = vmul.f32 %v551, %v551
  %v554 = vsub.f32 %v552, %v553
  %v555 = vmax.f32 %v554, 0.0
  %v557 = vrot.slane %v551, 4
  %v559 = vsub.f32 %v229, %v551
  %v560 = vsub.f32 %v270, %v557
  %v561 = vsub.f32 %v231, %v551
  %v562 = vsub.f32 %v271, %v551
  %v563 = vsub.f32 %v234, %v557
  %v564 = vsub.f32 %v272, %v551
  %v565 = vsub.f32 %v236, %v551
  %v566 = vsub.f32 %v273, %v557
  %v567 = vsub.f32 %v239, %v551
  %v568 = vsub.f32 %v274, %v551
  %v569 = vsub.f32 %v241, %v557
  %v570 = vsub.f32 %v275, %v551
  %v571 = vsub.f32 %v244, %v551
  %v572 = vsub.f32 %v276, %v557
  %v573 = vsub.f32 %v246, %v551
  %v574 = vsub.f32 %v277, %v551
  %v575 = vsub.f32 %v249, %v557
  %v576 = vsub.f32 %v278, %v551
  %v577 = vsub.f32 %v251, %v551
  %v578 = vsub.f32 %v279, %v557
  %v579 = vsub.f32 %v254, %v551
  %v580 = vsub.f32 %v280, %v551
  %v581 = vsub.f32 %v256, %v557
  %v582 = vsub.f32 %v281, %v551
  %v583 = vadd.f32 %v555, 1e-05
  %v584 = vrsqrt.pop %v583
  %v585 = vmul.f32 %v584, %v583
  %v586 = vmul.f32 %v585, %v584
  %v587 = vmul.f32 0.5, %v586
  %v588 = vsub.f32 1.5, %v587
  %v589 = vmul.f32 %v584, %v588
  %vm590 = vweird.f32 %v583
  %vm591 = vweird.f32 %v584
  %vm592 = vmor %vm590, %vm591
  %v593 = vsel %vm592, %v584, %v589
  %v594 = vmul.f32 %v24, %v593
  %v595 = vperm.slane %v594, 0
  %v597 = vrot.slane %v595, 4
  %v599 = vmul.f32 %v559, %v595
  %v600 = vmul.f32 %v560, %v597
  %v601 = vmul.f32 %v561, %v595
  %v602 = vmul.f32 %v562, %v595
  %v603 = vmul.f32 %v563, %v597
  %v604 = vmul.f32 %v564, %v595
  %v605 = vmul.f32 %v565, %v595
  %v606 = vmul.f32 %v566, %v597
  %v607 = vmul.f32 %v567, %v595
  %v608 = vmul.f32 %v568, %v595
  %v609 = vmul.f32 %v569, %v597
  %v610 = vmul.f32 %v570, %v595
  %v611 = vmul.f32 %v571, %v595
  %v612 = vmul.f32 %v572, %v597
  %v613 = vmul.f32 %v573, %v595
  %v614 = vmul.f32 %v574, %v595
  %v615 = vmul.f32 %v575, %v597
  %v616 = vmul.f32 %v576, %v595
  %v617 = vmul.f32 %v577, %v595
  %v618 = vmul.f32 %v578, %v597
  %v619 = vmul.f32 %v579, %v595
  %v620 = vmul.f32 %v580, %v595
  %v621 = vmul.f32 %v581, %v597
  %v622 = vmul.f32 %v582, %v595
  %v623 = vperm.slane %v24, 1
  %v625 = vrot.slane %v623, 4
  %v627 = vadd.f32 %v599, %v623
  %v628 = vadd.f32 %v600, %v625
  %v629 = vadd.f32 %v601, %v623
  %v630 = vadd.f32 %v602, %v623
  %v631 = vadd.f32 %v603, %v625
  %v632 = vadd.f32 %v604, %v623
  %v633 = vadd.f32 %v605, %v623
  %v634 = vadd.f32 %v606, %v625
  %v635 = vadd.f32 %v607, %v623
  %v636 = vadd.f32 %v608, %v623
  %v637 = vadd.f32 %v609, %v625
  %v638 = vadd.f32 %v610, %v623
  %v639 = vadd.f32 %v611, %v623
  %v640 = vadd.f32 %v612, %v625
  %v641 = vadd.f32 %v613, %v623
  %v642 = vadd.f32 %v614, %v623
  %v643 = vadd.f32 %v615, %v625
  %v644 = vadd.f32 %v616, %v623
  %v645 = vadd.f32 %v617, %v623
  %v646 = vadd.f32 %v618, %v625
  %v647 = vadd.f32 %v619, %v623
  %v648 = vadd.f32 %v620, %v623
  %v649 = vadd.f32 %v621, %v625
  %v650 = vadd.f32 %v622, %v623
  %v651 = vmax.f32 %v627, 0.0
  %v652 = vmax.f32 %v628, 0.0
  %v653 = vmax.f32 %v629, 0.0
  %v654 = vmax.f32 %v630, 0.0
  %v655 = vmax.f32 %v631, 0.0
  %v656 = vmax.f32 %v632, 0.0
  %v657 = vmax.f32 %v633, 0.0
  %v658 = vmax.f32 %v634, 0.0
  %v659 = vmax.f32 %v635, 0.0
  %v660 = vmax.f32 %v636, 0.0
  %v661 = vmax.f32 %v637, 0.0
  %v662 = vmax.f32 %v638, 0.0
  %v663 = vmax.f32 %v639, 0.0
  %v664 = vmax.f32 %v640, 0.0
  %v665 = vmax.f32 %v641, 0.0
  %v666 = vmax.f32 %v642, 0.0
  %v667 = vmax.f32 %v643, 0.0
  %v668 = vmax.f32 %v644, 0.0
  %v669 = vmax.f32 %v645, 0.0
  %v670 = vmax.f32 %v646, 0.0
  %v671 = vmax.f32 %v647, 0.0
  %v672 = vmax.f32 %v648, 0.0
  %v673 = vmax.f32 %v649, 0.0
  %v674 = vmax.f32 %v650, 0.0
  %699 = vst [vmem:[#allocation1] ss:$2 sm:$0xff] %v651
  %s700 = scalar_lea.vmem [#allocation1], 1
  %701 = vst [vmem:[%s700] ss:$2 sm:$0xff] %v652
  %s702 = scalar_lea.vmem [#allocation1], 16
  %703 = vst [vmem:[%s702] ss:$2 sm:$0xff] %v653
  %v704 = vld.sshfl [vmem:[#allocation1] sm:$0xff pattern:$0x75316420]
  %v705 = vld.sshfl [vmem:[#allocation1 + $0x10] sm:$0xff pattern:$0x75316420]
  %s706 = scalar_lea.vmem [#allocation1], 32
  %707 = vst [vmem:[%s706] ss:$2 sm:$0xff] %v654
  %s708 = scalar_lea.vmem [#allocation1], 33
  %709 = vst [vmem:[%s708] ss:$2 sm:$0xff] %v655
  %s710 = scalar_lea.vmem [#allocation1], 48
  %711 = vst [vmem:[%s710] ss:$2 sm:$0xff] %v656
  %v712 = vld.sshfl [vmem:[#allocation1 + $0x20] sm:$0xff pattern:$0x75316420]
  %v713 = vld.sshfl [vmem:[#allocation1 + $0x30] sm:$0xff pattern:$0x75316420]
  %714 = vst [vmem:[#allocation1] ss:$2 sm:$0xff] %v657
  %715 = vst [vmem:[%s700] ss:$2 sm:$0xff] %v658
  %716 = vst [vmem:[%s702] ss:$2 sm:$0xff] %v659
  %v717 = vld.sshfl [vmem:[#allocation1] sm:$0xff pattern:$0x75316420]
  %v718 = vld.sshfl [vmem:[#allocation1 + $0x10] sm:$0xff pattern:$0x75316420]
  %719 = vst [vmem:[%s706] ss:$2 sm:$0xff] %v660
  %720 = vst [vmem:[%s708] ss:$2 sm:$0xff] %v661
  %721 = vst [vmem:[%s710] ss:$2 sm:$0xff] %v662
  %v722 = vld.sshfl [vmem:[#allocation1 + $0x20] sm:$0xff pattern:$0x75316420]
  %v723 = vld.sshfl [vmem:[#allocation1 + $0x30] sm:$0xff pattern:$0x75316420]
  %724 = vst [vmem:[#allocation1] ss:$2 sm:$0xff] %v663
  %725 = vst [vmem:[%s700] ss:$2 sm:$0xff] %v664
  %726 = vst [vmem:[%s702] ss:$2 sm:$0xff] %v665
  %v727 = vld.sshfl [vmem:[#allocation1] sm:$0xff pattern:$0x75316420]
  %v728 = vld.sshfl [vmem:[#allocation1 + $0x10] sm:$0xff pattern:$0x75316420]
  %729 = vst [vmem:[%s706] ss:$2 sm:$0xff] %v666
  %730 = vst [vmem:[%s708] ss:$2 sm:$0xff] %v667
  %731 = vst [vmem:[%s710] ss:$2 sm:$0xff] %v668
  %v732 = vld.sshfl [vmem:[#allocation1 + $0x20] sm:$0xff pattern:$0x75316420]
  %v733 = vld.sshfl [vmem:[#allocation1 + $0x30] sm:$0xff pattern:$0x75316420]
  %734 = vst [vmem:[#allocation1] ss:$2 sm:$0xff] %v669
  %735 = vst [vmem:[%s700] ss:$2 sm:$0xff] %v670
  %736 = vst [vmem:[%s702] ss:$2 sm:$0xff] %v671
  %v737 = vld.sshfl [vmem:[#allocation1] sm:$0xff pattern:$0x75316420]
  %v738 = vld.sshfl [vmem:[#allocation1 + $0x10] sm:$0xff pattern:$0x75316420]
  %739 = vst [vmem:[%s706] ss:$2 sm:$0xff] %v672
  %740 = vst [vmem:[%s708] ss:$2 sm:$0xff] %v673
  %741 = vst [vmem:[%s710] ss:$2 sm:$0xff] %v674
  %v742 = vld.sshfl [vmem:[#allocation1 + $0x20] sm:$0xff pattern:$0x75316420]
  %v743 = vld.sshfl [vmem:[#allocation1 + $0x30] sm:$0xff pattern:$0x75316420]
  %v760 = vpack.c.bf16 %v704, %v704
  %v761 = vpack.c.bf16 %v705, %v705
  %v762 = vpack.c.bf16 %v712, %v712
  %v763 = vpack.c.bf16 %v713, %v713
  %v764 = vpack.c.bf16 %v717, %v717
  %v765 = vpack.c.bf16 %v718, %v718
  %v766 = vpack.c.bf16 %v722, %v722
  %v767 = vpack.c.bf16 %v723, %v723
  %v768 = vpack.c.bf16 %v727, %v727
  %v769 = vpack.c.bf16 %v728, %v728
  %v770 = vpack.c.bf16 %v732, %v732
  %v771 = vpack.c.bf16 %v733, %v733
  %v772 = vpack.c.bf16 %v737, %v737
  %v773 = vpack.c.bf16 %v738, %v738
  %v774 = vpack.c.bf16 %v742, %v742
  %v775 = vpack.c.bf16 %v743, %v743
  %v776 = vld [vmem:[%s3] sm:$0xf]
  %v777 = vld [vmem:[%s3 + $0x4] sm:$0xf]
  %v778 = vld [vmem:[%s3 + $0x8] sm:$0xf]
  %v779 = vld [vmem:[%s3 + $0xc] sm:$0x7]
  %s780 = scalar_lea.vmem %s3, 16
  %v781 = vld [vmem:[%s780] sm:$0xf]
  %v782 = vld [vmem:[%s780 + $0x4] sm:$0xf]
  %v783 = vld [vmem:[%s780 + $0x8] sm:$0xf]
  %v784 = vld [vmem:[%s780 + $0xc] sm:$0x7]
  %v801 = vrot.slane %v760, 3
  %v802 = vrot.slane %v761, 3
  %v803 = vrot.slane %v762, 3
  %v804 = vrot.slane %v763, 3
  %v805 = vrot.slane %v764, 3
  %v806 = vrot.slane %v765, 3
  %v807 = vrot.slane %v766, 3
  %v808 = vrot.slane %v767, 3
  %v809 = vrot.slane %v768, 3
  %v810 = vrot.slane %v769, 3
  %v811 = vrot.slane %v770, 3
  %v812 = vrot.slane %v771, 3
  %v813 = vrot.slane %v772, 3
  %v814 = vrot.slane %v773, 3
  %v815 = vrot.slane %v774, 3
  %v816 = vrot.slane %v775, 3
  %vm817 = vcmask 1040384
  %v820 = vsel %vm817, %v760, %v801
  %vm821 = vcmask 1041409
  %v822 = vsel %vm821, %v760, %v801
  %v824 = vrot.slane %v822, 1
  %vm825 = vcmask 1042434
  %v826 = vsel %vm825, %v760, %v801
  %v828 = vrot.slane %v826, 2
  %vm829 = vcmask 1043459
  %v830 = vsel %vm829, %v760, %v801
  %v832 = vrot.slane %v830, 3
  %v835 = vsel %vm817, %v761, %v802
  %v836 = vsel %vm821, %v761, %v802
  %v838 = vrot.slane %v836, 1
  %v841 = vsel %vm817, %v762, %v803
  %v842 = vsel %vm821, %v762, %v803
  %v844 = vrot.slane %v842, 1
  %v845 = vsel %vm825, %v762, %v803
  %v847 = vrot.slane %v845, 2
  %v848 = vsel %vm829, %v762, %v803
  %v850 = vrot.slane %v848, 3
  %v853 = vsel %vm817, %v763, %v804
  %v854 = vsel %vm821, %v763, %v804
  %v856 = vrot.slane %v854, 1
  %v859 = vsel %vm817, %v764, %v805
  %v860 = vsel %vm821, %v764, %v805
  %v862 = vrot.slane %v860, 1
  %v863 = vsel %vm825, %v764, %v805
  %v865 = vrot.slane %v863, 2
  %v866 = vsel %vm829, %v764, %v805
  %v868 = vrot.slane %v866, 3
  %v871 = vsel %vm817, %v765, %v806
  %v872 = vsel %vm821, %v765, %v806
  %v874 = vrot.slane %v872, 1
  %v877 = vsel %vm817, %v766, %v807
  %v878 = vsel %vm821, %v766, %v807
  %v880 = vrot.slane %v878, 1
  %v881 = vsel %vm825, %v766, %v807
  %v883 = vrot.slane %v881, 2
  %v884 = vsel %vm829, %v766, %v807
  %v886 = vrot.slane %v884, 3
  %v889 = vsel %vm817, %v767, %v808
  %v890 = vsel %vm821, %v767, %v808
  %v892 = vrot.slane %v890, 1
  %v895 = vsel %vm817, %v768, %v809
  %v896 = vsel %vm821, %v768, %v809
  %v898 = vrot.slane %v896, 1
  %v899 = vsel %vm825, %v768, %v809
  %v901 = vrot.slane %v899, 2
  %v902 = vsel %vm829, %v768, %v809
  %v904 = vrot.slane %v902, 3
  %v907 = vsel %vm817, %v769, %v810
  %v908 = vsel %vm821, %v769, %v810
  %v910 = vrot.slane %v908, 1
  %v913 = vsel %vm817, %v770, %v811
  %v914 = vsel %vm821, %v770, %v811
  %v916 = vrot.slane %v914, 1
  %v917 = vsel %vm825, %v770, %v811
  %v919 = vrot.slane %v917, 2
  %v920 = vsel %vm829, %v770, %v811
  %v922 = vrot.slane %v920, 3
  %v925 = vsel %vm817, %v771, %v812
  %v926 = vsel %vm821, %v771, %v812
  %v928 = vrot.slane %v926, 1
  %v931 = vsel %vm817, %v772, %v813
  %v932 = vsel %vm821, %v772, %v813
  %v934 = vrot.slane %v932, 1
  %v935 = vsel %vm825, %v772, %v813
  %v937 = vrot.slane %v935, 2
  %v938 = vsel %vm829, %v772, %v813
  %v940 = vrot.slane %v938, 3
  %v943 = vsel %vm817, %v773, %v814
  %v944 = vsel %vm821, %v773, %v814
  %v946 = vrot.slane %v944, 1
  %v949 = vsel %vm817, %v774, %v815
  %v950 = vsel %vm821, %v774, %v815
  %v952 = vrot.slane %v950, 1
  %v953 = vsel %vm825, %v774, %v815
  %v955 = vrot.slane %v953, 2
  %v956 = vsel %vm829, %v774, %v815
  %v958 = vrot.slane %v956, 3
  %v961 = vsel %vm817, %v775, %v816
  %v962 = vsel %vm821, %v775, %v816
  %v964 = vrot.slane %v962, 1
  %vm965 = vsmask.f32 256
  %vm966 = vsmask.f32 1284
  %vm967 = vmor %vm965, %vm966
  %vm968 = vsmask.f32 2312
  %vm969 = vmor %vm967, %vm968
  %vm970 = vsmask.f32 3340
  %vm971 = vmor %vm969, %vm970
  %vm972 = vsmask.f32 4368
  %vm973 = vmor %vm971, %vm972
  %vm974 = vsmask.f32 5396
  %vm975 = vmor %vm973, %vm974
  %vm976 = vsmask.f32 6424
  %vm977 = vmor %vm975, %vm976
  %vm978 = vsmask.f32 7452
  %vm979 = vmor %vm977, %vm978
  %v980 = vshrl.u32 %v820, 16
  %v982 = vrot.slane %v980, 7
  %v983 = vrot.slane %v982, 1
  %v985 = vshll.u32 %v824, 16
  %v987 = vsel %vm979, %v983, %v985
  %v988 = vshrl.u32 %v824, 16
  %v990 = vrot.slane %v988, 7
  %v991 = vrot.slane %v990, 1
  %v993 = vshll.u32 %v828, 16
  %v995 = vsel %vm979, %v991, %v993
  %v996 = vshrl.u32 %v828, 16
  %v998 = vrot.slane %v996, 7
  %v999 = vrot.slane %v998, 1
  %v1001 = vshll.u32 %v832, 16
  %v1003 = vsel %vm979, %v999, %v1001
  %v1004 = vshrl.u32 %v832, 16
  %v1006 = vrot.slane %v1004, 7
  %v1007 = vrot.slane %v1006, 1
  %v1008 = vshll.u32 %v835, 16
  %v1010 = vsel %vm979, %v1007, %v1008
  %v1011 = vshrl.u32 %v835, 16
  %v1013 = vrot.slane %v1011, 7
  %v1014 = vrot.slane %v1013, 1
  %v1016 = vshll.u32 %v838, 16
  %v1018 = vsel %vm979, %v1014, %v1016
  %v1019 = vshrl.u32 %v841, 16
  %v1021 = vrot.slane %v1019, 7
  %v1022 = vrot.slane %v1021, 1
  %v1024 = vshll.u32 %v844, 16
  %v1026 = vsel %vm979, %v1022, %v1024
  %v1027 = vshrl.u32 %v844, 16
  %v1029 = vrot.slane %v1027, 7
  %v1030 = vrot.slane %v1029, 1
  %v1032 = vshll.u32 %v847, 16
  %v1034 = vsel %vm979, %v1030, %v1032
  %v1035 = vshrl.u32 %v847, 16
  %v1037 = vrot.slane %v1035, 7
  %v1038 = vrot.slane %v1037, 1
  %v1040 = vshll.u32 %v850, 16
  %v1042 = vsel %vm979, %v1038, %v1040
  %v1043 = vshrl.u32 %v850, 16
  %v1045 = vrot.slane %v1043, 7
  %v1046 = vrot.slane %v1045, 1
  %v1047 = vshll.u32 %v853, 16
  %v1049 = vsel %vm979, %v1046, %v1047
  %v1050 = vshrl.u32 %v853, 16
  %v1052 = vrot.slane %v1050, 7
  %v1053 = vrot.slane %v1052, 1
  %v1055 = vshll.u32 %v856, 16
  %v1057 = vsel %vm979, %v1053, %v1055
  %v1058 = vshrl.u32 %v859, 16
  %v1060 = vrot.slane %v1058, 7
  %v1061 = vrot.slane %v1060, 1
  %v1063 = vshll.u32 %v862, 16
  %v1065 = vsel %vm979, %v1061, %v1063
  %v1066 = vshrl.u32 %v862, 16
  %v1068 = vrot.slane %v1066, 7
  %v1069 = vrot.slane %v1068, 1
  %v1071 = vshll.u32 %v865, 16
  %v1073 = vsel %vm979, %v1069, %v1071
  %v1074 = vshrl.u32 %v865, 16
  %v1076 = vrot.slane %v1074, 7
  %v1077 = vrot.slane %v1076, 1
  %v1079 = vshll.u32 %v868, 16
  %v1081 = vsel %vm979, %v1077, %v1079
  %v1082 = vshrl.u32 %v868, 16
  %v1084 = vrot.slane %v1082, 7
  %v1085 = vrot.slane %v1084, 1
  %v1086 = vshll.u32 %v871, 16
  %v1088 = vsel %vm979, %v1085, %v1086
  %v1089 = vshrl.u32 %v871, 16
  %v1091 = vrot.slane %v1089, 7
  %v1092 = vrot.slane %v1091, 1
  %v1094 = vshll.u32 %v874, 16
  %v1096 = vsel %vm979, %v1092, %v1094
  %v1097 = vshrl.u32 %v877, 16
  %v1099 = vrot.slane %v1097, 7
  %v1100 = vrot.slane %v1099, 1
  %v1102 = vshll.u32 %v880, 16
  %v1104 = vsel %vm979, %v1100, %v1102
  %v1105 = vshrl.u32 %v880, 16
  %v1107 = vrot.slane %v1105, 7
  %v1108 = vrot.slane %v1107, 1
  %v1110 = vshll.u32 %v883, 16
  %v1112 = vsel %vm979, %v1108, %v1110
  %v1113 = vshrl.u32 %v883, 16
  %v1115 = vrot.slane %v1113, 7
  %v1116 = vrot.slane %v1115, 1
  %v1118 = vshll.u32 %v886, 16
  %v1120 = vsel %vm979, %v1116, %v1118
  %v1121 = vshrl.u32 %v886, 16
  %v1123 = vrot.slane %v1121, 7
  %v1124 = vrot.slane %v1123, 1
  %v1125 = vshll.u32 %v889, 16
  %v1127 = vsel %vm979, %v1124, %v1125
  %v1128 = vshrl.u32 %v889, 16
  %v1130 = vrot.slane %v1128, 7
  %v1131 = vrot.slane %v1130, 1
  %v1133 = vshll.u32 %v892, 16
  %v1135 = vsel %vm979, %v1131, %v1133
  %v1136 = vshrl.u32 %v895, 16
  %v1138 = vrot.slane %v1136, 7
  %v1139 = vrot.slane %v1138, 1
  %v1141 = vshll.u32 %v898, 16
  %v1143 = vsel %vm979, %v1139, %v1141
  %v1144 = vshrl.u32 %v898, 16
  %v1146 = vrot.slane %v1144, 7
  %v1147 = vrot.slane %v1146, 1
  %v1149 = vshll.u32 %v901, 16
  %v1151 = vsel %vm979, %v1147, %v1149
  %v1152 = vshrl.u32 %v901, 16
  %v1154 = vrot.slane %v1152, 7
  %v1155 = vrot.slane %v1154, 1
  %v1157 = vshll.u32 %v904, 16
  %v1159 = vsel %vm979, %v1155, %v1157
  %v1160 = vshrl.u32 %v904, 16
  %v1162 = vrot.slane %v1160, 7
  %v1163 = vrot.slane %v1162, 1
  %v1164 = vshll.u32 %v907, 16
  %v1166 = vsel %vm979, %v1163, %v1164
  %v1167 = vshrl.u32 %v907, 16
  %v1169 = vrot.slane %v1167, 7
  %v1170 = vrot.slane %v1169, 1
  %v1172 = vshll.u32 %v910, 16
  %v1174 = vsel %vm979, %v1170, %v1172
  %v1175 = vshrl.u32 %v913, 16
  %v1177 = vrot.slane %v1175, 7
  %v1178 = vrot.slane %v1177, 1
  %v1180 = vshll.u32 %v916, 16
  %v1182 = vsel %vm979, %v1178, %v1180
  %v1183 = vshrl.u32 %v916, 16
  %v1185 = vrot.slane %v1183, 7
  %v1186 = vrot.slane %v1185, 1
  %v1188 = vshll.u32 %v919, 16
  %v1190 = vsel %vm979, %v1186, %v1188
  %v1191 = vshrl.u32 %v919, 16
  %v1193 = vrot.slane %v1191, 7
  %v1194 = vrot.slane %v1193, 1
  %v1196 = vshll.u32 %v922, 16
  %v1198 = vsel %vm979, %v1194, %v1196
  %v1199 = vshrl.u32 %v922, 16
  %v1201 = vrot.slane %v1199, 7
  %v1202 = vrot.slane %v1201, 1
  %v1203 = vshll.u32 %v925, 16
  %v1205 = vsel %vm979, %v1202, %v1203
  %v1206 = vshrl.u32 %v925, 16
  %v1208 = vrot.slane %v1206, 7
  %v1209 = vrot.slane %v1208, 1
  %v1211 = vshll.u32 %v928, 16
  %v1213 = vsel %vm979, %v1209, %v1211
  %v1214 = vshrl.u32 %v931, 16
  %v1216 = vrot.slane %v1214, 7
  %v1217 = vrot.slane %v1216, 1
  %v1219 = vshll.u32 %v934, 16
  %v1221 = vsel %vm979, %v1217, %v1219
  %v1222 = vshrl.u32 %v934, 16
  %v1224 = vrot.slane %v1222, 7
  %v1225 = vrot.slane %v1224, 1
  %v1227 = vshll.u32 %v937, 16
  %v1229 = vsel %vm979, %v1225, %v1227
  %v1230 = vshrl.u32 %v937, 16
  %v1232 = vrot.slane %v1230, 7
  %v1233 = vrot.slane %v1232, 1
  %v1235 = vshll.u32 %v940, 16
  %v1237 = vsel %vm979, %v1233, %v1235
  %v1238 = vshrl.u32 %v940, 16
  %v1240 = vrot.slane %v1238, 7
  %v1241 = vrot.slane %v1240, 1
  %v1242 = vshll.u32 %v943, 16
  %v1244 = vsel %vm979, %v1241, %v1242
  %v1245 = vshrl.u32 %v943, 16
  %v1247 = vrot.slane %v1245, 7
  %v1248 = vrot.slane %v1247, 1
  %v1250 = vshll.u32 %v946, 16
  %v1252 = vsel %vm979, %v1248, %v1250
  %v1253 = vshrl.u32 %v949, 16
  %v1255 = vrot.slane %v1253, 7
  %v1256 = vrot.slane %v1255, 1
  %v1258 = vshll.u32 %v952, 16
  %v1260 = vsel %vm979, %v1256, %v1258
  %v1261 = vshrl.u32 %v952, 16
  %v1263 = vrot.slane %v1261, 7
  %v1264 = vrot.slane %v1263, 1
  %v1266 = vshll.u32 %v955, 16
  %v1268 = vsel %vm979, %v1264, %v1266
  %v1269 = vshrl.u32 %v955, 16
  %v1271 = vrot.slane %v1269, 7
  %v1272 = vrot.slane %v1271, 1
  %v1274 = vshll.u32 %v958, 16
  %v1276 = vsel %vm979, %v1272, %v1274
  %v1277 = vshrl.u32 %v958, 16
  %v1279 = vrot.slane %v1277, 7
  %v1280 = vrot.slane %v1279, 1
  %v1281 = vshll.u32 %v961, 16
  %v1283 = vsel %vm979, %v1280, %v1281
  %v1284 = vshrl.u32 %v961, 16
  %v1286 = vrot.slane %v1284, 7
  %v1287 = vrot.slane %v1286, 1
  %v1289 = vshll.u32 %v964, 16
  %v1291 = vsel %vm979, %v1287, %v1289
  %1293 = vst [vmem:[#allocation1] ss:$9 sm:$0xff] %v987
  %s1295 = scalar_lea.vmem [#allocation1], 1
  %1296 = vst [vmem:[%s1295] ss:$9 sm:$0xff] %v995
  %s1298 = scalar_lea.vmem [#allocation1], 2
  %1299 = vst [vmem:[%s1298] ss:$9 sm:$0xff] %v1003
  %s1301 = scalar_lea.vmem [#allocation1], 3
  %1302 = vst [vmem:[%s1301] ss:$9 sm:$0xff] %v1010
  %s1304 = scalar_lea.vmem [#allocation1], 4
  %1305 = vst [vmem:[%s1304] ss:$9 sm:$0xff] %v1018
  %s1307 = scalar_lea.vmem [#allocation1], 5
  %1308 = vst [vmem:[%s1307] ss:$9 sm:$0xff] %v1026
  %s1310 = scalar_lea.vmem [#allocation1], 6
  %1311 = vst [vmem:[%s1310] ss:$9 sm:$0xff] %v1034
  %s1313 = scalar_lea.vmem [#allocation1], 7
  %1314 = vst [vmem:[%s1313] ss:$9 sm:$0xff] %v1042
  %v1315 = vld [vmem:[#allocation1] sm:$0xff]
  %1317 = vst [vmem:[#allocation1] ss:$9 sm:$0xff] %v1049
  %1319 = vst [vmem:[%s1295] ss:$9 sm:$0xff] %v1057
  %1321 = vst [vmem:[%s1298] ss:$9 sm:$0xff] %v1065
  %1323 = vst [vmem:[%s1301] ss:$9 sm:$0xff] %v1073
  %1325 = vst [vmem:[%s1304] ss:$9 sm:$0xff] %v1081
  %1327 = vst [vmem:[%s1307] ss:$9 sm:$0xff] %v1088
  %1329 = vst [vmem:[%s1310] ss:$9 sm:$0xff] %v1096
  %1331 = vst [vmem:[%s1313] ss:$9 sm:$0xff] %v1104
  %v1332 = vld [vmem:[#allocation1] sm:$0xff]
  %1334 = vst [vmem:[#allocation1] ss:$9 sm:$0xff] %v1112
  %1336 = vst [vmem:[%s1295] ss:$9 sm:$0xff] %v1120
  %1338 = vst [vmem:[%s1298] ss:$9 sm:$0xff] %v1127
  %1340 = vst [vmem:[%s1301] ss:$9 sm:$0xff] %v1135
  %1342 = vst [vmem:[%s1304] ss:$9 sm:$0xff] %v1143
  %1344 = vst [vmem:[%s1307] ss:$9 sm:$0xff] %v1151
  %1346 = vst [vmem:[%s1310] ss:$9 sm:$0xff] %v1159
  %1348 = vst [vmem:[%s1313] ss:$9 sm:$0xff] %v1166
  %v1349 = vld [vmem:[#allocation1] sm:$0xff]
  %1351 = vst [vmem:[#allocation1] ss:$9 sm:$0xff] %v1174
  %1353 = vst [vmem:[%s1295] ss:$9 sm:$0xff] %v1182
  %1355 = vst [vmem:[%s1298] ss:$9 sm:$0xff] %v1190
  %1357 = vst [vmem:[%s1301] ss:$9 sm:$0xff] %v1198
  %1359 = vst [vmem:[%s1304] ss:$9 sm:$0xff] %v1205
  %1361 = vst [vmem:[%s1307] ss:$9 sm:$0xff] %v1213
  %1363 = vst [vmem:[%s1310] ss:$9 sm:$0xff] %v1221
  %1365 = vst [vmem:[%s1313] ss:$9 sm:$0xff] %v1229
  %v1366 = vld [vmem:[#allocation1] sm:$0xff]
  %1368 = vst [vmem:[#allocation1] ss:$9 sm:$0xff] %v1237
  %1370 = vst [vmem:[%s1295] ss:$9 sm:$0xff] %v1244
  %1372 = vst [vmem:[%s1298] ss:$9 sm:$0xff] %v1252
  %1374 = vst [vmem:[%s1301] ss:$9 sm:$0xff] %v1260
  %1376 = vst [vmem:[%s1304] ss:$9 sm:$0xff] %v1268
  %1378 = vst [vmem:[%s1307] ss:$9 sm:$0xff] %v1276
  %1380 = vst [vmem:[%s1310] ss:$9 sm:$0xff] %v1283
  %1382 = vst [vmem:[%s1313] ss:$9 sm:$0xff] %v1291
  %v1383 = vld [vmem:[#allocation1] sm:$0xff]
  %v1388 = vunpack.c.l.b16 %v781
  %v1389 = vunpack.c.l.b16 %v782
  %v1390 = vunpack.c.l.b16 %v783
  %v1391 = vunpack.c.l.b16 %v784
  %v1392 = vpack.c.b16 %v1389, %v1388
  %v1393 = vpack.c.b16 %v1391, %v1390
  %v1395 = vsel %vm379, %v1315, 0
  %v1397 = vsel %vm379, %v1332, 0
  %v1399 = vsel %vm379, %v1349, 0
  %v1401 = vsel %vm379, %v1366, 0
  %v1403 = vsel %vm379, %v1383, 0
  %v1406 = vsel %vm212, %v1393, 0
  %1408 = vmatpush.bf16.msra.mxu0 0
  %1409 = vmatpush.bf16.msra.mxu0 0
  %1410 = vmatpush.bf16.msra.mxu0 0
  %1411 = vmatpush.bf16.msra.mxu0 0
  %1412 = vmatpush.bf16.msra.mxu0 0
  %1413 = vmatpush.bf16.msra.mxu0 0
  %1414 = vmatpush.bf16.msra.mxu0 %v1406
  %1415 = vmatpush.bf16.msra.mxu0 %v1392
  %1416 = vmatmul.bf16.gmra.mxu0 %v1395
  %v1417 = vpop.f32.mrf.mxu0
  %v1418 = vadd.f32 0.0, %v1417
  %v1419 = vpop.f32.mrf.mxu0
  %v1420 = vadd.f32 0.0, %v1419
  %1421 = vmatmul.bf16.gmra.mxu0 %v1397
  %v1422 = vpop.f32.mrf.mxu0
  %v1423 = vadd.f32 0.0, %v1422
  %v1424 = vpop.f32.mrf.mxu0
  %v1425 = vadd.f32 0.0, %v1424
  %1426 = vmatmul.bf16.gmra.mxu0 %v1399
  %v1427 = vpop.f32.mrf.mxu0
  %v1428 = vadd.f32 0.0, %v1427
  %v1429 = vpop.f32.mrf.mxu0
  %v1430 = vadd.f32 0.0, %v1429
  %1431 = vmatmul.bf16.gmra.mxu0 %v1401
  %v1432 = vpop.f32.mrf.mxu0
  %v1433 = vadd.f32 0.0, %v1432
  %v1434 = vpop.f32.mrf.mxu0
  %v1435 = vadd.f32 0.0, %v1434
  %1436 = vmatmul.bf16.gmra.mxu0 %v1403
  %v1437 = vpop.f32.mrf.mxu0
  %v1438 = vadd.f32 0.0, %v1437
  %v1439 = vpop.f32.mrf.mxu0
  %v1440 = vadd.f32 0.0, %v1439
  %1441 = vdwg.mxu0
  %1442 = vst [vmem:[#allocation1] ss:$9 sm:$0xff] %v820
  %s1443 = scalar_lea.vmem [#allocation1], 1
  %1444 = vst [vmem:[%s1443] ss:$9 sm:$0xff] %v824
  %s1445 = scalar_lea.vmem [#allocation1], 2
  %1446 = vst [vmem:[%s1445] ss:$9 sm:$0xff] %v828
  %s1447 = scalar_lea.vmem [#allocation1], 3
  %1448 = vst [vmem:[%s1447] ss:$9 sm:$0xff] %v832
  %s1449 = scalar_lea.vmem [#allocation1], 4
  %1450 = vst [vmem:[%s1449] ss:$9 sm:$0xff] %v835
  %s1451 = scalar_lea.vmem [#allocation1], 5
  %1452 = vst [vmem:[%s1451] ss:$9 sm:$0xff] %v841
  %s1453 = scalar_lea.vmem [#allocation1], 6
  %1454 = vst [vmem:[%s1453] ss:$9 sm:$0xff] %v844
  %s1455 = scalar_lea.vmem [#allocation1], 7
  %1456 = vst [vmem:[%s1455] ss:$9 sm:$0xff] %v847
  %v1457 = vld [vmem:[#allocation1] sm:$0xff]
  %1458 = vst [vmem:[#allocation1] ss:$9 sm:$0xff] %v850
  %1459 = vst [vmem:[%s1443] ss:$9 sm:$0xff] %v853
  %1460 = vst [vmem:[%s1445] ss:$9 sm:$0xff] %v859
  %1461 = vst [vmem:[%s1447] ss:$9 sm:$0xff] %v862
  %1462 = vst [vmem:[%s1449] ss:$9 sm:$0xff] %v865
  %1463 = vst [vmem:[%s1451] ss:$9 sm:$0xff] %v868
  %1464 = vst [vmem:[%s1453] ss:$9 sm:$0xff] %v871
  %1465 = vst [vmem:[%s1455] ss:$9 sm:$0xff] %v877
  %v1466 = vld [vmem:[#allocation1] sm:$0xff]
  %1467 = vst [vmem:[#allocation1] ss:$9 sm:$0xff] %v880
  %1468 = vst [vmem:[%s1443] ss:$9 sm:$0xff] %v883
  %1469 = vst [vmem:[%s1445] ss:$9 sm:$0xff] %v886
  %1470 = vst [vmem:[%s1447] ss:$9 sm:$0xff] %v889
  %1471 = vst [vmem:[%s1449] ss:$9 sm:$0xff] %v895
  %1472 = vst [vmem:[%s1451] ss:$9 sm:$0xff] %v898
  %1473 = vst [vmem:[%s1453] ss:$9 sm:$0xff] %v901
  %1474 = vst [vmem:[%s1455] ss:$9 sm:$0xff] %v904
  %v1475 = vld [vmem:[#allocation1] sm:$0xff]
  %1476 = vst [vmem:[#allocation1] ss:$9 sm:$0xff] %v907
  %1477 = vst [vmem:[%s1443] ss:$9 sm:$0xff] %v913
  %1478 = vst [vmem:[%s1445] ss:$9 sm:$0xff] %v916
  %1479 = vst [vmem:[%s1447] ss:$9 sm:$0xff] %v919
  %1480 = vst [vmem:[%s1449] ss:$9 sm:$0xff] %v922
  %1481 = vst [vmem:[%s1451] ss:$9 sm:$0xff] %v925
  %1482 = vst [vmem:[%s1453] ss:$9 sm:$0xff] %v931
  %1483 = vst [vmem:[%s1455] ss:$9 sm:$0xff] %v934
  %v1484 = vld [vmem:[#allocation1] sm:$0xff]
  %1485 = vst [vmem:[#allocation1] ss:$9 sm:$0xff] %v937
  %1486 = vst [vmem:[%s1443] ss:$9 sm:$0xff] %v940
  %1487 = vst [vmem:[%s1445] ss:$9 sm:$0xff] %v943
  %1488 = vst [vmem:[%s1447] ss:$9 sm:$0xff] %v949
  %1489 = vst [vmem:[%s1449] ss:$9 sm:$0xff] %v952
  %1490 = vst [vmem:[%s1451] ss:$9 sm:$0xff] %v955
  %1491 = vst [vmem:[%s1453] ss:$9 sm:$0xff] %v958
  %1492 = vst [vmem:[%s1455] ss:$9 sm:$0xff] %v961
  %v1493 = vld [vmem:[#allocation1] sm:$0xff]
  %v1498 = vunpack.c.l.b16 %v776
  %v1499 = vunpack.c.l.b16 %v777
  %v1500 = vunpack.c.l.b16 %v778
  %v1501 = vunpack.c.l.b16 %v779
  %v1502 = vpack.c.b16 %v1499, %v1498
  %v1503 = vpack.c.b16 %v1501, %v1500
  %v1505 = vsel %vm379, %v1457, 0
  %v1507 = vsel %vm379, %v1466, 0
  %v1509 = vsel %vm379, %v1475, 0
  %v1511 = vsel %vm379, %v1484, 0
  %v1513 = vsel %vm379, %v1493, 0
  %v1516 = vsel %vm212, %v1503, 0
  %1518 = vmatpush.bf16.msra.mxu0 0
  %1519 = vmatpush.bf16.msra.mxu0 0
  %1520 = vmatpush.bf16.msra.mxu0 0
  %1521 = vmatpush.bf16.msra.mxu0 0
  %1522 = vmatpush.bf16.msra.mxu0 0
  %1523 = vmatpush.bf16.msra.mxu0 0
  %1524 = vmatpush.bf16.msra.mxu0 %v1516
  %1525 = vmatpush.bf16.msra.mxu0 %v1502
  %1526 = vmatmul.bf16.gmra.mxu0 %v1505
  %v1527 = vpop.f32.mrf.mxu0
  %v1528 = vadd.f32 %v1418, %v1527
  %v1529 = vpop.f32.mrf.mxu0
  %v1530 = vadd.f32 %v1420, %v1529
  %1531 = vmatmul.bf16.gmra.mxu0 %v1507
  %v1532 = vpop.f32.mrf.mxu0
  %v1533 = vadd.f32 %v1423, %v1532
  %v1534 = vpop.f32.mrf.mxu0
  %v1535 = vadd.f32 %v1425, %v1534
  %1536 = vmatmul.bf16.gmra.mxu0 %v1509
  %v1537 = vpop.f32.mrf.mxu0
  %v1538 = vadd.f32 %v1428, %v1537
  %v1539 = vpop.f32.mrf.mxu0
  %v1540 = vadd.f32 %v1430, %v1539
  %1541 = vmatmul.bf16.gmra.mxu0 %v1511
  %v1542 = vpop.f32.mrf.mxu0
  %v1543 = vadd.f32 %v1433, %v1542
  %v1544 = vpop.f32.mrf.mxu0
  %v1545 = vadd.f32 %v1435, %v1544
  %1546 = vmatmul.bf16.gmra.mxu0 %v1513
  %v1547 = vpop.f32.mrf.mxu0
  %v1548 = vadd.f32 %v1438, %v1547
  %v1549 = vpop.f32.mrf.mxu0
  %v1550 = vadd.f32 %v1440, %v1549
  %1551 = vdwg.mxu0
  %v1562 = vrot.slane %v1528, 2
  %v1563 = vrot.slane %v1528, 4
  %v1564 = vrot.slane %v1528, 6
  %v1565 = vrot.slane %v1530, 2
  %v1566 = vrot.slane %v1530, 4
  %v1567 = vrot.slane %v1530, 6
  %v1568 = vrot.slane %v1533, 2
  %v1569 = vrot.slane %v1533, 4
  %v1570 = vrot.slane %v1533, 6
  %v1571 = vrot.slane %v1535, 2
  %v1572 = vrot.slane %v1535, 4
  %v1573 = vrot.slane %v1535, 6
  %v1574 = vrot.slane %v1538, 2
  %v1575 = vrot.slane %v1538, 4
  %v1576 = vrot.slane %v1538, 6
  %v1577 = vrot.slane %v1540, 2
  %v1578 = vrot.slane %v1540, 4
  %v1579 = vrot.slane %v1540, 6
  %v1580 = vrot.slane %v1543, 2
  %v1581 = vrot.slane %v1543, 4
  %v1582 = vrot.slane %v1543, 6
  %v1583 = vrot.slane %v1545, 2
  %v1584 = vrot.slane %v1545, 4
  %v1585 = vrot.slane %v1545, 6
  %v1586 = vrot.slane %v1548, 2
  %v1587 = vrot.slane %v1548, 4
  %v1588 = vrot.slane %v1548, 6
  %v1589 = vrot.slane %v1550, 2
  %v1590 = vrot.slane %v1550, 4
  %v1591 = vrot.slane %v1550, 6
  %s1622 = scalar_lea.vmem %s3, 32
  %v1623 = vld [vmem:[%s1622] sm:$0xf]
  %v1624 = vld [vmem:[%s1622 + $0x4] sm:$0xf]
  %v1625 = vld [vmem:[%s1622 + $0x8] sm:$0xf]
  %v1626 = vld [vmem:[%s1622 + $0xc] sm:$0x7]
  %1627 = vst [vmem:[#allocation1] sm:$0xff] %v760
  %1628 = vst [vmem:[#allocation1 + $0x20] sm:$0xff] %v761
  %s1629 = scalar_lea.vmem [#allocation1], 1
  %v1630 = vld [vmem:[%s1629] ss:$4 sm:$0xff]
  %s1631 = scalar_lea.vmem [#allocation1], 2
  %v1632 = vld [vmem:[%s1631] ss:$4 sm:$0xff]
  %s1633 = scalar_lea.vmem [#allocation1], 3
  %v1634 = vld [vmem:[%s1633] ss:$4 sm:$0xff]
  %s1635 = scalar_lea.vmem [#allocation1], 32
  %v1636 = vld [vmem:[%s1635] ss:$4 sm:$0xff]
  %s1637 = scalar_lea.vmem [#allocation1], 33
  %v1638 = vld [vmem:[%s1637] ss:$4 sm:$0xff]
  %1639 = vst [vmem:[#allocation1] sm:$0xff] %v762
  %1640 = vst [vmem:[#allocation1 + $0x20] sm:$0xff] %v763
  %v1641 = vld [vmem:[%s1629] ss:$4 sm:$0xff]
  %v1642 = vld [vmem:[%s1631] ss:$4 sm:$0xff]
  %v1643 = vld [vmem:[%s1633] ss:$4 sm:$0xff]
  %v1644 = vld [vmem:[%s1635] ss:$4 sm:$0xff]
  %v1645 = vld [vmem:[%s1637] ss:$4 sm:$0xff]
  %1646 = vst [vmem:[#allocation1] sm:$0xff] %v764
  %1647 = vst [vmem:[#allocation1 + $0x20] sm:$0xff] %v765
  %v1648 = vld [vmem:[%s1629] ss:$4 sm:$0xff]
  %v1649 = vld [vmem:[%s1631] ss:$4 sm:$0xff]
  %v1650 = vld [vmem:[%s1633] ss:$4 sm:$0xff]
  %v1651 = vld [vmem:[%s1635] ss:$4 sm:$0xff]
  %v1652 = vld [vmem:[%s1637] ss:$4 sm:$0xff]
  %1653 = vst [vmem:[#allocation1] sm:$0xff] %v766
  %1654 = vst [vmem:[#allocation1 + $0x20] sm:$0xff] %v767
  %v1655 = vld [vmem:[%s1629] ss:$4 sm:$0xff]
  %v1656 = vld [vmem:[%s1631] ss:$4 sm:$0xff]
  %v1657 = vld [vmem:[%s1633] ss:$4 sm:$0xff]
  %v1658 = vld [vmem:[%s1635] ss:$4 sm:$0xff]
  %v1659 = vld [vmem:[%s1637] ss:$4 sm:$0xff]
  %1660 = vst [vmem:[#allocation1] sm:$0xff] %v768
  %1661 = vst [vmem:[#allocation1 + $0x20] sm:$0xff] %v769
  %v1662 = vld [vmem:[%s1629] ss:$4 sm:$0xff]
  %v1663 = vld [vmem:[%s1631] ss:$4 sm:$0xff]
  %v1664 = vld [vmem:[%s1633] ss:$4 sm:$0xff]
  %v1665 = vld [vmem:[%s1635] ss:$4 sm:$0xff]
  %v1666 = vld [vmem:[%s1637] ss:$4 sm:$0xff]
  %1667 = vst [vmem:[#allocation1] sm:$0xff] %v770
  %1668 = vst [vmem:[#allocation1 + $0x20] sm:$0xff] %v771
  %v1669 = vld [vmem:[%s1629] ss:$4 sm:$0xff]
  %v1670 = vld [vmem:[%s1631] ss:$4 sm:$0xff]
  %v1671 = vld [vmem:[%s1633] ss:$4 sm:$0xff]
  %v1672 = vld [vmem:[%s1635] ss:$4 sm:$0xff]
  %v1673 = vld [vmem:[%s1637] ss:$4 sm:$0xff]
  %1674 = vst [vmem:[#allocation1] sm:$0xff] %v772
  %1675 = vst [vmem:[#allocation1 + $0x20] sm:$0xff] %v773
  %v1676 = vld [vmem:[%s1629] ss:$4 sm:$0xff]
  %v1677 = vld [vmem:[%s1631] ss:$4 sm:$0xff]
  %v1678 = vld [vmem:[%s1633] ss:$4 sm:$0xff]
  %v1679 = vld [vmem:[%s1635] ss:$4 sm:$0xff]
  %v1680 = vld [vmem:[%s1637] ss:$4 sm:$0xff]
  %1681 = vst [vmem:[#allocation1] sm:$0xff] %v774
  %1682 = vst [vmem:[#allocation1 + $0x20] sm:$0xff] %v775
  %v1683 = vld [vmem:[%s1629] ss:$4 sm:$0xff]
  %v1684 = vld [vmem:[%s1631] ss:$4 sm:$0xff]
  %v1685 = vld [vmem:[%s1633] ss:$4 sm:$0xff]
  %v1686 = vld [vmem:[%s1635] ss:$4 sm:$0xff]
  %v1687 = vld [vmem:[%s1637] ss:$4 sm:$0xff]
  %1688 = vst [vmem:[#allocation1] ss:$9 sm:$0xff] %v1630
  %s1689 = scalar_lea.vmem [#allocation1], 1
  %1690 = vst [vmem:[%s1689] ss:$9 sm:$0xff] %v1632
  %s1691 = scalar_lea.vmem [#allocation1], 2
  %1692 = vst [vmem:[%s1691] ss:$9 sm:$0xff] %v1634
  %s1693 = scalar_lea.vmem [#allocation1], 3
  %1694 = vst [vmem:[%s1693] ss:$9 sm:$0xff] %v1636
  %s1695 = scalar_lea.vmem [#allocation1], 4
  %1696 = vst [vmem:[%s1695] ss:$9 sm:$0xff] %v1638
  %s1697 = scalar_lea.vmem [#allocation1], 5
  %1698 = vst [vmem:[%s1697] ss:$9 sm:$0xff] %v1641
  %s1699 = scalar_lea.vmem [#allocation1], 6
  %1700 = vst [vmem:[%s1699] ss:$9 sm:$0xff] %v1642
  %s1701 = scalar_lea.vmem [#allocation1], 7
  %1702 = vst [vmem:[%s1701] ss:$9 sm:$0xff] %v1643
  %v1703 = vld [vmem:[#allocation1] sm:$0xff]
  %1704 = vst [vmem:[#allocation1] ss:$9 sm:$0xff] %v1644
  %1705 = vst [vmem:[%s1689] ss:$9 sm:$0xff] %v1645
  %1706 = vst [vmem:[%s1691] ss:$9 sm:$0xff] %v1648
  %1707 = vst [vmem:[%s1693] ss:$9 sm:$0xff] %v1649
  %1708 = vst [vmem:[%s1695] ss:$9 sm:$0xff] %v1650
  %1709 = vst [vmem:[%s1697] ss:$9 sm:$0xff] %v1651
  %1710 = vst [vmem:[%s1699] ss:$9 sm:$0xff] %v1652
  %1711 = vst [vmem:[%s1701] ss:$9 sm:$0xff] %v1655
  %v1712 = vld [vmem:[#allocation1] sm:$0xff]
  %1713 = vst [vmem:[#allocation1] ss:$9 sm:$0xff] %v1656
  %1714 = vst [vmem:[%s1689] ss:$9 sm:$0xff] %v1657
  %1715 = vst [vmem:[%s1691] ss:$9 sm:$0xff] %v1658
  %1716 = vst [vmem:[%s1693] ss:$9 sm:$0xff] %v1659
  %1717 = vst [vmem:[%s1695] ss:$9 sm:$0xff] %v1662
  %1718 = vst [vmem:[%s1697] ss:$9 sm:$0xff] %v1663
  %1719 = vst [vmem:[%s1699] ss:$9 sm:$0xff] %v1664
  %1720 = vst [vmem:[%s1701] ss:$9 sm:$0xff] %v1665
  %v1721 = vld [vmem:[#allocation1] sm:$0xff]
  %1722 = vst [vmem:[#allocation1] ss:$9 sm:$0xff] %v1666
  %1723 = vst [vmem:[%s1689] ss:$9 sm:$0xff] %v1669
  %1724 = vst [vmem:[%s1691] ss:$9 sm:$0xff] %v1670
  %1725 = vst [vmem:[%s1693] ss:$9 sm:$0xff] %v1671
  %1726 = vst [vmem:[%s1695] ss:$9 sm:$0xff] %v1672
  %1727 = vst [vmem:[%s1697] ss:$9 sm:$0xff] %v1673
  %1728 = vst [vmem:[%s1699] ss:$9 sm:$0xff] %v1676
  %1729 = vst [vmem:[%s1701] ss:$9 sm:$0xff] %v1677
  %v1730 = vld [vmem:[#allocation1] sm:$0xff]
  %1731 = vst [vmem:[#allocation1] ss:$9 sm:$0xff] %v1678
  %1732 = vst [vmem:[%s1689] ss:$9 sm:$0xff] %v1679
  %1733 = vst [vmem:[%s1691] ss:$9 sm:$0xff] %v1680
  %1734 = vst [vmem:[%s1693] ss:$9 sm:$0xff] %v1683
  %1735 = vst [vmem:[%s1695] ss:$9 sm:$0xff] %v1684
  %1736 = vst [vmem:[%s1697] ss:$9 sm:$0xff] %v1685
  %1737 = vst [vmem:[%s1699] ss:$9 sm:$0xff] %v1686
  %1738 = vst [vmem:[%s1701] ss:$9 sm:$0xff] %v1687
  %v1739 = vld [vmem:[#allocation1] sm:$0xff]
  %v1744 = vunpack.c.l.b16 %v1623
  %v1745 = vunpack.c.l.b16 %v1624
  %v1746 = vunpack.c.l.b16 %v1625
  %v1747 = vunpack.c.l.b16 %v1626
  %v1748 = vpack.c.b16 %v1745, %v1744
  %v1749 = vpack.c.b16 %v1747, %v1746
  %v1751 = vsel %vm379, %v1703, 0
  %v1753 = vsel %vm379, %v1712, 0
  %v1755 = vsel %vm379, %v1721, 0
  %v1757 = vsel %vm379, %v1730, 0
  %v1759 = vsel %vm379, %v1739, 0
  %v1762 = vsel %vm212, %v1749, 0
  %1764 = vmatpush.bf16.msra.mxu0 0
  %1765 = vmatpush.bf16.msra.mxu0 0
  %1766 = vmatpush.bf16.msra.mxu0 0
  %1767 = vmatpush.bf16.msra.mxu0 0
  %1768 = vmatpush.bf16.msra.mxu0 0
  %1769 = vmatpush.bf16.msra.mxu0 0
  %1770 = vmatpush.bf16.msra.mxu0 %v1762
  %1771 = vmatpush.bf16.msra.mxu0 %v1748
  %1772 = vmatmul.bf16.gmra.mxu0 %v1751
  %v1773 = vpop.f32.mrf.mxu0
  %v1774 = vadd.f32 0.0, %v1773
  %v1775 = vpop.f32.mrf.mxu0
  %v1776 = vadd.f32 0.0, %v1775
  %1777 = vmatmul.bf16.gmra.mxu0 %v1753
  %v1778 = vpop.f32.mrf.mxu0
  %v1779 = vadd.f32 0.0, %v1778
  %v1780 = vpop.f32.mrf.mxu0
  %v1781 = vadd.f32 0.0, %v1780
  %1782 = vmatmul.bf16.gmra.mxu0 %v1755
  %v1783 = vpop.f32.mrf.mxu0
  %v1784 = vadd.f32 0.0, %v1783
  %v1785 = vpop.f32.mrf.mxu0
  %v1786 = vadd.f32 0.0, %v1785
  %1787 = vmatmul.bf16.gmra.mxu0 %v1757
  %v1788 = vpop.f32.mrf.mxu0
  %v1789 = vadd.f32 0.0, %v1788
  %v1790 = vpop.f32.mrf.mxu0
  %v1791 = vadd.f32 0.0, %v1790
  %1792 = vmatmul.bf16.gmra.mxu0 %v1759
  %v1793 = vpop.f32.mrf.mxu0
  %v1794 = vadd.f32 0.0, %v1793
  %v1795 = vpop.f32.mrf.mxu0
  %v1796 = vadd.f32 0.0, %v1795
  %1797 = vdwg.mxu0
  %v1808 = vrot.slane %v1774, 2
  %v1809 = vrot.slane %v1774, 4
  %v1810 = vrot.slane %v1774, 6
  %v1811 = vrot.slane %v1776, 2
  %v1812 = vrot.slane %v1776, 4
  %v1813 = vrot.slane %v1776, 6
  %v1814 = vrot.slane %v1779, 2
  %v1815 = vrot.slane %v1779, 4
  %v1816 = vrot.slane %v1779, 6
  %v1817 = vrot.slane %v1781, 2
  %v1818 = vrot.slane %v1781, 4
  %v1819 = vrot.slane %v1781, 6
  %v1820 = vrot.slane %v1784, 2
  %v1821 = vrot.slane %v1784, 4
  %v1822 = vrot.slane %v1784, 6
  %v1823 = vrot.slane %v1786, 2
  %v1824 = vrot.slane %v1786, 4
  %v1825 = vrot.slane %v1786, 6
  %v1826 = vrot.slane %v1789, 2
  %v1827 = vrot.slane %v1789, 4
  %v1828 = vrot.slane %v1789, 6
  %v1829 = vrot.slane %v1791, 2
  %v1830 = vrot.slane %v1791, 4
  %v1831 = vrot.slane %v1791, 6
  %v1832 = vrot.slane %v1794, 2
  %v1833 = vrot.slane %v1794, 4
  %v1834 = vrot.slane %v1794, 6
  %v1835 = vrot.slane %v1796, 2
  %v1836 = vrot.slane %v1796, 4
  %v1837 = vrot.slane %v1796, 6
  %v1868 = vadd.f32 %v1528, %v1774
  %v1869 = vadd.f32 %v1562, %v1808
  %v1870 = vadd.f32 %v1563, %v1809
  %v1871 = vadd.f32 %v1564, %v1810
  %v1872 = vadd.f32 %v1530, %v1776
  %v1873 = vadd.f32 %v1565, %v1811
  %v1874 = vadd.f32 %v1566, %v1812
  %v1875 = vadd.f32 %v1567, %v1813
  %v1876 = vadd.f32 %v1533, %v1779
  %v1877 = vadd.f32 %v1568, %v1814
  %v1878 = vadd.f32 %v1569, %v1815
  %v1879 = vadd.f32 %v1570, %v1816
  %v1880 = vadd.f32 %v1535, %v1781
  %v1881 = vadd.f32 %v1571, %v1817
  %v1882 = vadd.f32 %v1572, %v1818
  %v1883 = vadd.f32 %v1573, %v1819
  %v1884 = vadd.f32 %v1538, %v1784
  %v1885 = vadd.f32 %v1574, %v1820
  %v1886 = vadd.f32 %v1575, %v1821
  %v1887 = vadd.f32 %v1576, %v1822
  %v1888 = vadd.f32 %v1540, %v1786
  %v1889 = vadd.f32 %v1577, %v1823
  %v1890 = vadd.f32 %v1578, %v1824
  %v1891 = vadd.f32 %v1579, %v1825
  %v1892 = vadd.f32 %v1543, %v1789
  %v1893 = vadd.f32 %v1580, %v1826
  %v1894 = vadd.f32 %v1581, %v1827
  %v1895 = vadd.f32 %v1582, %v1828
  %v1896 = vadd.f32 %v1545, %v1791
  %v1897 = vadd.f32 %v1583, %v1829
  %v1898 = vadd.f32 %v1584, %v1830
  %v1899 = vadd.f32 %v1585, %v1831
  %v1900 = vadd.f32 %v1548, %v1794
  %v1901 = vadd.f32 %v1586, %v1832
  %v1902 = vadd.f32 %v1587, %v1833
  %v1903 = vadd.f32 %v1588, %v1834
  %v1904 = vadd.f32 %v1550, %v1796
  %v1905 = vadd.f32 %v1589, %v1835
  %v1906 = vadd.f32 %v1590, %v1836
  %v1907 = vadd.f32 %v1591, %v1837
  %v1908 = vmul.f32 %v1868, %v1868
  %v1909 = vmul.f32 %v1869, %v1869
  %v1910 = vmul.f32 %v1870, %v1870
  %v1911 = vmul.f32 %v1871, %v1871
  %v1912 = vmul.f32 %v1872, %v1872
  %v1913 = vmul.f32 %v1873, %v1873
  %v1914 = vmul.f32 %v1874, %v1874
  %v1915 = vmul.f32 %v1875, %v1875
  %v1916 = vmul.f32 %v1876, %v1876
  %v1917 = vmul.f32 %v1877, %v1877
  %v1918 = vmul.f32 %v1878, %v1878
  %v1919 = vmul.f32 %v1879, %v1879
  %v1920 = vmul.f32 %v1880, %v1880
  %v1921 = vmul.f32 %v1881, %v1881
  %v1922 = vmul.f32 %v1882, %v1882
  %v1923 = vmul.f32 %v1883, %v1883
  %v1924 = vmul.f32 %v1884, %v1884
  %v1925 = vmul.f32 %v1885, %v1885
  %v1926 = vmul.f32 %v1886, %v1886
  %v1927 = vmul.f32 %v1887, %v1887
  %v1928 = vmul.f32 %v1888, %v1888
  %v1929 = vmul.f32 %v1889, %v1889
  %v1930 = vmul.f32 %v1890, %v1890
  %v1931 = vmul.f32 %v1891, %v1891
  %v1932 = vmul.f32 %v1892, %v1892
  %v1933 = vmul.f32 %v1893, %v1893
  %v1934 = vmul.f32 %v1894, %v1894
  %v1935 = vmul.f32 %v1895, %v1895
  %v1936 = vmul.f32 %v1896, %v1896
  %v1937 = vmul.f32 %v1897, %v1897
  %v1938 = vmul.f32 %v1898, %v1898
  %v1939 = vmul.f32 %v1899, %v1899
  %v1940 = vmul.f32 %v1900, %v1900
  %v1941 = vmul.f32 %v1901, %v1901
  %v1942 = vmul.f32 %v1902, %v1902
  %v1943 = vmul.f32 %v1903, %v1903
  %v1944 = vmul.f32 %v1904, %v1904
  %v1945 = vmul.f32 %v1905, %v1905
  %v1946 = vmul.f32 %v1906, %v1906
  %v1947 = vmul.f32 %v1907, %v1907
  %1988 = vst [vmem:[#allocation1] ss:$4 sm:$0xff] %v1868
  %s1989 = scalar_lea.vmem [#allocation1], 1
  %1990 = vst [vmem:[%s1989] ss:$4 sm:$0xff] %v1869
  %s1991 = scalar_lea.vmem [#allocation1], 2
  %1992 = vst [vmem:[%s1991] ss:$4 sm:$0xff] %v1870
  %s1993 = scalar_lea.vmem [#allocation1], 3
  %1994 = vst [vmem:[%s1993] ss:$4 sm:$0xff] %v1871
  %s1995 = scalar_lea.vmem [#allocation1], 32
  %1996 = vst [vmem:[%s1995] ss:$4 sm:$0xff] %v1872
  %v1997 = vld.sshfl [vmem:[#allocation1] sm:$0xff pattern:$0x73625140]
  %v1998 = vld.sshfl [vmem:[#allocation1 + $0x20] sm:$0xff pattern:$0x73625140]
  %1999 = vst [vmem:[#allocation1] ss:$4 sm:$0xff] %v1873
  %2000 = vst [vmem:[%s1989] ss:$4 sm:$0xff] %v1874
  %2001 = vst [vmem:[%s1991] ss:$4 sm:$0xff] %v1875
  %2002 = vst [vmem:[%s1993] ss:$4 sm:$0xff] %v1876
  %2003 = vst [vmem:[%s1995] ss:$4 sm:$0xff] %v1877
  %v2004 = vld.sshfl [vmem:[#allocation1] sm:$0xff pattern:$0x73625140]
  %v2005 = vld.sshfl [vmem:[#allocation1 + $0x20] sm:$0xff pattern:$0x73625140]
  %2006 = vst [vmem:[#allocation1] ss:$4 sm:$0xff] %v1878
  %2007 = vst [vmem:[%s1989] ss:$4 sm:$0xff] %v1879
  %2008 = vst [vmem:[%s1991] ss:$4 sm:$0xff] %v1880
  %2009 = vst [vmem:[%s1993] ss:$4 sm:$0xff] %v1881
  %2010 = vst [vmem:[%s1995] ss:$4 sm:$0xff] %v1882
  %v2011 = vld.sshfl [vmem:[#allocation1] sm:$0xff pattern:$0x73625140]
  %v2012 = vld.sshfl [vmem:[#allocation1 + $0x20] sm:$0xff pattern:$0x73625140]
  %2013 = vst [vmem:[#allocation1] ss:$4 sm:$0xff] %v1883
  %2014 = vst [vmem:[%s1989] ss:$4 sm:$0xff] %v1884
  %2015 = vst [vmem:[%s1991] ss:$4 sm:$0xff] %v1885
  %2016 = vst [vmem:[%s1993] ss:$4 sm:$0xff] %v1886
  %2017 = vst [vmem:[%s1995] ss:$4 sm:$0xff] %v1887
  %v2018 = vld.sshfl [vmem:[#allocation1] sm:$0xff pattern:$0x73625140]
  %v2019 = vld.sshfl [vmem:[#allocation1 + $0x20] sm:$0xff pattern:$0x73625140]
  %2020 = vst [vmem:[#allocation1] ss:$4 sm:$0xff] %v1888
  %2021 = vst [vmem:[%s1989] ss:$4 sm:$0xff] %v1889
  %2022 = vst [vmem:[%s1991] ss:$4 sm:$0xff] %v1890
  %2023 = vst [vmem:[%s1993] ss:$4 sm:$0xff] %v1891
  %2024 = vst [vmem:[%s1995] ss:$4 sm:$0xff] %v1892
  %v2025 = vld.sshfl [vmem:[#allocation1] sm:$0xff pattern:$0x73625140]
  %v2026 = vld.sshfl [vmem:[#allocation1 + $0x20] sm:$0xff pattern:$0x73625140]
  %2027 = vst [vmem:[#allocation1] ss:$4 sm:$0xff] %v1893
  %2028 = vst [vmem:[%s1989] ss:$4 sm:$0xff] %v1894
  %2029 = vst [vmem:[%s1991] ss:$4 sm:$0xff] %v1895
  %2030 = vst [vmem:[%s1993] ss:$4 sm:$0xff] %v1896
  %2031 = vst [vmem:[%s1995] ss:$4 sm:$0xff] %v1897
  %v2032 = vld.sshfl [vmem:[#allocation1] sm:$0xff pattern:$0x73625140]
  %v2033 = vld.sshfl [vmem:[#allocation1 + $0x20] sm:$0xff pattern:$0x73625140]
  %2034 = vst [vmem:[#allocation1] ss:$4 sm:$0xff] %v1898
  %2035 = vst [vmem:[%s1989] ss:$4 sm:$0xff] %v1899
  %2036 = vst [vmem:[%s1991] ss:$4 sm:$0xff] %v1900
  %2037 = vst [vmem:[%s1993] ss:$4 sm:$0xff] %v1901
  %2038 = vst [vmem:[%s1995] ss:$4 sm:$0xff] %v1902
  %v2039 = vld.sshfl [vmem:[#allocation1] sm:$0xff pattern:$0x73625140]
  %v2040 = vld.sshfl [vmem:[#allocation1 + $0x20] sm:$0xff pattern:$0x73625140]
  %2041 = vst [vmem:[#allocation1] ss:$4 sm:$0xff] %v1903
  %2042 = vst [vmem:[%s1989] ss:$4 sm:$0xff] %v1904
  %2043 = vst [vmem:[%s1991] ss:$4 sm:$0xff] %v1905
  %2044 = vst [vmem:[%s1993] ss:$4 sm:$0xff] %v1906
  %2045 = vst [vmem:[%s1995] ss:$4 sm:$0xff] %v1907
  %v2046 = vld.sshfl [vmem:[#allocation1] sm:$0xff pattern:$0x73625140]
  %v2047 = vld.sshfl [vmem:[#allocation1 + $0x20] sm:$0xff pattern:$0x73625140]
  %vm2064 = vcmask 326656
  %v2065 = vsel %vm2064, %v1997, 0.0
  %v2066 = vsel %vm2064, %v2004, 0.0
  %v2067 = vadd.f32 %v2065, %v2066
  %v2068 = vsel %vm2064, %v2011, 0.0
  %v2069 = vadd.f32 %v2067, %v2068
  %v2070 = vsel %vm2064, %v2018, 0.0
  %v2071 = vadd.f32 %v2069, %v2070
  %v2072 = vsel %vm2064, %v2025, 0.0
  %v2073 = vadd.f32 %v2071, %v2072
  %v2074 = vsel %vm2064, %v2032, 0.0
  %v2075 = vadd.f32 %v2073, %v2074
  %v2076 = vsel %vm2064, %v2039, 0.0
  %v2077 = vadd.f32 %v2075, %v2076
  %v2078 = vsel %vm2064, %v2046, 0.0
  %v2079 = vadd.f32 %v2077, %v2078
  %vm2080 = vcmask 320512
  %v2081 = vsel %vm2080, %v1998, 0.0
  %v2082 = vsel %vm2080, %v2005, 0.0
  %v2083 = vadd.f32 %v2081, %v2082
  %v2084 = vsel %vm2080, %v2012, 0.0
  %v2085 = vadd.f32 %v2083, %v2084
  %v2086 = vsel %vm2080, %v2019, 0.0
  %v2087 = vadd.f32 %v2085, %v2086
  %v2088 = vsel %vm2080, %v2026, 0.0
  %v2089 = vadd.f32 %v2087, %v2088
  %v2090 = vsel %vm2080, %v2033, 0.0
  %v2091 = vadd.f32 %v2089, %v2090
  %v2092 = vsel %vm2080, %v2040, 0.0
  %v2093 = vadd.f32 %v2091, %v2092
  %v2094 = vsel %vm2080, %v2047, 0.0
  %v2095 = vadd.f32 %v2093, %v2094
  %2136 = vst [vmem:[#allocation1] ss:$4 sm:$0xff] %v1908
  %s2137 = scalar_lea.vmem [#allocation1], 1
  %2138 = vst [vmem:[%s2137] ss:$4 sm:$0xff] %v1909
  %s2139 = scalar_lea.vmem [#allocation1], 2
  %2140 = vst [vmem:[%s2139] ss:$4 sm:$0xff] %v1910
  %s2141 = scalar_lea.vmem [#allocation1], 3
  %2142 = vst [vmem:[%s2141] ss:$4 sm:$0xff] %v1911
  %s2143 = scalar_lea.vmem [#allocation1], 32
  %2144 = vst [vmem:[%s2143] ss:$4 sm:$0xff] %v1912
  %v2145 = vld.sshfl [vmem:[#allocation1] sm:$0xff pattern:$0x73625140]
  %v2146 = vld.sshfl [vmem:[#allocation1 + $0x20] sm:$0xff pattern:$0x73625140]
  %2147 = vst [vmem:[#allocation1] ss:$4 sm:$0xff] %v1913
  %2148 = vst [vmem:[%s2137] ss:$4 sm:$0xff] %v1914
  %2149 = vst [vmem:[%s2139] ss:$4 sm:$0xff] %v1915
  %2150 = vst [vmem:[%s2141] ss:$4 sm:$0xff] %v1916
  %2151 = vst [vmem:[%s2143] ss:$4 sm:$0xff] %v1917
  %v2152 = vld.sshfl [vmem:[#allocation1] sm:$0xff pattern:$0x73625140]
  %v2153 = vld.sshfl [vmem:[#allocation1 + $0x20] sm:$0xff pattern:$0x73625140]
  %2154 = vst [vmem:[#allocation1] ss:$4 sm:$0xff] %v1918
  %2155 = vst [vmem:[%s2137] ss:$4 sm:$0xff] %v1919
  %2156 = vst [vmem:[%s2139] ss:$4 sm:$0xff] %v1920
  %2157 = vst [vmem:[%s2141] ss:$4 sm:$0xff] %v1921
  %2158 = vst [vmem:[%s2143] ss:$4 sm:$0xff] %v1922
  %v2159 = vld.sshfl [vmem:[#allocation1] sm:$0xff pattern:$0x73625140]
  %v2160 = vld.sshfl [vmem:[#allocation1 + $0x20] sm:$0xff pattern:$0x73625140]
  %2161 = vst [vmem:[#allocation1] ss:$4 sm:$0xff] %v1923
  %2162 = vst [vmem:[%s2137] ss:$4 sm:$0xff] %v1924
  %2163 = vst [vmem:[%s2139] ss:$4 sm:$0xff] %v1925
  %2164 = vst [vmem:[%s2141] ss:$4 sm:$0xff] %v1926
  %2165 = vst [vmem:[%s2143] ss:$4 sm:$0xff] %v1927
  %v2166 = vld.sshfl [vmem:[#allocation1] sm:$0xff pattern:$0x73625140]
  %v2167 = vld.sshfl [vmem:[#allocation1 + $0x20] sm:$0xff pattern:$0x73625140]
  %2168 = vst [vmem:[#allocation1] ss:$4 sm:$0xff] %v1928
  %2169 = vst [vmem:[%s2137] ss:$4 sm:$0xff] %v1929
  %2170 = vst [vmem:[%s2139] ss:$4 sm:$0xff] %v1930
  %2171 = vst [vmem:[%s2141] ss:$4 sm:$0xff] %v1931
  %2172 = vst [vmem:[%s2143] ss:$4 sm:$0xff] %v1932
  %v2173 = vld.sshfl [vmem:[#allocation1] sm:$0xff pattern:$0x73625140]
  %v2174 = vld.sshfl [vmem:[#allocation1 + $0x20] sm:$0xff pattern:$0x73625140]
  %2175 = vst [vmem:[#allocation1] ss:$4 sm:$0xff] %v1933
  %2176 = vst [vmem:[%s2137] ss:$4 sm:$0xff] %v1934
  %2177 = vst [vmem:[%s2139] ss:$4 sm:$0xff] %v1935
  %2178 = vst [vmem:[%s2141] ss:$4 sm:$0xff] %v1936
  %2179 = vst [vmem:[%s2143] ss:$4 sm:$0xff] %v1937
  %v2180 = vld.sshfl [vmem:[#allocation1] sm:$0xff pattern:$0x73625140]
  %v2181 = vld.sshfl [vmem:[#allocation1 + $0x20] sm:$0xff pattern:$0x73625140]
  %2182 = vst [vmem:[#allocation1] ss:$4 sm:$0xff] %v1938
  %2183 = vst [vmem:[%s2137] ss:$4 sm:$0xff] %v1939
  %2184 = vst [vmem:[%s2139] ss:$4 sm:$0xff] %v1940
  %2185 = vst [vmem:[%s2141] ss:$4 sm:$0xff] %v1941
  %2186 = vst [vmem:[%s2143] ss:$4 sm:$0xff] %v1942
  %v2187 = vld.sshfl [vmem:[#allocation1] sm:$0xff pattern:$0x73625140]
  %v2188 = vld.sshfl [vmem:[#allocation1 + $0x20] sm:$0xff pattern:$0x73625140]
  %2189 = vst [vmem:[#allocation1] ss:$4 sm:$0xff] %v1943
  %2190 = vst [vmem:[%s2137] ss:$4 sm:$0xff] %v1944
  %2191 = vst [vmem:[%s2139] ss:$4 sm:$0xff] %v1945
  %2192 = vst [vmem:[%s2141] ss:$4 sm:$0xff] %v1946
  %2193 = vst [vmem:[%s2143] ss:$4 sm:$0xff] %v1947
  %v2194 = vld.sshfl [vmem:[#allocation1] sm:$0xff pattern:$0x73625140]
  %v2195 = vld.sshfl [vmem:[#allocation1 + $0x20] sm:$0xff pattern:$0x73625140]
  %v2212 = vsel %vm2064, %v2145, 0.0
  %v2213 = vsel %vm2064, %v2152, 0.0
  %v2214 = vadd.f32 %v2212, %v2213
  %v2215 = vsel %vm2064, %v2159, 0.0
  %v2216 = vadd.f32 %v2214, %v2215
  %v2217 = vsel %vm2064, %v2166, 0.0
  %v2218 = vadd.f32 %v2216, %v2217
  %v2219 = vsel %vm2064, %v2173, 0.0
  %v2220 = vadd.f32 %v2218, %v2219
  %v2221 = vsel %vm2064, %v2180, 0.0
  %v2222 = vadd.f32 %v2220, %v2221
  %v2223 = vsel %vm2064, %v2187, 0.0
  %v2224 = vadd.f32 %v2222, %v2223
  %v2225 = vsel %vm2064, %v2194, 0.0
  %v2226 = vadd.f32 %v2224, %v2225
  %v2227 = vsel %vm2080, %v2146, 0.0
  %v2228 = vsel %vm2080, %v2153, 0.0
  %v2229 = vadd.f32 %v2227, %v2228
  %v2230 = vsel %vm2080, %v2160, 0.0
  %v2231 = vadd.f32 %v2229, %v2230
  %v2232 = vsel %vm2080, %v2167, 0.0
  %v2233 = vadd.f32 %v2231, %v2232
  %v2234 = vsel %vm2080, %v2174, 0.0
  %v2235 = vadd.f32 %v2233, %v2234
  %v2236 = vsel %vm2080, %v2181, 0.0
  %v2237 = vadd.f32 %v2235, %v2236
  %v2238 = vsel %vm2080, %v2188, 0.0
  %v2239 = vadd.f32 %v2237, %v2238
  %v2240 = vsel %vm2080, %v2195, 0.0
  %v2241 = vadd.f32 %v2239, %v2240
  %v2242 = vsel %vm2064, %v2079, 0.0
  %v2243 = vsel %vm2080, %v2095, 0.0
  %v2244 = vadd.f32 %v2242, %v2243
  %v2245 = vrot.slane %v2244, 4
  %v2246 = vadd.f32 %v2244, %v2245
  %v2247 = vrot.slane %v2246, 2
  %v2248 = vadd.f32 %v2246, %v2247
  %v2249 = vrot.slane %v2248, 1
  %v2250 = vadd.f32 %v2248, %v2249
  %v2251 = vsel %vm2064, %v2226, 0.0
  %v2252 = vsel %vm2080, %v2241, 0.0
  %v2253 = vadd.f32 %v2251, %v2252
  %v2254 = vrot.slane %v2253, 4
  %v2255 = vadd.f32 %v2253, %v2254
  %v2256 = vrot.slane %v2255, 2
  %v2257 = vadd.f32 %v2255, %v2256
  %v2258 = vrot.slane %v2257, 1
  %v2259 = vadd.f32 %v2257, %v2258
  %v2260 = vrcp.pop 80.0
  %v2261 = vmul.f32 80.0, %v2260
  %v2262 = vsub.f32 1.0, %v2261
  %v2263 = vmul.f32 %v2260, %v2262
  %v2264 = vadd.f32 %v2260, %v2263
  %vm2265 = vweird.f32 %v2260
  %v2266 = vsel %vm2265, %v2260, %v2264
  %v2267 = vmul.f32 %v2250, %v2266
  %v2268 = vmul.f32 %v2259, %v2266
  %v2269 = vmul.f32 %v2267, %v2267
  %v2270 = vsub.f32 %v2268, %v2269
  %v2271 = vmax.f32 %v2270, 0.0
  %v2273 = vrot.slane %v2267, 2
  %v2274 = vrot.slane %v2267, 4
  %v2275 = vrot.slane %v2267, 6
  %v2279 = vsub.f32 %v1868, %v2267
  %v2280 = vsub.f32 %v1869, %v2273
  %v2281 = vsub.f32 %v1870, %v2274
  %v2282 = vsub.f32 %v1871, %v2275
  %v2283 = vsub.f32 %v1872, %v2267
  %v2284 = vsub.f32 %v1873, %v2267
  %v2285 = vsub.f32 %v1874, %v2273
  %v2286 = vsub.f32 %v1875, %v2274
  %v2287 = vsub.f32 %v1876, %v2275
  %v2288 = vsub.f32 %v1877, %v2267
  %v2289 = vsub.f32 %v1878, %v2267
  %v2290 = vsub.f32 %v1879, %v2273
  %v2291 = vsub.f32 %v1880, %v2274
  %v2292 = vsub.f32 %v1881, %v2275
  %v2293 = vsub.f32 %v1882, %v2267
  %v2294 = vsub.f32 %v1883, %v2267
  %v2295 = vsub.f32 %v1884, %v2273
  %v2296 = vsub.f32 %v1885, %v2274
  %v2297 = vsub.f32 %v1886, %v2275
  %v2298 = vsub.f32 %v1887, %v2267
  %v2299 = vsub.f32 %v1888, %v2267
  %v2300 = vsub.f32 %v1889, %v2273
  %v2301 = vsub.f32 %v1890, %v2274
  %v2302 = vsub.f32 %v1891, %v2275
  %v2303 = vsub.f32 %v1892, %v2267
  %v2304 = vsub.f32 %v1893, %v2267
  %v2305 = vsub.f32 %v1894, %v2273
  %v2306 = vsub.f32 %v1895, %v2274
  %v2307 = vsub.f32 %v1896, %v2275
  %v2308 = vsub.f32 %v1897, %v2267
  %v2309 = vsub.f32 %v1898, %v2267
  %v2310 = vsub.f32 %v1899, %v2273
  %v2311 = vsub.f32 %v1900, %v2274
  %v2312 = vsub.f32 %v1901, %v2275
  %v2313 = vsub.f32 %v1902, %v2267
  %v2314 = vsub.f32 %v1903, %v2267
  %v2315 = vsub.f32 %v1904, %v2273
  %v2316 = vsub.f32 %v1905, %v2274
  %v2317 = vsub.f32 %v1906, %v2275
  %v2318 = vsub.f32 %v1907, %v2267
  %v2319 = vadd.f32 %v2271, 1e-05
  %v2320 = vrsqrt.pop %v2319
  %v2321 = vmul.f32 %v2320, %v2319
  %v2322 = vmul.f32 %v2321, %v2320
  %v2323 = vmul.f32 0.5, %v2322
  %v2324 = vsub.f32 1.5, %v2323
  %v2325 = vmul.f32 %v2320, %v2324
  %vm2326 = vweird.f32 %v2319
  %vm2327 = vweird.f32 %v2320
  %vm2328 = vmor %vm2326, %vm2327
  %v2329 = vsel %vm2328, %v2320, %v2325
  %v2330 = vmul.f32 %v24, %v2329
  %v2331 = vperm.slane %v2330, 2
  %v2333 = vrot.slane %v2331, 2
  %v2334 = vrot.slane %v2331, 4
  %v2335 = vrot.slane %v2331, 6
  %v2339 = vmul.f32 %v2279, %v2331
  %v2340 = vmul.f32 %v2280, %v2333
  %v2341 = vmul.f32 %v2281, %v2334
  %v2342 = vmul.f32 %v2282, %v2335
  %v2343 = vmul.f32 %v2283, %v2331
  %v2344 = vmul.f32 %v2284, %v2331
  %v2345 = vmul.f32 %v2285, %v2333
  %v2346 = vmul.f32 %v2286, %v2334
  %v2347 = vmul.f32 %v2287, %v2335
  %v2348 = vmul.f32 %v2288, %v2331
  %v2349 = vmul.f32 %v2289, %v2331
  %v2350 = vmul.f32 %v2290, %v2333
  %v2351 = vmul.f32 %v2291, %v2334
  %v2352 = vmul.f32 %v2292, %v2335
  %v2353 = vmul.f32 %v2293, %v2331
  %v2354 = vmul.f32 %v2294, %v2331
  %v2355 = vmul.f32 %v2295, %v2333
  %v2356 = vmul.f32 %v2296, %v2334
  %v2357 = vmul.f32 %v2297, %v2335
  %v2358 = vmul.f32 %v2298, %v2331
  %v2359 = vmul.f32 %v2299, %v2331
  %v2360 = vmul.f32 %v2300, %v2333
  %v2361 = vmul.f32 %v2301, %v2334
  %v2362 = vmul.f32 %v2302, %v2335
  %v2363 = vmul.f32 %v2303, %v2331
  %v2364 = vmul.f32 %v2304, %v2331
  %v2365 = vmul.f32 %v2305, %v2333
  %v2366 = vmul.f32 %v2306, %v2334
  %v2367 = vmul.f32 %v2307, %v2335
  %v2368 = vmul.f32 %v2308, %v2331
  %v2369 = vmul.f32 %v2309, %v2331
  %v2370 = vmul.f32 %v2310, %v2333
  %v2371 = vmul.f32 %v2311, %v2334
  %v2372 = vmul.f32 %v2312, %v2335
  %v2373 = vmul.f32 %v2313, %v2331
  %v2374 = vmul.f32 %v2314, %v2331
  %v2375 = vmul.f32 %v2315, %v2333
  %v2376 = vmul.f32 %v2316, %v2334
  %v2377 = vmul.f32 %v2317, %v2335
  %v2378 = vmul.f32 %v2318, %v2331
  %v2379 = vperm.slane %v24, 3
  %v2381 = vrot.slane %v2379, 2
  %v2382 = vrot.slane %v2379, 4
  %v2383 = vrot.slane %v2379, 6
  %v2387 = vadd.f32 %v2339, %v2379
  %v2388 = vadd.f32 %v2340, %v2381
  %v2389 = vadd.f32 %v2341, %v2382
  %v2390 = vadd.f32 %v2342, %v2383
  %v2391 = vadd.f32 %v2343, %v2379
  %v2392 = vadd.f32 %v2344, %v2379
  %v2393 = vadd.f32 %v2345, %v2381
  %v2394 = vadd.f32 %v2346, %v2382
  %v2395 = vadd.f32 %v2347, %v2383
  %v2396 = vadd.f32 %v2348, %v2379
  %v2397 = vadd.f32 %v2349, %v2379
  %v2398 = vadd.f32 %v2350, %v2381
  %v2399 = vadd.f32 %v2351, %v2382
  %v2400 = vadd.f32 %v2352, %v2383
  %v2401 = vadd.f32 %v2353, %v2379
  %v2402 = vadd.f32 %v2354, %v2379
  %v2403 = vadd.f32 %v2355, %v2381
  %v2404 = vadd.f32 %v2356, %v2382
  %v2405 = vadd.f32 %v2357, %v2383
  %v2406 = vadd.f32 %v2358, %v2379
  %v2407 = vadd.f32 %v2359, %v2379
  %v2408 = vadd.f32 %v2360, %v2381
  %v2409 = vadd.f32 %v2361, %v2382
  %v2410 = vadd.f32 %v2362, %v2383
  %v2411 = vadd.f32 %v2363, %v2379
  %v2412 = vadd.f32 %v2364, %v2379
  %v2413 = vadd.f32 %v2365, %v2381
  %v2414 = vadd.f32 %v2366, %v2382
  %v2415 = vadd.f32 %v2367, %v2383
  %v2416 = vadd.f32 %v2368, %v2379
  %v2417 = vadd.f32 %v2369, %v2379
  %v2418 = vadd.f32 %v2370, %v2381
  %v2419 = vadd.f32 %v2371, %v2382
  %v2420 = vadd.f32 %v2372, %v2383
  %v2421 = vadd.f32 %v2373, %v2379
  %v2422 = vadd.f32 %v2374, %v2379
  %v2423 = vadd.f32 %v2375, %v2381
  %v2424 = vadd.f32 %v2376, %v2382
  %v2425 = vadd.f32 %v2377, %v2383
  %v2426 = vadd.f32 %v2378, %v2379
  %v2427 = vmax.f32 %v2387, 0.0
  %v2428 = vmax.f32 %v2388, 0.0
  %v2429 = vmax.f32 %v2389, 0.0
  %v2430 = vmax.f32 %v2390, 0.0
  %v2431 = vmax.f32 %v2391, 0.0
  %v2432 = vmax.f32 %v2392, 0.0
  %v2433 = vmax.f32 %v2393, 0.0
  %v2434 = vmax.f32 %v2394, 0.0
  %v2435 = vmax.f32 %v2395, 0.0
  %v2436 = vmax.f32 %v2396, 0.0
  %v2437 = vmax.f32 %v2397, 0.0
  %v2438 = vmax.f32 %v2398, 0.0
  %v2439 = vmax.f32 %v2399, 0.0
  %v2440 = vmax.f32 %v2400, 0.0
  %v2441 = vmax.f32 %v2401, 0.0
  %v2442 = vmax.f32 %v2402, 0.0
  %v2443 = vmax.f32 %v2403, 0.0
  %v2444 = vmax.f32 %v2404, 0.0
  %v2445 = vmax.f32 %v2405, 0.0
  %v2446 = vmax.f32 %v2406, 0.0
  %v2447 = vmax.f32 %v2407, 0.0
  %v2448 = vmax.f32 %v2408, 0.0
  %v2449 = vmax.f32 %v2409, 0.0
  %v2450 = vmax.f32 %v2410, 0.0
  %v2451 = vmax.f32 %v2411, 0.0
  %v2452 = vmax.f32 %v2412, 0.0
  %v2453 = vmax.f32 %v2413, 0.0
  %v2454 = vmax.f32 %v2414, 0.0
  %v2455 = vmax.f32 %v2415, 0.0
  %v2456 = vmax.f32 %v2416, 0.0
  %v2457 = vmax.f32 %v2417, 0.0
  %v2458 = vmax.f32 %v2418, 0.0
  %v2459 = vmax.f32 %v2419, 0.0
  %v2460 = vmax.f32 %v2420, 0.0
  %v2461 = vmax.f32 %v2421, 0.0
  %v2462 = vmax.f32 %v2422, 0.0
  %v2463 = vmax.f32 %v2423, 0.0
  %v2464 = vmax.f32 %v2424, 0.0
  %v2465 = vmax.f32 %v2425, 0.0
  %v2466 = vmax.f32 %v2426, 0.0
  %2507 = vst [vmem:[#allocation1] ss:$4 sm:$0xff] %v2427
  %s2508 = scalar_lea.vmem [#allocation1], 1
  %2509 = vst [vmem:[%s2508] ss:$4 sm:$0xff] %v2428
  %s2510 = scalar_lea.vmem [#allocation1], 2
  %2511 = vst [vmem:[%s2510] ss:$4 sm:$0xff] %v2429
  %s2512 = scalar_lea.vmem [#allocation1], 3
  %2513 = vst [vmem:[%s2512] ss:$4 sm:$0xff] %v2430
  %s2514 = scalar_lea.vmem [#allocation1], 32
  %2515 = vst [vmem:[%s2514] ss:$4 sm:$0xff] %v2431
  %v2516 = vld.sshfl [vmem:[#allocation1] sm:$0xff pattern:$0x73625140]
  %v2517 = vld.sshfl [vmem:[#allocation1 + $0x20] sm:$0xff pattern:$0x73625140]
  %2518 = vst [vmem:[#allocation1] ss:$4 sm:$0xff] %v2432
  %2519 = vst [vmem:[%s2508] ss:$4 sm:$0xff] %v2433
  %2520 = vst [vmem:[%s2510] ss:$4 sm:$0xff] %v2434
  %2521 = vst [vmem:[%s2512] ss:$4 sm:$0xff] %v2435
  %2522 = vst [vmem:[%s2514] ss:$4 sm:$0xff] %v2436
  %v2523 = vld.sshfl [vmem:[#allocation1] sm:$0xff pattern:$0x73625140]
  %v2524 = vld.sshfl [vmem:[#allocation1 + $0x20] sm:$0xff pattern:$0x73625140]
  %2525 = vst [vmem:[#allocation1] ss:$4 sm:$0xff] %v2437
  %2526 = vst [vmem:[%s2508] ss:$4 sm:$0xff] %v2438
  %2527 = vst [vmem:[%s2510] ss:$4 sm:$0xff] %v2439
  %2528 = vst [vmem:[%s2512] ss:$4 sm:$0xff] %v2440
  %2529 = vst [vmem:[%s2514] ss:$4 sm:$0xff] %v2441
  %v2530 = vld.sshfl [vmem:[#allocation1] sm:$0xff pattern:$0x73625140]
  %v2531 = vld.sshfl [vmem:[#allocation1 + $0x20] sm:$0xff pattern:$0x73625140]
  %2532 = vst [vmem:[#allocation1] ss:$4 sm:$0xff] %v2442
  %2533 = vst [vmem:[%s2508] ss:$4 sm:$0xff] %v2443
  %2534 = vst [vmem:[%s2510] ss:$4 sm:$0xff] %v2444
  %2535 = vst [vmem:[%s2512] ss:$4 sm:$0xff] %v2445
  %2536 = vst [vmem:[%s2514] ss:$4 sm:$0xff] %v2446
  %v2537 = vld.sshfl [vmem:[#allocation1] sm:$0xff pattern:$0x73625140]
  %v2538 = vld.sshfl [vmem:[#allocation1 + $0x20] sm:$0xff pattern:$0x73625140]
  %2539 = vst [vmem:[#allocation1] ss:$4 sm:$0xff] %v2447
  %2540 = vst [vmem:[%s2508] ss:$4 sm:$0xff] %v2448
  %2541 = vst [vmem:[%s2510] ss:$4 sm:$0xff] %v2449
  %2542 = vst [vmem:[%s2512] ss:$4 sm:$0xff] %v2450
  %2543 = vst [vmem:[%s2514] ss:$4 sm:$0xff] %v2451
  %v2544 = vld.sshfl [vmem:[#allocation1] sm:$0xff pattern:$0x73625140]
  %v2545 = vld.sshfl [vmem:[#allocation1 + $0x20] sm:$0xff pattern:$0x73625140]
  %2546 = vst [vmem:[#allocation1] ss:$4 sm:$0xff] %v2452
  %2547 = vst [vmem:[%s2508] ss:$4 sm:$0xff] %v2453
  %2548 = vst [vmem:[%s2510] ss:$4 sm:$0xff] %v2454
  %2549 = vst [vmem:[%s2512] ss:$4 sm:$0xff] %v2455
  %2550 = vst [vmem:[%s2514] ss:$4 sm:$0xff] %v2456
  %v2551 = vld.sshfl [vmem:[#allocation1] sm:$0xff pattern:$0x73625140]
  %v2552 = vld.sshfl [vmem:[#allocation1 + $0x20] sm:$0xff pattern:$0x73625140]
  %2553 = vst [vmem:[#allocation1] ss:$4 sm:$0xff] %v2457
  %2554 = vst [vmem:[%s2508] ss:$4 sm:$0xff] %v2458
  %2555 = vst [vmem:[%s2510] ss:$4 sm:$0xff] %v2459
  %2556 = vst [vmem:[%s2512] ss:$4 sm:$0xff] %v2460
  %2557 = vst [vmem:[%s2514] ss:$4 sm:$0xff] %v2461
  %v2558 = vld.sshfl [vmem:[#allocation1] sm:$0xff pattern:$0x73625140]
  %v2559 = vld.sshfl [vmem:[#allocation1 + $0x20] sm:$0xff pattern:$0x73625140]
  %2560 = vst [vmem:[#allocation1] ss:$4 sm:$0xff] %v2462
  %2561 = vst [vmem:[%s2508] ss:$4 sm:$0xff] %v2463
  %2562 = vst [vmem:[%s2510] ss:$4 sm:$0xff] %v2464
  %2563 = vst [vmem:[%s2512] ss:$4 sm:$0xff] %v2465
  %2564 = vst [vmem:[%s2514] ss:$4 sm:$0xff] %v2466
  %v2565 = vld.sshfl [vmem:[#allocation1] sm:$0xff pattern:$0x73625140]
  %v2566 = vld.sshfl [vmem:[#allocation1 + $0x20] sm:$0xff pattern:$0x73625140]
  %v2583 = vpack.c.bf16 %v2516, %v2516
  %v2584 = vpack.c.bf16 %v2517, %v2517
  %v2585 = vpack.c.bf16 %v2523, %v2523
  %v2586 = vpack.c.bf16 %v2524, %v2524
  %v2587 = vpack.c.bf16 %v2530, %v2530
  %v2588 = vpack.c.bf16 %v2531, %v2531
  %v2589 = vpack.c.bf16 %v2537, %v2537
  %v2590 = vpack.c.bf16 %v2538, %v2538
  %v2591 = vpack.c.bf16 %v2544, %v2544
  %v2592 = vpack.c.bf16 %v2545, %v2545
  %v2593 = vpack.c.bf16 %v2551, %v2551
  %v2594 = vpack.c.bf16 %v2552, %v2552
  %v2595 = vpack.c.bf16 %v2558, %v2558
  %v2596 = vpack.c.bf16 %v2559, %v2559
  %v2597 = vpack.c.bf16 %v2565, %v2565
  %v2598 = vpack.c.bf16 %v2566, %v2566
  %v2599 = vld [vmem:[%s1] sm:$0xf]
  %v2600 = vld [vmem:[%s1 + $0x4] sm:$0xf]
  %v2601 = vld [vmem:[%s1 + $0x8] sm:$0xf]
  %v2602 = vld [vmem:[%s1 + $0xc] sm:$0xf]
  %v2603 = vld [vmem:[%s1 + $0x10] sm:$0xf]
  %v2609 = vunpack.c.l.b16 %v2599
  %v2610 = vunpack.c.l.b16 %v2600
  %v2611 = vunpack.c.l.b16 %v2601
  %v2612 = vunpack.c.l.b16 %v2602
  %v2613 = vunpack.c.l.b16 %v2603
  %v2614 = vpack.c.b16 %v2610, %v2609
  %v2615 = vpack.c.b16 %v2612, %v2611
  %v2616 = vpack.c.b16 %v2613, %v2613
  %v2619 = vunpack.c.l.b16 %v2583
  %v2620 = vunpack.c.l.b16 %v2584
  %v2621 = vpack.c.b16 %v2620, %v2619
  %v2623 = vsel %vm2064, %v2614, 0
  %v2626 = vsel %vm2064, %v2615, 0
  %v2629 = vsel %vm2064, %v2616, 0
  %v2632 = vsel %vm2064, %v2621, 0
  %2634 = vmatpush.bf16.xpose.msra.mxu0 0
  %2635 = vmatpush.bf16.xpose.msra.mxu0 0
  %2636 = vmatpush.bf16.xpose.msra.mxu0 0
  %2637 = vmatpush.bf16.xpose.msra.mxu0 0
  %2638 = vmatpush.bf16.xpose.msra.mxu0 0
  %2639 = vmatpush.bf16.xpose.msra.mxu0 0
  %2640 = vmatpush.bf16.xpose.msra.mxu0 0
  %2641 = vmatpush.bf16.xpose.msra.mxu0 %v2632
  %2642 = vmatmul.bf16.gmra.mxu0 %v2623
  %v2643 = vpop.f32.mrf.mxu0
  %v2644 = vadd.f32 0.0, %v2643
  %v2645 = vpop.f32.mrf.mxu0
  %v2646 = vadd.f32 0.0, %v2645
  %2647 = vmatmul.bf16.gmra.mxu0 %v2626
  %v2648 = vpop.f32.mrf.mxu0
  %v2649 = vadd.f32 0.0, %v2648
  %v2650 = vpop.f32.mrf.mxu0
  %v2651 = vadd.f32 0.0, %v2650
  %2652 = vmatmul.bf16.gmra.mxu0 %v2629
  %v2653 = vpop.f32.mrf.mxu0
  %v2654 = vadd.f32 0.0, %v2653
  %v2655 = vpop.f32.mrf.mxu0
  %2656 = vdwg.mxu0
  %v2659 = vunpack.c.l.b16 %v2585
  %v2660 = vunpack.c.l.b16 %v2586
  %v2661 = vpack.c.b16 %v2660, %v2659
  %v2663 = vsel %vm2064, %v2661, 0
  %2665 = vmatpush.bf16.xpose.msra.mxu0 0
  %2666 = vmatpush.bf16.xpose.msra.mxu0 0
  %2667 = vmatpush.bf16.xpose.msra.mxu0 0
  %2668 = vmatpush.bf16.xpose.msra.mxu0 0
  %2669 = vmatpush.bf16.xpose.msra.mxu0 0
  %2670 = vmatpush.bf16.xpose.msra.mxu0 0
  %2671 = vmatpush.bf16.xpose.msra.mxu0 0
  %2672 = vmatpush.bf16.xpose.msra.mxu0 %v2663
  %2673 = vmatmul.bf16.gmra.mxu0 %v2623
  %v2674 = vpop.f32.mrf.mxu0
  %v2675 = vadd.f32 0.0, %v2674
  %v2676 = vpop.f32.mrf.mxu0
  %v2677 = vadd.f32 0.0, %v2676
  %2678 = vmatmul.bf16.gmra.mxu0 %v2626
  %v2679 = vpop.f32.mrf.mxu0
  %v2680 = vadd.f32 0.0, %v2679
  %v2681 = vpop.f32.mrf.mxu0
  %v2682 = vadd.f32 0.0, %v2681
  %2683 = vmatmul.bf16.gmra.mxu0 %v2629
  %v2684 = vpop.f32.mrf.mxu0
  %v2685 = vadd.f32 0.0, %v2684
  %v2686 = vpop.f32.mrf.mxu0
  %2687 = vdwg.mxu0
  %v2690 = vunpack.c.l.b16 %v2587
  %v2691 = vunpack.c.l.b16 %v2588
  %v2692 = vpack.c.b16 %v2691, %v2690
  %v2694 = vsel %vm2064, %v2692, 0
  %2696 = vmatpush.bf16.xpose.msra.mxu0 0
  %2697 = vmatpush.bf16.xpose.msra.mxu0 0
  %2698 = vmatpush.bf16.xpose.msra.mxu0 0
  %2699 = vmatpush.bf16.xpose.msra.mxu0 0
  %2700 = vmatpush.bf16.xpose.msra.mxu0 0
  %2701 = vmatpush.bf16.xpose.msra.mxu0 0
  %2702 = vmatpush.bf16.xpose.msra.mxu0 0
  %2703 = vmatpush.bf16.xpose.msra.mxu0 %v2694
  %2704 = vmatmul.bf16.gmra.mxu0 %v2623
  %v2705 = vpop.f32.mrf.mxu0
  %v2706 = vadd.f32 0.0, %v2705
  %v2707 = vpop.f32.mrf.mxu0
  %v2708 = vadd.f32 0.0, %v2707
  %2709 = vmatmul.bf16.gmra.mxu0 %v2626
  %v2710 = vpop.f32.mrf.mxu0
  %v2711 = vadd.f32 0.0, %v2710
  %v2712 = vpop.f32.mrf.mxu0
  %v2713 = vadd.f32 0.0, %v2712
  %2714 = vmatmul.bf16.gmra.mxu0 %v2629
  %v2715 = vpop.f32.mrf.mxu0
  %v2716 = vadd.f32 0.0, %v2715
  %v2717 = vpop.f32.mrf.mxu0
  %2718 = vdwg.mxu0
  %v2721 = vunpack.c.l.b16 %v2589
  %v2722 = vunpack.c.l.b16 %v2590
  %v2723 = vpack.c.b16 %v2722, %v2721
  %v2725 = vsel %vm2064, %v2723, 0
  %2727 = vmatpush.bf16.xpose.msra.mxu0 0
  %2728 = vmatpush.bf16.xpose.msra.mxu0 0
  %2729 = vmatpush.bf16.xpose.msra.mxu0 0
  %2730 = vmatpush.bf16.xpose.msra.mxu0 0
  %2731 = vmatpush.bf16.xpose.msra.mxu0 0
  %2732 = vmatpush.bf16.xpose.msra.mxu0 0
  %2733 = vmatpush.bf16.xpose.msra.mxu0 0
  %2734 = vmatpush.bf16.xpose.msra.mxu0 %v2725
  %2735 = vmatmul.bf16.gmra.mxu0 %v2623
  %v2736 = vpop.f32.mrf.mxu0
  %v2737 = vadd.f32 0.0, %v2736
  %v2738 = vpop.f32.mrf.mxu0
  %v2739 = vadd.f32 0.0, %v2738
  %2740 = vmatmul.bf16.gmra.mxu0 %v2626
  %v2741 = vpop.f32.mrf.mxu0
  %v2742 = vadd.f32 0.0, %v2741
  %v2743 = vpop.f32.mrf.mxu0
  %v2744 = vadd.f32 0.0, %v2743
  %2745 = vmatmul.bf16.gmra.mxu0 %v2629
  %v2746 = vpop.f32.mrf.mxu0
  %v2747 = vadd.f32 0.0, %v2746
  %v2748 = vpop.f32.mrf.mxu0
  %2749 = vdwg.mxu0
  %v2752 = vunpack.c.l.b16 %v2591
  %v2753 = vunpack.c.l.b16 %v2592
  %v2754 = vpack.c.b16 %v2753, %v2752
  %v2756 = vsel %vm2064, %v2754, 0
  %2758 = vmatpush.bf16.xpose.msra.mxu0 0
  %2759 = vmatpush.bf16.xpose.msra.mxu0 0
  %2760 = vmatpush.bf16.xpose.msra.mxu0 0
  %2761 = vmatpush.bf16.xpose.msra.mxu0 0
  %2762 = vmatpush.bf16.xpose.msra.mxu0 0
  %2763 = vmatpush.bf16.xpose.msra.mxu0 0
  %2764 = vmatpush.bf16.xpose.msra.mxu0 0
  %2765 = vmatpush.bf16.xpose.msra.mxu0 %v2756
  %2766 = vmatmul.bf16.gmra.mxu0 %v2623
  %v2767 = vpop.f32.mrf.mxu0
  %v2768 = vadd.f32 0.0, %v2767
  %v2769 = vpop.f32.mrf.mxu0
  %v2770 = vadd.f32 0.0, %v2769
  %2771 = vmatmul.bf16.gmra.mxu0 %v2626
  %v2772 = vpop.f32.mrf.mxu0
  %v2773 = vadd.f32 0.0, %v2772
  %v2774 = vpop.f32.mrf.mxu0
  %v2775 = vadd.f32 0.0, %v2774
  %2776 = vmatmul.bf16.gmra.mxu0 %v2629
  %v2777 = vpop.f32.mrf.mxu0
  %v2778 = vadd.f32 0.0, %v2777
  %v2779 = vpop.f32.mrf.mxu0
  %2780 = vdwg.mxu0
  %v2783 = vunpack.c.l.b16 %v2593
  %v2784 = vunpack.c.l.b16 %v2594
  %v2785 = vpack.c.b16 %v2784, %v2783
  %v2787 = vsel %vm2064, %v2785, 0
  %2789 = vmatpush.bf16.xpose.msra.mxu0 0
  %2790 = vmatpush.bf16.xpose.msra.mxu0 0
  %2791 = vmatpush.bf16.xpose.msra.mxu0 0
  %2792 = vmatpush.bf16.xpose.msra.mxu0 0
  %2793 = vmatpush.bf16.xpose.msra.mxu0 0
  %2794 = vmatpush.bf16.xpose.msra.mxu0 0
  %2795 = vmatpush.bf16.xpose.msra.mxu0 0
  %2796 = vmatpush.bf16.xpose.msra.mxu0 %v2787
  %2797 = vmatmul.bf16.gmra.mxu0 %v2623
  %v2798 = vpop.f32.mrf.mxu0
  %v2799 = vadd.f32 0.0, %v2798
  %v2800 = vpop.f32.mrf.mxu0
  %v2801 = vadd.f32 0.0, %v2800
  %2802 = vmatmul.bf16.gmra.mxu0 %v2626
  %v2803 = vpop.f32.mrf.mxu0
  %v2804 = vadd.f32 0.0, %v2803
  %v2805 = vpop.f32.mrf.mxu0
  %v2806 = vadd.f32 0.0, %v2805
  %2807 = vmatmul.bf16.gmra.mxu0 %v2629
  %v2808 = vpop.f32.mrf.mxu0
  %v2809 = vadd.f32 0.0, %v2808
  %v2810 = vpop.f32.mrf.mxu0
  %2811 = vdwg.mxu0
  %v2814 = vunpack.c.l.b16 %v2595
  %v2815 = vunpack.c.l.b16 %v2596
  %v2816 = vpack.c.b16 %v2815, %v2814
  %v2818 = vsel %vm2064, %v2816, 0
  %2820 = vmatpush.bf16.xpose.msra.mxu0 0
  %2821 = vmatpush.bf16.xpose.msra.mxu0 0
  %2822 = vmatpush.bf16.xpose.msra.mxu0 0
  %2823 = vmatpush.bf16.xpose.msra.mxu0 0
  %2824 = vmatpush.bf16.xpose.msra.mxu0 0
  %2825 = vmatpush.bf16.xpose.msra.mxu0 0
  %2826 = vmatpush.bf16.xpose.msra.mxu0 0
  %2827 = vmatpush.bf16.xpose.msra.mxu0 %v2818
  %2828 = vmatmul.bf16.gmra.mxu0 %v2623
  %v2829 = vpop.f32.mrf.mxu0
  %v2830 = vadd.f32 0.0, %v2829
  %v2831 = vpop.f32.mrf.mxu0
  %v2832 = vadd.f32 0.0, %v2831
  %2833 = vmatmul.bf16.gmra.mxu0 %v2626
  %v2834 = vpop.f32.mrf.mxu0
  %v2835 = vadd.f32 0.0, %v2834
  %v2836 = vpop.f32.mrf.mxu0
  %v2837 = vadd.f32 0.0, %v2836
  %2838 = vmatmul.bf16.gmra.mxu0 %v2629
  %v2839 = vpop.f32.mrf.mxu0
  %v2840 = vadd.f32 0.0, %v2839
  %v2841 = vpop.f32.mrf.mxu0
  %2842 = vdwg.mxu0
  %v2845 = vunpack.c.l.b16 %v2597
  %v2846 = vunpack.c.l.b16 %v2598
  %v2847 = vpack.c.b16 %v2846, %v2845
  %v2849 = vsel %vm2064, %v2847, 0
  %2851 = vmatpush.bf16.xpose.msra.mxu0 0
  %2852 = vmatpush.bf16.xpose.msra.mxu0 0
  %2853 = vmatpush.bf16.xpose.msra.mxu0 0
  %2854 = vmatpush.bf16.xpose.msra.mxu0 0
  %2855 = vmatpush.bf16.xpose.msra.mxu0 0
  %2856 = vmatpush.bf16.xpose.msra.mxu0 0
  %2857 = vmatpush.bf16.xpose.msra.mxu0 0
  %2858 = vmatpush.bf16.xpose.msra.mxu0 %v2849
  %2859 = vmatmul.bf16.gmra.mxu0 %v2623
  %v2860 = vpop.f32.mrf.mxu0
  %v2861 = vadd.f32 0.0, %v2860
  %v2862 = vpop.f32.mrf.mxu0
  %v2863 = vadd.f32 0.0, %v2862
  %2864 = vmatmul.bf16.gmra.mxu0 %v2626
  %v2865 = vpop.f32.mrf.mxu0
  %v2866 = vadd.f32 0.0, %v2865
  %v2867 = vpop.f32.mrf.mxu0
  %v2868 = vadd.f32 0.0, %v2867
  %2869 = vmatmul.bf16.gmra.mxu0 %v2629
  %v2870 = vpop.f32.mrf.mxu0
  %v2871 = vadd.f32 0.0, %v2870
  %v2872 = vpop.f32.mrf.mxu0
  %2873 = vdwg.mxu0
  %v2874 = vpack.c.bf16 %v2644, %v2644
  %v2875 = vpack.c.bf16 %v2646, %v2646
  %v2876 = vpack.c.bf16 %v2649, %v2649
  %v2877 = vpack.c.bf16 %v2651, %v2651
  %v2878 = vpack.c.bf16 %v2654, %v2654
  %v2879 = vpack.c.bf16 %v2675, %v2675
  %v2880 = vpack.c.bf16 %v2677, %v2677
  %v2881 = vpack.c.bf16 %v2680, %v2680
  %v2882 = vpack.c.bf16 %v2682, %v2682
  %v2883 = vpack.c.bf16 %v2685, %v2685
  %v2884 = vpack.c.bf16 %v2706, %v2706
  %v2885 = vpack.c.bf16 %v2708, %v2708
  %v2886 = vpack.c.bf16 %v2711, %v2711
  %v2887 = vpack.c.bf16 %v2713, %v2713
  %v2888 = vpack.c.bf16 %v2716, %v2716
  %v2889 = vpack.c.bf16 %v2737, %v2737
  %v2890 = vpack.c.bf16 %v2739, %v2739
  %v2891 = vpack.c.bf16 %v2742, %v2742
  %v2892 = vpack.c.bf16 %v2744, %v2744
  %v2893 = vpack.c.bf16 %v2747, %v2747
  %v2894 = vpack.c.bf16 %v2768, %v2768
  %v2895 = vpack.c.bf16 %v2770, %v2770
  %v2896 = vpack.c.bf16 %v2773, %v2773
  %v2897 = vpack.c.bf16 %v2775, %v2775
  %v2898 = vpack.c.bf16 %v2778, %v2778
  %v2899 = vpack.c.bf16 %v2799, %v2799
  %v2900 = vpack.c.bf16 %v2801, %v2801
  %v2901 = vpack.c.bf16 %v2804, %v2804
  %v2902 = vpack.c.bf16 %v2806, %v2806
  %v2903 = vpack.c.bf16 %v2809, %v2809
  %v2904 = vpack.c.bf16 %v2830, %v2830
  %v2905 = vpack.c.bf16 %v2832, %v2832
  %v2906 = vpack.c.bf16 %v2835, %v2835
  %v2907 = vpack.c.bf16 %v2837, %v2837
  %v2908 = vpack.c.bf16 %v2840, %v2840
  %v2909 = vpack.c.bf16 %v2861, %v2861
  %v2910 = vpack.c.bf16 %v2863, %v2863
  %v2911 = vpack.c.bf16 %v2866, %v2866
  %v2912 = vpack.c.bf16 %v2868, %v2868
  %v2913 = vpack.c.bf16 %v2871, %v2871
  %v2914 = vld [vmem:[%s4] sm:$0xf]
  %v2915 = vld [vmem:[%s4 + $0x4] sm:$0x1]
  %s2916 = scalar_lea.vmem %s4, 8
  %v2917 = vld [vmem:[%s2916] sm:$0xf]
  %v2918 = vld [vmem:[%s2916 + $0x4] sm:$0x1]
  %2920 = vst [vmem:[#allocation1] sm:$0xff] %v2875
  %2922 = vst [vmem:[#allocation1 + $0x20] sm:$0xff] %v2876
  %s2923 = scalar_lea.vmem [#allocation1], 1
  %v2924 = vld [vmem:[%s2923] ss:$4 sm:$0xff]
  %s2925 = scalar_lea.vmem [#allocation1], 2
  %v2926 = vld [vmem:[%s2925] ss:$4 sm:$0xff]
  %s2927 = scalar_lea.vmem [#allocation1], 3
  %v2928 = vld [vmem:[%s2927] ss:$4 sm:$0xff]
  %s2929 = scalar_lea.vmem [#allocation1], 32
  %v2930 = vld [vmem:[%s2929] ss:$4 sm:$0xff]
  %s2931 = scalar_lea.vmem [#allocation1], 33
  %v2932 = vld [vmem:[%s2931] ss:$4 sm:$0xff]
  %2934 = vst [vmem:[#allocation1] sm:$0xff] %v2880
  %2936 = vst [vmem:[#allocation1 + $0x20] sm:$0xff] %v2881
  %v2937 = vld [vmem:[%s2923] ss:$4 sm:$0xff]
  %v2938 = vld [vmem:[%s2925] ss:$4 sm:$0xff]
  %v2939 = vld [vmem:[%s2927] ss:$4 sm:$0xff]
  %v2940 = vld [vmem:[%s2929] ss:$4 sm:$0xff]
  %v2941 = vld [vmem:[%s2931] ss:$4 sm:$0xff]
  %2943 = vst [vmem:[#allocation1] sm:$0xff] %v2885
  %2945 = vst [vmem:[#allocation1 + $0x20] sm:$0xff] %v2886
  %v2946 = vld [vmem:[%s2923] ss:$4 sm:$0xff]
  %v2947 = vld [vmem:[%s2925] ss:$4 sm:$0xff]
  %v2948 = vld [vmem:[%s2927] ss:$4 sm:$0xff]
  %v2949 = vld [vmem:[%s2929] ss:$4 sm:$0xff]
  %v2950 = vld [vmem:[%s2931] ss:$4 sm:$0xff]
  %2952 = vst [vmem:[#allocation1] sm:$0xff] %v2890
  %2954 = vst [vmem:[#allocation1 + $0x20] sm:$0xff] %v2891
  %v2955 = vld [vmem:[%s2923] ss:$4 sm:$0xff]
  %v2956 = vld [vmem:[%s2925] ss:$4 sm:$0xff]
  %v2957 = vld [vmem:[%s2927] ss:$4 sm:$0xff]
  %v2958 = vld [vmem:[%s2929] ss:$4 sm:$0xff]
  %v2959 = vld [vmem:[%s2931] ss:$4 sm:$0xff]
  %2961 = vst [vmem:[#allocation1] sm:$0xff] %v2895
  %2963 = vst [vmem:[#allocation1 + $0x20] sm:$0xff] %v2896
  %v2964 = vld [vmem:[%s2923] ss:$4 sm:$0xff]
  %v2965 = vld [vmem:[%s2925] ss:$4 sm:$0xff]
  %v2966 = vld [vmem:[%s2927] ss:$4 sm:$0xff]
  %v2967 = vld [vmem:[%s2929] ss:$4 sm:$0xff]
  %v2968 = vld [vmem:[%s2931] ss:$4 sm:$0xff]
  %2970 = vst [vmem:[#allocation1] sm:$0xff] %v2900
  %2972 = vst [vmem:[#allocation1 + $0x20] sm:$0xff] %v2901
  %v2973 = vld [vmem:[%s2923] ss:$4 sm:$0xff]
  %v2974 = vld [vmem:[%s2925] ss:$4 sm:$0xff]
  %v2975 = vld [vmem:[%s2927] ss:$4 sm:$0xff]
  %v2976 = vld [vmem:[%s2929] ss:$4 sm:$0xff]
  %v2977 = vld [vmem:[%s2931] ss:$4 sm:$0xff]
  %2979 = vst [vmem:[#allocation1] sm:$0xff] %v2905
  %2981 = vst [vmem:[#allocation1 + $0x20] sm:$0xff] %v2906
  %v2982 = vld [vmem:[%s2923] ss:$4 sm:$0xff]
  %v2983 = vld [vmem:[%s2925] ss:$4 sm:$0xff]
  %v2984 = vld [vmem:[%s2927] ss:$4 sm:$0xff]
  %v2985 = vld [vmem:[%s2929] ss:$4 sm:$0xff]
  %v2986 = vld [vmem:[%s2931] ss:$4 sm:$0xff]
  %2988 = vst [vmem:[#allocation1] sm:$0xff] %v2910
  %2990 = vst [vmem:[#allocation1 + $0x20] sm:$0xff] %v2911
  %v2991 = vld [vmem:[%s2923] ss:$4 sm:$0xff]
  %v2992 = vld [vmem:[%s2925] ss:$4 sm:$0xff]
  %v2993 = vld [vmem:[%s2927] ss:$4 sm:$0xff]
  %v2994 = vld [vmem:[%s2929] ss:$4 sm:$0xff]
  %v2995 = vld [vmem:[%s2931] ss:$4 sm:$0xff]
  %2996 = vst [vmem:[#allocation1] ss:$9 sm:$0xff] %v2924
  %s2997 = scalar_lea.vmem [#allocation1], 1
  %2998 = vst [vmem:[%s2997] ss:$9 sm:$0xff] %v2926
  %s2999 = scalar_lea.vmem [#allocation1], 2
  %3000 = vst [vmem:[%s2999] ss:$9 sm:$0xff] %v2928
  %s3001 = scalar_lea.vmem [#allocation1], 3
  %3002 = vst [vmem:[%s3001] ss:$9 sm:$0xff] %v2930
  %s3003 = scalar_lea.vmem [#allocation1], 4
  %3004 = vst [vmem:[%s3003] ss:$9 sm:$0xff] %v2932
  %s3005 = scalar_lea.vmem [#allocation1], 5
  %3006 = vst [vmem:[%s3005] ss:$9 sm:$0xff] %v2937
  %s3007 = scalar_lea.vmem [#allocation1], 6
  %3008 = vst [vmem:[%s3007] ss:$9 sm:$0xff] %v2938
  %s3009 = scalar_lea.vmem [#allocation1], 7
  %3010 = vst [vmem:[%s3009] ss:$9 sm:$0xff] %v2939
  %v3011 = vld [vmem:[#allocation1] sm:$0xff]
  %3012 = vst [vmem:[#allocation1] ss:$9 sm:$0xff] %v2940
  %3013 = vst [vmem:[%s2997] ss:$9 sm:$0xff] %v2941
  %3014 = vst [vmem:[%s2999] ss:$9 sm:$0xff] %v2946
  %3015 = vst [vmem:[%s3001] ss:$9 sm:$0xff] %v2947
  %3016 = vst [vmem:[%s3003] ss:$9 sm:$0xff] %v2948
  %3017 = vst [vmem:[%s3005] ss:$9 sm:$0xff] %v2949
  %3018 = vst [vmem:[%s3007] ss:$9 sm:$0xff] %v2950
  %3019 = vst [vmem:[%s3009] ss:$9 sm:$0xff] %v2955
  %v3020 = vld [vmem:[#allocation1] sm:$0xff]
  %3021 = vst [vmem:[#allocation1] ss:$9 sm:$0xff] %v2956
  %3022 = vst [vmem:[%s2997] ss:$9 sm:$0xff] %v2957
  %3023 = vst [vmem:[%s2999] ss:$9 sm:$0xff] %v2958
  %3024 = vst [vmem:[%s3001] ss:$9 sm:$0xff] %v2959
  %3025 = vst [vmem:[%s3003] ss:$9 sm:$0xff] %v2964
  %3026 = vst [vmem:[%s3005] ss:$9 sm:$0xff] %v2965
  %3027 = vst [vmem:[%s3007] ss:$9 sm:$0xff] %v2966
  %3028 = vst [vmem:[%s3009] ss:$9 sm:$0xff] %v2967
  %v3029 = vld [vmem:[#allocation1] sm:$0xff]
  %3030 = vst [vmem:[#allocation1] ss:$9 sm:$0xff] %v2968
  %3031 = vst [vmem:[%s2997] ss:$9 sm:$0xff] %v2973
  %3032 = vst [vmem:[%s2999] ss:$9 sm:$0xff] %v2974
  %3033 = vst [vmem:[%s3001] ss:$9 sm:$0xff] %v2975
  %3034 = vst [vmem:[%s3003] ss:$9 sm:$0xff] %v2976
  %3035 = vst [vmem:[%s3005] ss:$9 sm:$0xff] %v2977
  %3036 = vst [vmem:[%s3007] ss:$9 sm:$0xff] %v2982
  %3037 = vst [vmem:[%s3009] ss:$9 sm:$0xff] %v2983
  %v3038 = vld [vmem:[#allocation1] sm:$0xff]
  %3039 = vst [vmem:[#allocation1] ss:$9 sm:$0xff] %v2984
  %3040 = vst [vmem:[%s2997] ss:$9 sm:$0xff] %v2985
  %3041 = vst [vmem:[%s2999] ss:$9 sm:$0xff] %v2986
  %3042 = vst [vmem:[%s3001] ss:$9 sm:$0xff] %v2991
  %3043 = vst [vmem:[%s3003] ss:$9 sm:$0xff] %v2992
  %3044 = vst [vmem:[%s3005] ss:$9 sm:$0xff] %v2993
  %3045 = vst [vmem:[%s3007] ss:$9 sm:$0xff] %v2994
  %3046 = vst [vmem:[%s3009] ss:$9 sm:$0xff] %v2995
  %v3047 = vld [vmem:[#allocation1] sm:$0xff]
  %v3050 = vunpack.c.l.b16 %v2917
  %v3051 = vunpack.c.l.b16 %v2918
  %v3052 = vpack.c.b16 %v3051, %v3050
  %vm3053 = vcmask 80896
  %v3054 = vsel %vm3053, %v3011, 0
  %v3056 = vsel %vm3053, %v3020, 0
  %v3058 = vsel %vm3053, %v3029, 0
  %v3060 = vsel %vm3053, %v3038, 0
  %v3062 = vsel %vm3053, %v3047, 0
  %vm3064 = vcmask 1044480
  %v3066 = vsel %vm3064, %v3052, 0
  %3068 = vmatpush.bf16.msra.mxu0 0
  %3069 = vmatpush.bf16.msra.mxu0 0
  %3070 = vmatpush.bf16.msra.mxu0 0
  %3071 = vmatpush.bf16.msra.mxu0 0
  %3072 = vmatpush.bf16.msra.mxu0 0
  %3073 = vmatpush.bf16.msra.mxu0 0
  %3074 = vmatpush.bf16.msra.mxu0 0
  %3075 = vmatpush.bf16.msra.mxu0 %v3066
  %3076 = vmatmul.bf16.gmra.mxu0 %v3054
  %v3077 = vpop.f32.mrf.mxu0
  %v3078 = vadd.f32 0.0, %v3077
  %v3079 = vpop.f32.mrf.mxu0
  %v3080 = vadd.f32 0.0, %v3079
  %3081 = vmatmul.bf16.gmra.mxu0 %v3056
  %v3082 = vpop.f32.mrf.mxu0
  %v3083 = vadd.f32 0.0, %v3082
  %v3084 = vpop.f32.mrf.mxu0
  %v3085 = vadd.f32 0.0, %v3084
  %3086 = vmatmul.bf16.gmra.mxu0 %v3058
  %v3087 = vpop.f32.mrf.mxu0
  %v3088 = vadd.f32 0.0, %v3087
  %v3089 = vpop.f32.mrf.mxu0
  %v3090 = vadd.f32 0.0, %v3089
  %3091 = vmatmul.bf16.gmra.mxu0 %v3060
  %v3092 = vpop.f32.mrf.mxu0
  %v3093 = vadd.f32 0.0, %v3092
  %v3094 = vpop.f32.mrf.mxu0
  %v3095 = vadd.f32 0.0, %v3094
  %3096 = vmatmul.bf16.gmra.mxu0 %v3062
  %v3097 = vpop.f32.mrf.mxu0
  %v3098 = vadd.f32 0.0, %v3097
  %v3099 = vpop.f32.mrf.mxu0
  %v3100 = vadd.f32 0.0, %v3099
  %3101 = vdwg.mxu0
  %v3118 = vrot.slane %v2874, 3
  %v3119 = vrot.slane %v2875, 3
  %v3120 = vrot.slane %v2879, 3
  %v3121 = vrot.slane %v2880, 3
  %v3122 = vrot.slane %v2884, 3
  %v3123 = vrot.slane %v2885, 3
  %v3124 = vrot.slane %v2889, 3
  %v3125 = vrot.slane %v2890, 3
  %v3126 = vrot.slane %v2894, 3
  %v3127 = vrot.slane %v2895, 3
  %v3128 = vrot.slane %v2899, 3
  %v3129 = vrot.slane %v2900, 3
  %v3130 = vrot.slane %v2904, 3
  %v3131 = vrot.slane %v2905, 3
  %v3132 = vrot.slane %v2909, 3
  %v3133 = vrot.slane %v2910, 3
  %v3136 = vsel %vm817, %v2874, %v3118
  %v3137 = vsel %vm821, %v2874, %v3118
  %v3139 = vrot.slane %v3137, 1
  %v3140 = vsel %vm825, %v2874, %v3118
  %v3142 = vrot.slane %v3140, 2
  %v3143 = vsel %vm829, %v2874, %v3118
  %v3145 = vrot.slane %v3143, 3
  %v3147 = vsel %vm817, %v2875, %v3119
  %v3150 = vsel %vm817, %v2879, %v3120
  %v3151 = vsel %vm821, %v2879, %v3120
  %v3153 = vrot.slane %v3151, 1
  %v3154 = vsel %vm825, %v2879, %v3120
  %v3156 = vrot.slane %v3154, 2
  %v3157 = vsel %vm829, %v2879, %v3120
  %v3159 = vrot.slane %v3157, 3
  %v3161 = vsel %vm817, %v2880, %v3121
  %v3164 = vsel %vm817, %v2884, %v3122
  %v3165 = vsel %vm821, %v2884, %v3122
  %v3167 = vrot.slane %v3165, 1
  %v3168 = vsel %vm825, %v2884, %v3122
  %v3170 = vrot.slane %v3168, 2
  %v3171 = vsel %vm829, %v2884, %v3122
  %v3173 = vrot.slane %v3171, 3
  %v3175 = vsel %vm817, %v2885, %v3123
  %v3178 = vsel %vm817, %v2889, %v3124
  %v3179 = vsel %vm821, %v2889, %v3124
  %v3181 = vrot.slane %v3179, 1
  %v3182 = vsel %vm825, %v2889, %v3124
  %v3184 = vrot.slane %v3182, 2
  %v3185 = vsel %vm829, %v2889, %v3124
  %v3187 = vrot.slane %v3185, 3
  %v3189 = vsel %vm817, %v2890, %v3125
  %v3192 = vsel %vm817, %v2894, %v3126
  %v3193 = vsel %vm821, %v2894, %v3126
  %v3195 = vrot.slane %v3193, 1
  %v3196 = vsel %vm825, %v2894, %v3126
  %v3198 = vrot.slane %v3196, 2
  %v3199 = vsel %vm829, %v2894, %v3126
  %v3201 = vrot.slane %v3199, 3
  %v3203 = vsel %vm817, %v2895, %v3127
  %v3206 = vsel %vm817, %v2899, %v3128
  %v3207 = vsel %vm821, %v2899, %v3128
  %v3209 = vrot.slane %v3207, 1
  %v3210 = vsel %vm825, %v2899, %v3128
  %v3212 = vrot.slane %v3210, 2
  %v3213 = vsel %vm829, %v2899, %v3128
  %v3215 = vrot.slane %v3213, 3
  %v3217 = vsel %vm817, %v2900, %v3129
  %v3220 = vsel %vm817, %v2904, %v3130
  %v3221 = vsel %vm821, %v2904, %v3130
  %v3223 = vrot.slane %v3221, 1
  %v3224 = vsel %vm825, %v2904, %v3130
  %v3226 = vrot.slane %v3224, 2
  %v3227 = vsel %vm829, %v2904, %v3130
  %v3229 = vrot.slane %v3227, 3
  %v3231 = vsel %vm817, %v2905, %v3131
  %v3234 = vsel %vm817, %v2909, %v3132
  %v3235 = vsel %vm821, %v2909, %v3132
  %v3237 = vrot.slane %v3235, 1
  %v3238 = vsel %vm825, %v2909, %v3132
  %v3240 = vrot.slane %v3238, 2
  %v3241 = vsel %vm829, %v2909, %v3132
  %v3243 = vrot.slane %v3241, 3
  %v3245 = vsel %vm817, %v2910, %v3133
  %3246 = vst [vmem:[#allocation1] ss:$9 sm:$0xff] %v3136
  %s3248 = scalar_lea.vmem [#allocation1], 1
  %3249 = vst [vmem:[%s3248] ss:$9 sm:$0xff] %v3139
  %s3251 = scalar_lea.vmem [#allocation1], 2
  %3252 = vst [vmem:[%s3251] ss:$9 sm:$0xff] %v3142
  %s3254 = scalar_lea.vmem [#allocation1], 3
  %3255 = vst [vmem:[%s3254] ss:$9 sm:$0xff] %v3145
  %s3256 = scalar_lea.vmem [#allocation1], 4
  %3257 = vst [vmem:[%s3256] ss:$9 sm:$0xff] %v3147
  %s3258 = scalar_lea.vmem [#allocation1], 5
  %3259 = vst [vmem:[%s3258] ss:$9 sm:$0xff] %v3150
  %s3261 = scalar_lea.vmem [#allocation1], 6
  %3262 = vst [vmem:[%s3261] ss:$9 sm:$0xff] %v3153
  %s3264 = scalar_lea.vmem [#allocation1], 7
  %3265 = vst [vmem:[%s3264] ss:$9 sm:$0xff] %v3156
  %v3266 = vld [vmem:[#allocation1] sm:$0xff]
  %3268 = vst [vmem:[#allocation1] ss:$9 sm:$0xff] %v3159
  %3269 = vst [vmem:[%s3248] ss:$9 sm:$0xff] %v3161
  %3270 = vst [vmem:[%s3251] ss:$9 sm:$0xff] %v3164
  %3272 = vst [vmem:[%s3254] ss:$9 sm:$0xff] %v3167
  %3274 = vst [vmem:[%s3256] ss:$9 sm:$0xff] %v3170
  %3276 = vst [vmem:[%s3258] ss:$9 sm:$0xff] %v3173
  %3277 = vst [vmem:[%s3261] ss:$9 sm:$0xff] %v3175
  %3278 = vst [vmem:[%s3264] ss:$9 sm:$0xff] %v3178
  %v3279 = vld [vmem:[#allocation1] sm:$0xff]
  %3281 = vst [vmem:[#allocation1] ss:$9 sm:$0xff] %v3181
  %3283 = vst [vmem:[%s3248] ss:$9 sm:$0xff] %v3184
  %3285 = vst [vmem:[%s3251] ss:$9 sm:$0xff] %v3187
  %3286 = vst [vmem:[%s3254] ss:$9 sm:$0xff] %v3189
  %3287 = vst [vmem:[%s3256] ss:$9 sm:$0xff] %v3192
  %3289 = vst [vmem:[%s3258] ss:$9 sm:$0xff] %v3195
  %3291 = vst [vmem:[%s3261] ss:$9 sm:$0xff] %v3198
  %3293 = vst [vmem:[%s3264] ss:$9 sm:$0xff] %v3201
  %v3294 = vld [vmem:[#allocation1] sm:$0xff]
  %3295 = vst [vmem:[#allocation1] ss:$9 sm:$0xff] %v3203
  %3296 = vst [vmem:[%s3248] ss:$9 sm:$0xff] %v3206
  %3298 = vst [vmem:[%s3251] ss:$9 sm:$0xff] %v3209
  %3300 = vst [vmem:[%s3254] ss:$9 sm:$0xff] %v3212
  %3302 = vst [vmem:[%s3256] ss:$9 sm:$0xff] %v3215
  %3303 = vst [vmem:[%s3258] ss:$9 sm:$0xff] %v3217
  %3304 = vst [vmem:[%s3261] ss:$9 sm:$0xff] %v3220
  %3306 = vst [vmem:[%s3264] ss:$9 sm:$0xff] %v3223
  %v3307 = vld [vmem:[#allocation1] sm:$0xff]
  %3309 = vst [vmem:[#allocation1] ss:$9 sm:$0xff] %v3226
  %3311 = vst [vmem:[%s3248] ss:$9 sm:$0xff] %v3229
  %3312 = vst [vmem:[%s3251] ss:$9 sm:$0xff] %v3231
  %3313 = vst [vmem:[%s3254] ss:$9 sm:$0xff] %v3234
  %3315 = vst [vmem:[%s3256] ss:$9 sm:$0xff] %v3237
  %3317 = vst [vmem:[%s3258] ss:$9 sm:$0xff] %v3240
  %3319 = vst [vmem:[%s3261] ss:$9 sm:$0xff] %v3243
  %3320 = vst [vmem:[%s3264] ss:$9 sm:$0xff] %v3245
  %v3321 = vld [vmem:[#allocation1] sm:$0xff]
  %v3324 = vunpack.c.l.b16 %v2914
  %v3325 = vunpack.c.l.b16 %v2915
  %v3326 = vpack.c.b16 %v3325, %v3324
  %v3327 = vsel %vm3053, %v3266, 0
  %v3329 = vsel %vm3053, %v3279, 0
  %v3331 = vsel %vm3053, %v3294, 0
  %v3333 = vsel %vm3053, %v3307, 0
  %v3335 = vsel %vm3053, %v3321, 0
  %v3338 = vsel %vm3064, %v3326, 0
  %3340 = vmatpush.bf16.msra.mxu0 0
  %3341 = vmatpush.bf16.msra.mxu0 0
  %3342 = vmatpush.bf16.msra.mxu0 0
  %3343 = vmatpush.bf16.msra.mxu0 0
  %3344 = vmatpush.bf16.msra.mxu0 0
  %3345 = vmatpush.bf16.msra.mxu0 0
  %3346 = vmatpush.bf16.msra.mxu0 0
  %3347 = vmatpush.bf16.msra.mxu0 %v3338
  %3348 = vmatmul.bf16.gmra.mxu0 %v3327
  %v3349 = vpop.f32.mrf.mxu0
  %v3350 = vadd.f32 %v3078, %v3349
  %v3351 = vpop.f32.mrf.mxu0
  %v3352 = vadd.f32 %v3080, %v3351
  %3353 = vmatmul.bf16.gmra.mxu0 %v3329
  %v3354 = vpop.f32.mrf.mxu0
  %v3355 = vadd.f32 %v3083, %v3354
  %v3356 = vpop.f32.mrf.mxu0
  %v3357 = vadd.f32 %v3085, %v3356
  %3358 = vmatmul.bf16.gmra.mxu0 %v3331
  %v3359 = vpop.f32.mrf.mxu0
  %v3360 = vadd.f32 %v3088, %v3359
  %v3361 = vpop.f32.mrf.mxu0
  %v3362 = vadd.f32 %v3090, %v3361
  %3363 = vmatmul.bf16.gmra.mxu0 %v3333
  %v3364 = vpop.f32.mrf.mxu0
  %v3365 = vadd.f32 %v3093, %v3364
  %v3366 = vpop.f32.mrf.mxu0
  %v3367 = vadd.f32 %v3095, %v3366
  %3368 = vmatmul.bf16.gmra.mxu0 %v3335
  %v3369 = vpop.f32.mrf.mxu0
  %v3370 = vadd.f32 %v3098, %v3369
  %v3371 = vpop.f32.mrf.mxu0
  %v3372 = vadd.f32 %v3100, %v3371
  %3373 = vdwg.mxu0
  %v3384 = vrot.slane %v3350, 2
  %v3385 = vrot.slane %v3350, 4
  %v3386 = vrot.slane %v3350, 6
  %v3387 = vrot.slane %v3352, 2
  %v3388 = vrot.slane %v3352, 4
  %v3389 = vrot.slane %v3352, 6
  %v3390 = vrot.slane %v3355, 2
  %v3391 = vrot.slane %v3355, 4
  %v3392 = vrot.slane %v3355, 6
  %v3393 = vrot.slane %v3357, 2
  %v3394 = vrot.slane %v3357, 4
  %v3395 = vrot.slane %v3357, 6
  %v3396 = vrot.slane %v3360, 2
  %v3397 = vrot.slane %v3360, 4
  %v3398 = vrot.slane %v3360, 6
  %v3399 = vrot.slane %v3362, 2
  %v3400 = vrot.slane %v3362, 4
  %v3401 = vrot.slane %v3362, 6
  %v3402 = vrot.slane %v3365, 2
  %v3403 = vrot.slane %v3365, 4
  %v3404 = vrot.slane %v3365, 6
  %v3405 = vrot.slane %v3367, 2
  %v3406 = vrot.slane %v3367, 4
  %v3407 = vrot.slane %v3367, 6
  %v3408 = vrot.slane %v3370, 2
  %v3409 = vrot.slane %v3370, 4
  %v3410 = vrot.slane %v3370, 6
  %v3411 = vrot.slane %v3372, 2
  %v3412 = vrot.slane %v3372, 4
  %v3413 = vrot.slane %v3372, 6
  %s3444 = scalar_lea.vmem %s4, 16
  %v3445 = vld [vmem:[%s3444] sm:$0xf]
  %v3446 = vld [vmem:[%s3444 + $0x4] sm:$0x1]
  %3447 = vst [vmem:[#allocation1] sm:$0xff] %v2876
  %3449 = vst [vmem:[#allocation1 + $0x20] sm:$0xff] %v2877
  %s3450 = scalar_lea.vmem [#allocation1], 2
  %v3451 = vld [vmem:[%s3450] ss:$4 sm:$0xff]
  %s3452 = scalar_lea.vmem [#allocation1], 3
  %v3453 = vld [vmem:[%s3452] ss:$4 sm:$0xff]
  %s3454 = scalar_lea.vmem [#allocation1], 32
  %v3455 = vld [vmem:[%s3454] ss:$4 sm:$0xff]
  %s3456 = scalar_lea.vmem [#allocation1], 33
  %v3457 = vld [vmem:[%s3456] ss:$4 sm:$0xff]
  %s3458 = scalar_lea.vmem [#allocation1], 34
  %v3459 = vld [vmem:[%s3458] ss:$4 sm:$0xff]
  %3460 = vst [vmem:[#allocation1] sm:$0xff] %v2881
  %3462 = vst [vmem:[#allocation1 + $0x20] sm:$0xff] %v2882
  %v3463 = vld [vmem:[%s3450] ss:$4 sm:$0xff]
  %v3464 = vld [vmem:[%s3452] ss:$4 sm:$0xff]
  %v3465 = vld [vmem:[%s3454] ss:$4 sm:$0xff]
  %v3466 = vld [vmem:[%s3456] ss:$4 sm:$0xff]
  %v3467 = vld [vmem:[%s3458] ss:$4 sm:$0xff]
  %3468 = vst [vmem:[#allocation1] sm:$0xff] %v2886
  %3470 = vst [vmem:[#allocation1 + $0x20] sm:$0xff] %v2887
  %v3471 = vld [vmem:[%s3450] ss:$4 sm:$0xff]
  %v3472 = vld [vmem:[%s3452] ss:$4 sm:$0xff]
  %v3473 = vld [vmem:[%s3454] ss:$4 sm:$0xff]
  %v3474 = vld [vmem:[%s3456] ss:$4 sm:$0xff]
  %v3475 = vld [vmem:[%s3458] ss:$4 sm:$0xff]
  %3476 = vst [vmem:[#allocation1] sm:$0xff] %v2891
  %3478 = vst [vmem:[#allocation1 + $0x20] sm:$0xff] %v2892
  %v3479 = vld [vmem:[%s3450] ss:$4 sm:$0xff]
  %v3480 = vld [vmem:[%s3452] ss:$4 sm:$0xff]
  %v3481 = vld [vmem:[%s3454] ss:$4 sm:$0xff]
  %v3482 = vld [vmem:[%s3456] ss:$4 sm:$0xff]
  %v3483 = vld [vmem:[%s3458] ss:$4 sm:$0xff]
  %3484 = vst [vmem:[#allocation1] sm:$0xff] %v2896
  %3486 = vst [vmem:[#allocation1 + $0x20] sm:$0xff] %v2897
  %v3487 = vld [vmem:[%s3450] ss:$4 sm:$0xff]
  %v3488 = vld [vmem:[%s3452] ss:$4 sm:$0xff]
  %v3489 = vld [vmem:[%s3454] ss:$4 sm:$0xff]
  %v3490 = vld [vmem:[%s3456] ss:$4 sm:$0xff]
  %v3491 = vld [vmem:[%s3458] ss:$4 sm:$0xff]
  %3492 = vst [vmem:[#allocation1] sm:$0xff] %v2901
  %3494 = vst [vmem:[#allocation1 + $0x20] sm:$0xff] %v2902
  %v3495 = vld [vmem:[%s3450] ss:$4 sm:$0xff]
  %v3496 = vld [vmem:[%s3452] ss:$4 sm:$0xff]
  %v3497 = vld [vmem:[%s3454] ss:$4 sm:$0xff]
  %v3498 = vld [vmem:[%s3456] ss:$4 sm:$0xff]
  %v3499 = vld [vmem:[%s3458] ss:$4 sm:$0xff]
  %3500 = vst [vmem:[#allocation1] sm:$0xff] %v2906
  %3502 = vst [vmem:[#allocation1 + $0x20] sm:$0xff] %v2907
  %v3503 = vld [vmem:[%s3450] ss:$4 sm:$0xff]
  %v3504 = vld [vmem:[%s3452] ss:$4 sm:$0xff]
  %v3505 = vld [vmem:[%s3454] ss:$4 sm:$0xff]
  %v3506 = vld [vmem:[%s3456] ss:$4 sm:$0xff]
  %v3507 = vld [vmem:[%s3458] ss:$4 sm:$0xff]
  %3508 = vst [vmem:[#allocation1] sm:$0xff] %v2911
  %3510 = vst [vmem:[#allocation1 + $0x20] sm:$0xff] %v2912
  %v3511 = vld [vmem:[%s3450] ss:$4 sm:$0xff]
  %v3512 = vld [vmem:[%s3452] ss:$4 sm:$0xff]
  %v3513 = vld [vmem:[%s3454] ss:$4 sm:$0xff]
  %v3514 = vld [vmem:[%s3456] ss:$4 sm:$0xff]
  %v3515 = vld [vmem:[%s3458] ss:$4 sm:$0xff]
  %3516 = vst [vmem:[#allocation1] ss:$9 sm:$0xff] %v3451
  %s3517 = scalar_lea.vmem [#allocation1], 1
  %3518 = vst [vmem:[%s3517] ss:$9 sm:$0xff] %v3453
  %s3519 = scalar_lea.vmem [#allocation1], 2
  %3520 = vst [vmem:[%s3519] ss:$9 sm:$0xff] %v3455
  %s3521 = scalar_lea.vmem [#allocation1], 3
  %3522 = vst [vmem:[%s3521] ss:$9 sm:$0xff] %v3457
  %s3523 = scalar_lea.vmem [#allocation1], 4
  %3524 = vst [vmem:[%s3523] ss:$9 sm:$0xff] %v3459
  %s3525 = scalar_lea.vmem [#allocation1], 5
  %3526 = vst [vmem:[%s3525] ss:$9 sm:$0xff] %v3463
  %s3527 = scalar_lea.vmem [#allocation1], 6
  %3528 = vst [vmem:[%s3527] ss:$9 sm:$0xff] %v3464
  %s3529 = scalar_lea.vmem [#allocation1], 7
  %3530 = vst [vmem:[%s3529] ss:$9 sm:$0xff] %v3465
  %v3531 = vld [vmem:[#allocation1] sm:$0xff]
  %3532 = vst [vmem:[#allocation1] ss:$9 sm:$0xff] %v3466
  %3533 = vst [vmem:[%s3517] ss:$9 sm:$0xff] %v3467
  %3534 = vst [vmem:[%s3519] ss:$9 sm:$0xff] %v3471
  %3535 = vst [vmem:[%s3521] ss:$9 sm:$0xff] %v3472
  %3536 = vst [vmem:[%s3523] ss:$9 sm:$0xff] %v3473
  %3537 = vst [vmem:[%s3525] ss:$9 sm:$0xff] %v3474
  %3538 = vst [vmem:[%s3527] ss:$9 sm:$0xff] %v3475
  %3539 = vst [vmem:[%s3529] ss:$9 sm:$0xff] %v3479
  %v3540 = vld [vmem:[#allocation1] sm:$0xff]
  %3541 = vst [vmem:[#allocation1] ss:$9 sm:$0xff] %v3480
  %3542 = vst [vmem:[%s3517] ss:$9 sm:$0xff] %v3481
  %3543 = vst [vmem:[%s3519] ss:$9 sm:$0xff] %v3482
  %3544 = vst [vmem:[%s3521] ss:$9 sm:$0xff] %v3483
  %3545 = vst [vmem:[%s3523] ss:$9 sm:$0xff] %v3487
  %3546 = vst [vmem:[%s3525] ss:$9 sm:$0xff] %v3488
  %3547 = vst [vmem:[%s3527] ss:$9 sm:$0xff] %v3489
  %3548 = vst [vmem:[%s3529] ss:$9 sm:$0xff] %v3490
  %v3549 = vld [vmem:[#allocation1] sm:$0xff]
  %3550 = vst [vmem:[#allocation1] ss:$9 sm:$0xff] %v3491
  %3551 = vst [vmem:[%s3517] ss:$9 sm:$0xff] %v3495
  %3552 = vst [vmem:[%s3519] ss:$9 sm:$0xff] %v3496
  %3553 = vst [vmem:[%s3521] ss:$9 sm:$0xff] %v3497
  %3554 = vst [vmem:[%s3523] ss:$9 sm:$0xff] %v3498
  %3555 = vst [vmem:[%s3525] ss:$9 sm:$0xff] %v3499
  %3556 = vst [vmem:[%s3527] ss:$9 sm:$0xff] %v3503
  %3557 = vst [vmem:[%s3529] ss:$9 sm:$0xff] %v3504
  %v3558 = vld [vmem:[#allocation1] sm:$0xff]
  %3559 = vst [vmem:[#allocation1] ss:$9 sm:$0xff] %v3505
  %3560 = vst [vmem:[%s3517] ss:$9 sm:$0xff] %v3506
  %3561 = vst [vmem:[%s3519] ss:$9 sm:$0xff] %v3507
  %3562 = vst [vmem:[%s3521] ss:$9 sm:$0xff] %v3511
  %3563 = vst [vmem:[%s3523] ss:$9 sm:$0xff] %v3512
  %3564 = vst [vmem:[%s3525] ss:$9 sm:$0xff] %v3513
  %3565 = vst [vmem:[%s3527] ss:$9 sm:$0xff] %v3514
  %3566 = vst [vmem:[%s3529] ss:$9 sm:$0xff] %v3515
  %v3567 = vld [vmem:[#allocation1] sm:$0xff]
  %v3570 = vunpack.c.l.b16 %v3445
  %v3571 = vunpack.c.l.b16 %v3446
  %v3572 = vpack.c.b16 %v3571, %v3570
  %v3573 = vsel %vm3053, %v3531, 0
  %v3575 = vsel %vm3053, %v3540, 0
  %v3577 = vsel %vm3053, %v3549, 0
  %v3579 = vsel %vm3053, %v3558, 0
  %v3581 = vsel %vm3053, %v3567, 0
  %v3584 = vsel %vm3064, %v3572, 0
  %3586 = vmatpush.bf16.msra.mxu0 0
  %3587 = vmatpush.bf16.msra.mxu0 0
  %3588 = vmatpush.bf16.msra.mxu0 0
  %3589 = vmatpush.bf16.msra.mxu0 0
  %3590 = vmatpush.bf16.msra.mxu0 0
  %3591 = vmatpush.bf16.msra.mxu0 0
  %3592 = vmatpush.bf16.msra.mxu0 0
  %3593 = vmatpush.bf16.msra.mxu0 %v3584
  %3594 = vmatmul.bf16.gmra.mxu0 %v3573
  %v3595 = vpop.f32.mrf.mxu0
  %v3596 = vadd.f32 0.0, %v3595
  %v3597 = vpop.f32.mrf.mxu0
  %v3598 = vadd.f32 0.0, %v3597
  %3599 = vmatmul.bf16.gmra.mxu0 %v3575
  %v3600 = vpop.f32.mrf.mxu0
  %v3601 = vadd.f32 0.0, %v3600
  %v3602 = vpop.f32.mrf.mxu0
  %v3603 = vadd.f32 0.0, %v3602
  %3604 = vmatmul.bf16.gmra.mxu0 %v3577
  %v3605 = vpop.f32.mrf.mxu0
  %v3606 = vadd.f32 0.0, %v3605
  %v3607 = vpop.f32.mrf.mxu0
  %v3608 = vadd.f32 0.0, %v3607
  %3609 = vmatmul.bf16.gmra.mxu0 %v3579
  %v3610 = vpop.f32.mrf.mxu0
  %v3611 = vadd.f32 0.0, %v3610
  %v3612 = vpop.f32.mrf.mxu0
  %v3613 = vadd.f32 0.0, %v3612
  %3614 = vmatmul.bf16.gmra.mxu0 %v3581
  %v3615 = vpop.f32.mrf.mxu0
  %v3616 = vadd.f32 0.0, %v3615
  %v3617 = vpop.f32.mrf.mxu0
  %v3618 = vadd.f32 0.0, %v3617
  %3619 = vdwg.mxu0
  %v3630 = vrot.slane %v3596, 2
  %v3631 = vrot.slane %v3596, 4
  %v3632 = vrot.slane %v3596, 6
  %v3633 = vrot.slane %v3598, 2
  %v3634 = vrot.slane %v3598, 4
  %v3635 = vrot.slane %v3598, 6
  %v3636 = vrot.slane %v3601, 2
  %v3637 = vrot.slane %v3601, 4
  %v3638 = vrot.slane %v3601, 6
  %v3639 = vrot.slane %v3603, 2
  %v3640 = vrot.slane %v3603, 4
  %v3641 = vrot.slane %v3603, 6
  %v3642 = vrot.slane %v3606, 2
  %v3643 = vrot.slane %v3606, 4
  %v3644 = vrot.slane %v3606, 6
  %v3645 = vrot.slane %v3608, 2
  %v3646 = vrot.slane %v3608, 4
  %v3647 = vrot.slane %v3608, 6
  %v3648 = vrot.slane %v3611, 2
  %v3649 = vrot.slane %v3611, 4
  %v3650 = vrot.slane %v3611, 6
  %v3651 = vrot.slane %v3613, 2
  %v3652 = vrot.slane %v3613, 4
  %v3653 = vrot.slane %v3613, 6
  %v3654 = vrot.slane %v3616, 2
  %v3655 = vrot.slane %v3616, 4
  %v3656 = vrot.slane %v3616, 6
  %v3657 = vrot.slane %v3618, 2
  %v3658 = vrot.slane %v3618, 4
  %v3659 = vrot.slane %v3618, 6
  %v3690 = vadd.f32 %v3350, %v3596
  %v3691 = vadd.f32 %v3384, %v3630
  %v3692 = vadd.f32 %v3385, %v3631
  %v3693 = vadd.f32 %v3386, %v3632
  %v3694 = vadd.f32 %v3352, %v3598
  %v3695 = vadd.f32 %v3387, %v3633
  %v3696 = vadd.f32 %v3388, %v3634
  %v3697 = vadd.f32 %v3389, %v3635
  %v3698 = vadd.f32 %v3355, %v3601
  %v3699 = vadd.f32 %v3390, %v3636
  %v3700 = vadd.f32 %v3391, %v3637
  %v3701 = vadd.f32 %v3392, %v3638
  %v3702 = vadd.f32 %v3357, %v3603
  %v3703 = vadd.f32 %v3393, %v3639
  %v3704 = vadd.f32 %v3394, %v3640
  %v3705 = vadd.f32 %v3395, %v3641
  %v3706 = vadd.f32 %v3360, %v3606
  %v3707 = vadd.f32 %v3396, %v3642
  %v3708 = vadd.f32 %v3397, %v3643
  %v3709 = vadd.f32 %v3398, %v3644
  %v3710 = vadd.f32 %v3362, %v3608
  %v3711 = vadd.f32 %v3399, %v3645
  %v3712 = vadd.f32 %v3400, %v3646
  %v3713 = vadd.f32 %v3401, %v3647
  %v3714 = vadd.f32 %v3365, %v3611
  %v3715 = vadd.f32 %v3402, %v3648
  %v3716 = vadd.f32 %v3403, %v3649
  %v3717 = vadd.f32 %v3404, %v3650
  %v3718 = vadd.f32 %v3367, %v3613
  %v3719 = vadd.f32 %v3405, %v3651
  %v3720 = vadd.f32 %v3406, %v3652
  %v3721 = vadd.f32 %v3407, %v3653
  %v3722 = vadd.f32 %v3370, %v3616
  %v3723 = vadd.f32 %v3408, %v3654
  %v3724 = vadd.f32 %v3409, %v3655
  %v3725 = vadd.f32 %v3410, %v3656
  %v3726 = vadd.f32 %v3372, %v3618
  %v3727 = vadd.f32 %v3411, %v3657
  %v3728 = vadd.f32 %v3412, %v3658
  %v3729 = vadd.f32 %v3413, %v3659
  %s3730 = scalar_lea.vmem %s4, 24
  %v3731 = vld [vmem:[%s3730] sm:$0xf]
  %v3732 = vld [vmem:[%s3730 + $0x4] sm:$0x1]
  %3733 = vst [vmem:[#allocation1] sm:$0xff] %v2877
  %3735 = vst [vmem:[#allocation1 + $0x20] sm:$0xff] %v2878
  %s3736 = scalar_lea.vmem [#allocation1], 3
  %v3737 = vld [vmem:[%s3736] ss:$4 sm:$0xff]
  %s3738 = scalar_lea.vmem [#allocation1], 32
  %v3739 = vld [vmem:[%s3738] ss:$4 sm:$0xff]
  %s3740 = scalar_lea.vmem [#allocation1], 33
  %v3741 = vld [vmem:[%s3740] ss:$4 sm:$0xff]
  %s3742 = scalar_lea.vmem [#allocation1], 34
  %v3743 = vld [vmem:[%s3742] ss:$4 sm:$0xff]
  %s3744 = scalar_lea.vmem [#allocation1], 35
  %v3745 = vld [vmem:[%s3744] ss:$4 sm:$0xff]
  %3746 = vst [vmem:[#allocation1] sm:$0xff] %v2882
  %3748 = vst [vmem:[#allocation1 + $0x20] sm:$0xff] %v2883
  %v3749 = vld [vmem:[%s3736] ss:$4 sm:$0xff]
  %v3750 = vld [vmem:[%s3738] ss:$4 sm:$0xff]
  %v3751 = vld [vmem:[%s3740] ss:$4 sm:$0xff]
  %v3752 = vld [vmem:[%s3742] ss:$4 sm:$0xff]
  %v3753 = vld [vmem:[%s3744] ss:$4 sm:$0xff]
  %3754 = vst [vmem:[#allocation1] sm:$0xff] %v2887
  %3756 = vst [vmem:[#allocation1 + $0x20] sm:$0xff] %v2888
  %v3757 = vld [vmem:[%s3736] ss:$4 sm:$0xff]
  %v3758 = vld [vmem:[%s3738] ss:$4 sm:$0xff]
  %v3759 = vld [vmem:[%s3740] ss:$4 sm:$0xff]
  %v3760 = vld [vmem:[%s3742] ss:$4 sm:$0xff]
  %v3761 = vld [vmem:[%s3744] ss:$4 sm:$0xff]
  %3762 = vst [vmem:[#allocation1] sm:$0xff] %v2892
  %3764 = vst [vmem:[#allocation1 + $0x20] sm:$0xff] %v2893
  %v3765 = vld [vmem:[%s3736] ss:$4 sm:$0xff]
  %v3766 = vld [vmem:[%s3738] ss:$4 sm:$0xff]
  %v3767 = vld [vmem:[%s3740] ss:$4 sm:$0xff]
  %v3768 = vld [vmem:[%s3742] ss:$4 sm:$0xff]
  %v3769 = vld [vmem:[%s3744] ss:$4 sm:$0xff]
  %3770 = vst [vmem:[#allocation1] sm:$0xff] %v2897
  %3772 = vst [vmem:[#allocation1 + $0x20] sm:$0xff] %v2898
  %v3773 = vld [vmem:[%s3736] ss:$4 sm:$0xff]
  %v3774 = vld [vmem:[%s3738] ss:$4 sm:$0xff]
  %v3775 = vld [vmem:[%s3740] ss:$4 sm:$0xff]
  %v3776 = vld [vmem:[%s3742] ss:$4 sm:$0xff]
  %v3777 = vld [vmem:[%s3744] ss:$4 sm:$0xff]
  %3778 = vst [vmem:[#allocation1] sm:$0xff] %v2902
  %3780 = vst [vmem:[#allocation1 + $0x20] sm:$0xff] %v2903
  %v3781 = vld [vmem:[%s3736] ss:$4 sm:$0xff]
  %v3782 = vld [vmem:[%s3738] ss:$4 sm:$0xff]
  %v3783 = vld [vmem:[%s3740] ss:$4 sm:$0xff]
  %v3784 = vld [vmem:[%s3742] ss:$4 sm:$0xff]
  %v3785 = vld [vmem:[%s3744] ss:$4 sm:$0xff]
  %3786 = vst [vmem:[#allocation1] sm:$0xff] %v2907
  %3788 = vst [vmem:[#allocation1 + $0x20] sm:$0xff] %v2908
  %v3789 = vld [vmem:[%s3736] ss:$4 sm:$0xff]
  %v3790 = vld [vmem:[%s3738] ss:$4 sm:$0xff]
  %v3791 = vld [vmem:[%s3740] ss:$4 sm:$0xff]
  %v3792 = vld [vmem:[%s3742] ss:$4 sm:$0xff]
  %v3793 = vld [vmem:[%s3744] ss:$4 sm:$0xff]
  %3794 = vst [vmem:[#allocation1] sm:$0xff] %v2912
  %3796 = vst [vmem:[#allocation1 + $0x20] sm:$0xff] %v2913
  %v3797 = vld [vmem:[%s3736] ss:$4 sm:$0xff]
  %v3798 = vld [vmem:[%s3738] ss:$4 sm:$0xff]
  %v3799 = vld [vmem:[%s3740] ss:$4 sm:$0xff]
  %v3800 = vld [vmem:[%s3742] ss:$4 sm:$0xff]
  %v3801 = vld [vmem:[%s3744] ss:$4 sm:$0xff]
  %3802 = vst [vmem:[#allocation1] ss:$9 sm:$0xff] %v3737
  %s3803 = scalar_lea.vmem [#allocation1], 1
  %3804 = vst [vmem:[%s3803] ss:$9 sm:$0xff] %v3739
  %s3805 = scalar_lea.vmem [#allocation1], 2
  %3806 = vst [vmem:[%s3805] ss:$9 sm:$0xff] %v3741
  %s3807 = scalar_lea.vmem [#allocation1], 3
  %3808 = vst [vmem:[%s3807] ss:$9 sm:$0xff] %v3743
  %s3809 = scalar_lea.vmem [#allocation1], 4
  %3810 = vst [vmem:[%s3809] ss:$9 sm:$0xff] %v3745
  %s3811 = scalar_lea.vmem [#allocation1], 5
  %3812 = vst [vmem:[%s3811] ss:$9 sm:$0xff] %v3749
  %s3813 = scalar_lea.vmem [#allocation1], 6
  %3814 = vst [vmem:[%s3813] ss:$9 sm:$0xff] %v3750
  %s3815 = scalar_lea.vmem [#allocation1], 7
  %3816 = vst [vmem:[%s3815] ss:$9 sm:$0xff] %v3751
  %v3817 = vld [vmem:[#allocation1] sm:$0xff]
  %3818 = vst [vmem:[#allocation1] ss:$9 sm:$0xff] %v3752
  %3819 = vst [vmem:[%s3803] ss:$9 sm:$0xff] %v3753
  %3820 = vst [vmem:[%s3805] ss:$9 sm:$0xff] %v3757
  %3821 = vst [vmem:[%s3807] ss:$9 sm:$0xff] %v3758
  %3822 = vst [vmem:[%s3809] ss:$9 sm:$0xff] %v3759
  %3823 = vst [vmem:[%s3811] ss:$9 sm:$0xff] %v3760
  %3824 = vst [vmem:[%s3813] ss:$9 sm:$0xff] %v3761
  %3825 = vst [vmem:[%s3815] ss:$9 sm:$0xff] %v3765
  %v3826 = vld [vmem:[#allocation1] sm:$0xff]
  %3827 = vst [vmem:[#allocation1] ss:$9 sm:$0xff] %v3766
  %3828 = vst [vmem:[%s3803] ss:$9 sm:$0xff] %v3767
  %3829 = vst [vmem:[%s3805] ss:$9 sm:$0xff] %v3768
  %3830 = vst [vmem:[%s3807] ss:$9 sm:$0xff] %v3769
  %3831 = vst [vmem:[%s3809] ss:$9 sm:$0xff] %v3773
  %3832 = vst [vmem:[%s3811] ss:$9 sm:$0xff] %v3774
  %3833 = vst [vmem:[%s3813] ss:$9 sm:$0xff] %v3775
  %3834 = vst [vmem:[%s3815] ss:$9 sm:$0xff] %v3776
  %v3835 = vld [vmem:[#allocation1] sm:$0xff]
  %3836 = vst [vmem:[#allocation1] ss:$9 sm:$0xff] %v3777
  %3837 = vst [vmem:[%s3803] ss:$9 sm:$0xff] %v3781
  %3838 = vst [vmem:[%s3805] ss:$9 sm:$0xff] %v3782
  %3839 = vst [vmem:[%s3807] ss:$9 sm:$0xff] %v3783
  %3840 = vst [vmem:[%s3809] ss:$9 sm:$0xff] %v3784
  %3841 = vst [vmem:[%s3811] ss:$9 sm:$0xff] %v3785
  %3842 = vst [vmem:[%s3813] ss:$9 sm:$0xff] %v3789
  %3843 = vst [vmem:[%s3815] ss:$9 sm:$0xff] %v3790
  %v3844 = vld [vmem:[#allocation1] sm:$0xff]
  %3845 = vst [vmem:[#allocation1] ss:$9 sm:$0xff] %v3791
  %3846 = vst [vmem:[%s3803] ss:$9 sm:$0xff] %v3792
  %3847 = vst [vmem:[%s3805] ss:$9 sm:$0xff] %v3793
  %3848 = vst [vmem:[%s3807] ss:$9 sm:$0xff] %v3797
  %3849 = vst [vmem:[%s3809] ss:$9 sm:$0xff] %v3798
  %3850 = vst [vmem:[%s3811] ss:$9 sm:$0xff] %v3799
  %3851 = vst [vmem:[%s3813] ss:$9 sm:$0xff] %v3800
  %3852 = vst [vmem:[%s3815] ss:$9 sm:$0xff] %v3801
  %v3853 = vld [vmem:[#allocation1] sm:$0xff]
  %v3856 = vunpack.c.l.b16 %v3731
  %v3857 = vunpack.c.l.b16 %v3732
  %v3858 = vpack.c.b16 %v3857, %v3856
  %v3859 = vsel %vm3053, %v3817, 0
  %v3861 = vsel %vm3053, %v3826, 0
  %v3863 = vsel %vm3053, %v3835, 0
  %v3865 = vsel %vm3053, %v3844, 0
  %v3867 = vsel %vm3053, %v3853, 0
  %v3870 = vsel %vm3064, %v3858, 0
  %3872 = vmatpush.bf16.msra.mxu0 0
  %3873 = vmatpush.bf16.msra.mxu0 0
  %3874 = vmatpush.bf16.msra.mxu0 0
  %3875 = vmatpush.bf16.msra.mxu0 0
  %3876 = vmatpush.bf16.msra.mxu0 0
  %3877 = vmatpush.bf16.msra.mxu0 0
  %3878 = vmatpush.bf16.msra.mxu0 0
  %3879 = vmatpush.bf16.msra.mxu0 %v3870
  %3880 = vmatmul.bf16.gmra.mxu0 %v3859
  %v3881 = vpop.f32.mrf.mxu0
  %v3882 = vadd.f32 0.0, %v3881
  %v3883 = vpop.f32.mrf.mxu0
  %v3884 = vadd.f32 0.0, %v3883
  %3885 = vmatmul.bf16.gmra.mxu0 %v3861
  %v3886 = vpop.f32.mrf.mxu0
  %v3887 = vadd.f32 0.0, %v3886
  %v3888 = vpop.f32.mrf.mxu0
  %v3889 = vadd.f32 0.0, %v3888
  %3890 = vmatmul.bf16.gmra.mxu0 %v3863
  %v3891 = vpop.f32.mrf.mxu0
  %v3892 = vadd.f32 0.0, %v3891
  %v3893 = vpop.f32.mrf.mxu0
  %v3894 = vadd.f32 0.0, %v3893
  %3895 = vmatmul.bf16.gmra.mxu0 %v3865
  %v3896 = vpop.f32.mrf.mxu0
  %v3897 = vadd.f32 0.0, %v3896
  %v3898 = vpop.f32.mrf.mxu0
  %v3899 = vadd.f32 0.0, %v3898
  %3900 = vmatmul.bf16.gmra.mxu0 %v3867
  %v3901 = vpop.f32.mrf.mxu0
  %v3902 = vadd.f32 0.0, %v3901
  %v3903 = vpop.f32.mrf.mxu0
  %v3904 = vadd.f32 0.0, %v3903
  %3905 = vdwg.mxu0
  %v3916 = vrot.slane %v3882, 2
  %v3917 = vrot.slane %v3882, 4
  %v3918 = vrot.slane %v3882, 6
  %v3919 = vrot.slane %v3884, 2
  %v3920 = vrot.slane %v3884, 4
  %v3921 = vrot.slane %v3884, 6
  %v3922 = vrot.slane %v3887, 2
  %v3923 = vrot.slane %v3887, 4
  %v3924 = vrot.slane %v3887, 6
  %v3925 = vrot.slane %v3889, 2
  %v3926 = vrot.slane %v3889, 4
  %v3927 = vrot.slane %v3889, 6
  %v3928 = vrot.slane %v3892, 2
  %v3929 = vrot.slane %v3892, 4
  %v3930 = vrot.slane %v3892, 6
  %v3931 = vrot.slane %v3894, 2
  %v3932 = vrot.slane %v3894, 4
  %v3933 = vrot.slane %v3894, 6
  %v3934 = vrot.slane %v3897, 2
  %v3935 = vrot.slane %v3897, 4
  %v3936 = vrot.slane %v3897, 6
  %v3937 = vrot.slane %v3899, 2
  %v3938 = vrot.slane %v3899, 4
  %v3939 = vrot.slane %v3899, 6
  %v3940 = vrot.slane %v3902, 2
  %v3941 = vrot.slane %v3902, 4
  %v3942 = vrot.slane %v3902, 6
  %v3943 = vrot.slane %v3904, 2
  %v3944 = vrot.slane %v3904, 4
  %v3945 = vrot.slane %v3904, 6
  %v3976 = vadd.f32 %v3690, %v3882
  %v3977 = vadd.f32 %v3691, %v3916
  %v3978 = vadd.f32 %v3692, %v3917
  %v3979 = vadd.f32 %v3693, %v3918
  %v3980 = vadd.f32 %v3694, %v3884
  %v3981 = vadd.f32 %v3695, %v3919
  %v3982 = vadd.f32 %v3696, %v3920
  %v3983 = vadd.f32 %v3697, %v3921
  %v3984 = vadd.f32 %v3698, %v3887
  %v3985 = vadd.f32 %v3699, %v3922
  %v3986 = vadd.f32 %v3700, %v3923
  %v3987 = vadd.f32 %v3701, %v3924
  %v3988 = vadd.f32 %v3702, %v3889
  %v3989 = vadd.f32 %v3703, %v3925
  %v3990 = vadd.f32 %v3704, %v3926
  %v3991 = vadd.f32 %v3705, %v3927
  %v3992 = vadd.f32 %v3706, %v3892
  %v3993 = vadd.f32 %v3707, %v3928
  %v3994 = vadd.f32 %v3708, %v3929
  %v3995 = vadd.f32 %v3709, %v3930
  %v3996 = vadd.f32 %v3710, %v3894
  %v3997 = vadd.f32 %v3711, %v3931
  %v3998 = vadd.f32 %v3712, %v3932
  %v3999 = vadd.f32 %v3713, %v3933
  %v4000 = vadd.f32 %v3714, %v3897
  %v4001 = vadd.f32 %v3715, %v3934
  %v4002 = vadd.f32 %v3716, %v3935
  %v4003 = vadd.f32 %v3717, %v3936
  %v4004 = vadd.f32 %v3718, %v3899
  %v4005 = vadd.f32 %v3719, %v3937
  %v4006 = vadd.f32 %v3720, %v3938
  %v4007 = vadd.f32 %v3721, %v3939
  %v4008 = vadd.f32 %v3722, %v3902
  %v4009 = vadd.f32 %v3723, %v3940
  %v4010 = vadd.f32 %v3724, %v3941
  %v4011 = vadd.f32 %v3725, %v3942
  %v4012 = vadd.f32 %v3726, %v3904
  %v4013 = vadd.f32 %v3727, %v3943
  %v4014 = vadd.f32 %v3728, %v3944
  %v4015 = vadd.f32 %v3729, %v3945
  %v4016 = vmul.f32 %v3976, %v3976
  %v4017 = vmul.f32 %v3977, %v3977
  %v4018 = vmul.f32 %v3978, %v3978
  %v4019 = vmul.f32 %v3979, %v3979
  %v4020 = vmul.f32 %v3980, %v3980
  %v4021 = vmul.f32 %v3981, %v3981
  %v4022 = vmul.f32 %v3982, %v3982
  %v4023 = vmul.f32 %v3983, %v3983
  %v4024 = vmul.f32 %v3984, %v3984
  %v4025 = vmul.f32 %v3985, %v3985
  %v4026 = vmul.f32 %v3986, %v3986
  %v4027 = vmul.f32 %v3987, %v3987
  %v4028 = vmul.f32 %v3988, %v3988
  %v4029 = vmul.f32 %v3989, %v3989
  %v4030 = vmul.f32 %v3990, %v3990
  %v4031 = vmul.f32 %v3991, %v3991
  %v4032 = vmul.f32 %v3992, %v3992
  %v4033 = vmul.f32 %v3993, %v3993
  %v4034 = vmul.f32 %v3994, %v3994
  %v4035 = vmul.f32 %v3995, %v3995
  %v4036 = vmul.f32 %v3996, %v3996
  %v4037 = vmul.f32 %v3997, %v3997
  %v4038 = vmul.f32 %v3998, %v3998
  %v4039 = vmul.f32 %v3999, %v3999
  %v4040 = vmul.f32 %v4000, %v4000
  %v4041 = vmul.f32 %v4001, %v4001
  %v4042 = vmul.f32 %v4002, %v4002
  %v4043 = vmul.f32 %v4003, %v4003
  %v4044 = vmul.f32 %v4004, %v4004
  %v4045 = vmul.f32 %v4005, %v4005
  %v4046 = vmul.f32 %v4006, %v4006
  %v4047 = vmul.f32 %v4007, %v4007
  %v4048 = vmul.f32 %v4008, %v4008
  %v4049 = vmul.f32 %v4009, %v4009
  %v4050 = vmul.f32 %v4010, %v4010
  %v4051 = vmul.f32 %v4011, %v4011
  %v4052 = vmul.f32 %v4012, %v4012
  %v4053 = vmul.f32 %v4013, %v4013
  %v4054 = vmul.f32 %v4014, %v4014
  %v4055 = vmul.f32 %v4015, %v4015
  %4096 = vst [vmem:[#allocation1] ss:$4 sm:$0xff] %v3976
  %s4097 = scalar_lea.vmem [#allocation1], 1
  %4098 = vst [vmem:[%s4097] ss:$4 sm:$0xff] %v3977
  %s4099 = scalar_lea.vmem [#allocation1], 2
  %4100 = vst [vmem:[%s4099] ss:$4 sm:$0xff] %v3978
  %s4101 = scalar_lea.vmem [#allocation1], 3
  %4102 = vst [vmem:[%s4101] ss:$4 sm:$0xff] %v3979
  %s4103 = scalar_lea.vmem [#allocation1], 32
  %4104 = vst [vmem:[%s4103] ss:$4 sm:$0xff] %v3980
  %v4105 = vld.sshfl [vmem:[#allocation1] sm:$0xff pattern:$0x73625140]
  %v4106 = vld.sshfl [vmem:[#allocation1 + $0x20] sm:$0xff pattern:$0x73625140]
  %4107 = vst [vmem:[#allocation1] ss:$4 sm:$0xff] %v3981
  %4108 = vst [vmem:[%s4097] ss:$4 sm:$0xff] %v3982
  %4109 = vst [vmem:[%s4099] ss:$4 sm:$0xff] %v3983
  %4110 = vst [vmem:[%s4101] ss:$4 sm:$0xff] %v3984
  %4111 = vst [vmem:[%s4103] ss:$4 sm:$0xff] %v3985
  %v4112 = vld.sshfl [vmem:[#allocation1] sm:$0xff pattern:$0x73625140]
  %v4113 = vld.sshfl [vmem:[#allocation1 + $0x20] sm:$0xff pattern:$0x73625140]
  %4114 = vst [vmem:[#allocation1] ss:$4 sm:$0xff] %v3986
  %4115 = vst [vmem:[%s4097] ss:$4 sm:$0xff] %v3987
  %4116 = vst [vmem:[%s4099] ss:$4 sm:$0xff] %v3988
  %4117 = vst [vmem:[%s4101] ss:$4 sm:$0xff] %v3989
  %4118 = vst [vmem:[%s4103] ss:$4 sm:$0xff] %v3990
  %v4119 = vld.sshfl [vmem:[#allocation1] sm:$0xff pattern:$0x73625140]
  %v4120 = vld.sshfl [vmem:[#allocation1 + $0x20] sm:$0xff pattern:$0x73625140]
  %4121 = vst [vmem:[#allocation1] ss:$4 sm:$0xff] %v3991
  %4122 = vst [vmem:[%s4097] ss:$4 sm:$0xff] %v3992
  %4123 = vst [vmem:[%s4099] ss:$4 sm:$0xff] %v3993
  %4124 = vst [vmem:[%s4101] ss:$4 sm:$0xff] %v3994
  %4125 = vst [vmem:[%s4103] ss:$4 sm:$0xff] %v3995
  %v4126 = vld.sshfl [vmem:[#allocation1] sm:$0xff pattern:$0x73625140]
  %v4127 = vld.sshfl [vmem:[#allocation1 + $0x20] sm:$0xff pattern:$0x73625140]
  %4128 = vst [vmem:[#allocation1] ss:$4 sm:$0xff] %v3996
  %4129 = vst [vmem:[%s4097] ss:$4 sm:$0xff] %v3997
  %4130 = vst [vmem:[%s4099] ss:$4 sm:$0xff] %v3998
  %4131 = vst [vmem:[%s4101] ss:$4 sm:$0xff] %v3999
  %4132 = vst [vmem:[%s4103] ss:$4 sm:$0xff] %v4000
  %v4133 = vld.sshfl [vmem:[#allocation1] sm:$0xff pattern:$0x73625140]
  %v4134 = vld.sshfl [vmem:[#allocation1 + $0x20] sm:$0xff pattern:$0x73625140]
  %4135 = vst [vmem:[#allocation1] ss:$4 sm:$0xff] %v4001
  %4136 = vst [vmem:[%s4097] ss:$4 sm:$0xff] %v4002
  %4137 = vst [vmem:[%s4099] ss:$4 sm:$0xff] %v4003
  %4138 = vst [vmem:[%s4101] ss:$4 sm:$0xff] %v4004
  %4139 = vst [vmem:[%s4103] ss:$4 sm:$0xff] %v4005
  %v4140 = vld.sshfl [vmem:[#allocation1] sm:$0xff pattern:$0x73625140]
  %v4141 = vld.sshfl [vmem:[#allocation1 + $0x20] sm:$0xff pattern:$0x73625140]
  %4142 = vst [vmem:[#allocation1] ss:$4 sm:$0xff] %v4006
  %4143 = vst [vmem:[%s4097] ss:$4 sm:$0xff] %v4007
  %4144 = vst [vmem:[%s4099] ss:$4 sm:$0xff] %v4008
  %4145 = vst [vmem:[%s4101] ss:$4 sm:$0xff] %v4009
  %4146 = vst [vmem:[%s4103] ss:$4 sm:$0xff] %v4010
  %v4147 = vld.sshfl [vmem:[#allocation1] sm:$0xff pattern:$0x73625140]
  %v4148 = vld.sshfl [vmem:[#allocation1 + $0x20] sm:$0xff pattern:$0x73625140]
  %4149 = vst [vmem:[#allocation1] ss:$4 sm:$0xff] %v4011
  %4150 = vst [vmem:[%s4097] ss:$4 sm:$0xff] %v4012
  %4151 = vst [vmem:[%s4099] ss:$4 sm:$0xff] %v4013
  %4152 = vst [vmem:[%s4101] ss:$4 sm:$0xff] %v4014
  %4153 = vst [vmem:[%s4103] ss:$4 sm:$0xff] %v4015
  %v4154 = vld.sshfl [vmem:[#allocation1] sm:$0xff pattern:$0x73625140]
  %v4155 = vld.sshfl [vmem:[#allocation1 + $0x20] sm:$0xff pattern:$0x73625140]
  %v4172 = vsel %vm2064, %v4105, 0.0
  %v4173 = vsel %vm2064, %v4112, 0.0
  %v4174 = vadd.f32 %v4172, %v4173
  %v4175 = vsel %vm2064, %v4119, 0.0
  %v4176 = vadd.f32 %v4174, %v4175
  %v4177 = vsel %vm2064, %v4126, 0.0
  %v4178 = vadd.f32 %v4176, %v4177
  %v4179 = vsel %vm2064, %v4133, 0.0
  %v4180 = vadd.f32 %v4178, %v4179
  %v4181 = vsel %vm2064, %v4140, 0.0
  %v4182 = vadd.f32 %v4180, %v4181
  %v4183 = vsel %vm2064, %v4147, 0.0
  %v4184 = vadd.f32 %v4182, %v4183
  %v4185 = vsel %vm2064, %v4154, 0.0
  %v4186 = vadd.f32 %v4184, %v4185
  %v4187 = vsel %vm2080, %v4106, 0.0
  %v4188 = vsel %vm2080, %v4113, 0.0
  %v4189 = vadd.f32 %v4187, %v4188
  %v4190 = vsel %vm2080, %v4120, 0.0
  %v4191 = vadd.f32 %v4189, %v4190
  %v4192 = vsel %vm2080, %v4127, 0.0
  %v4193 = vadd.f32 %v4191, %v4192
  %v4194 = vsel %vm2080, %v4134, 0.0
  %v4195 = vadd.f32 %v4193, %v4194
  %v4196 = vsel %vm2080, %v4141, 0.0
  %v4197 = vadd.f32 %v4195, %v4196
  %v4198 = vsel %vm2080, %v4148, 0.0
  %v4199 = vadd.f32 %v4197, %v4198
  %v4200 = vsel %vm2080, %v4155, 0.0
  %v4201 = vadd.f32 %v4199, %v4200
  %4242 = vst [vmem:[#allocation1] ss:$4 sm:$0xff] %v4016
  %s4243 = scalar_lea.vmem [#allocation1], 1
  %4244 = vst [vmem:[%s4243] ss:$4 sm:$0xff] %v4017
  %s4245 = scalar_lea.vmem [#allocation1], 2
  %4246 = vst [vmem:[%s4245] ss:$4 sm:$0xff] %v4018
  %s4247 = scalar_lea.vmem [#allocation1], 3
  %4248 = vst [vmem:[%s4247] ss:$4 sm:$0xff] %v4019
  %s4249 = scalar_lea.vmem [#allocation1], 32
  %4250 = vst [vmem:[%s4249] ss:$4 sm:$0xff] %v4020
  %v4251 = vld.sshfl [vmem:[#allocation1] sm:$0xff pattern:$0x73625140]
  %v4252 = vld.sshfl [vmem:[#allocation1 + $0x20] sm:$0xff pattern:$0x73625140]
  %4253 = vst [vmem:[#allocation1] ss:$4 sm:$0xff] %v4021
  %4254 = vst [vmem:[%s4243] ss:$4 sm:$0xff] %v4022
  %4255 = vst [vmem:[%s4245] ss:$4 sm:$0xff] %v4023
  %4256 = vst [vmem:[%s4247] ss:$4 sm:$0xff] %v4024
  %4257 = vst [vmem:[%s4249] ss:$4 sm:$0xff] %v4025
  %v4258 = vld.sshfl [vmem:[#allocation1] sm:$0xff pattern:$0x73625140]
  %v4259 = vld.sshfl [vmem:[#allocation1 + $0x20] sm:$0xff pattern:$0x73625140]
  %4260 = vst [vmem:[#allocation1] ss:$4 sm:$0xff] %v4026
  %4261 = vst [vmem:[%s4243] ss:$4 sm:$0xff] %v4027
  %4262 = vst [vmem:[%s4245] ss:$4 sm:$0xff] %v4028
  %4263 = vst [vmem:[%s4247] ss:$4 sm:$0xff] %v4029
  %4264 = vst [vmem:[%s4249] ss:$4 sm:$0xff] %v4030
  %v4265 = vld.sshfl [vmem:[#allocation1] sm:$0xff pattern:$0x73625140]
  %v4266 = vld.sshfl [vmem:[#allocation1 + $0x20] sm:$0xff pattern:$0x73625140]
  %4267 = vst [vmem:[#allocation1] ss:$4 sm:$0xff] %v4031
  %4268 = vst [vmem:[%s4243] ss:$4 sm:$0xff] %v4032
  %4269 = vst [vmem:[%s4245] ss:$4 sm:$0xff] %v4033
  %4270 = vst [vmem:[%s4247] ss:$4 sm:$0xff] %v4034
  %4271 = vst [vmem:[%s4249] ss:$4 sm:$0xff] %v4035
  %v4272 = vld.sshfl [vmem:[#allocation1] sm:$0xff pattern:$0x73625140]
  %v4273 = vld.sshfl [vmem:[#allocation1 + $0x20] sm:$0xff pattern:$0x73625140]
  %4274 = vst [vmem:[#allocation1] ss:$4 sm:$0xff] %v4036
  %4275 = vst [vmem:[%s4243] ss:$4 sm:$0xff] %v4037
  %4276 = vst [vmem:[%s4245] ss:$4 sm:$0xff] %v4038
  %4277 = vst [vmem:[%s4247] ss:$4 sm:$0xff] %v4039
  %4278 = vst [vmem:[%s4249] ss:$4 sm:$0xff] %v4040
  %v4279 = vld.sshfl [vmem:[#allocation1] sm:$0xff pattern:$0x73625140]
  %v4280 = vld.sshfl [vmem:[#allocation1 + $0x20] sm:$0xff pattern:$0x73625140]
  %4281 = vst [vmem:[#allocation1] ss:$4 sm:$0xff] %v4041
  %4282 = vst [vmem:[%s4243] ss:$4 sm:$0xff] %v4042
  %4283 = vst [vmem:[%s4245] ss:$4 sm:$0xff] %v4043
  %4284 = vst [vmem:[%s4247] ss:$4 sm:$0xff] %v4044
  %4285 = vst [vmem:[%s4249] ss:$4 sm:$0xff] %v4045
  %v4286 = vld.sshfl [vmem:[#allocation1] sm:$0xff pattern:$0x73625140]
  %v4287 = vld.sshfl [vmem:[#allocation1 + $0x20] sm:$0xff pattern:$0x73625140]
  %4288 = vst [vmem:[#allocation1] ss:$4 sm:$0xff] %v4046
  %4289 = vst [vmem:[%s4243] ss:$4 sm:$0xff] %v4047
  %4290 = vst [vmem:[%s4245] ss:$4 sm:$0xff] %v4048
  %4291 = vst [vmem:[%s4247] ss:$4 sm:$0xff] %v4049
  %4292 = vst [vmem:[%s4249] ss:$4 sm:$0xff] %v4050
  %v4293 = vld.sshfl [vmem:[#allocation1] sm:$0xff pattern:$0x73625140]
  %v4294 = vld.sshfl [vmem:[#allocation1 + $0x20] sm:$0xff pattern:$0x73625140]
  %4295 = vst [vmem:[#allocation1] ss:$4 sm:$0xff] %v4051
  %4296 = vst [vmem:[%s4243] ss:$4 sm:$0xff] %v4052
  %4297 = vst [vmem:[%s4245] ss:$4 sm:$0xff] %v4053
  %4298 = vst [vmem:[%s4247] ss:$4 sm:$0xff] %v4054
  %4299 = vst [vmem:[%s4249] ss:$4 sm:$0xff] %v4055
  %v4300 = vld.sshfl [vmem:[#allocation1] sm:$0xff pattern:$0x73625140]
  %v4301 = vld.sshfl [vmem:[#allocation1 + $0x20] sm:$0xff pattern:$0x73625140]
  %v4318 = vsel %vm2064, %v4251, 0.0
  %v4319 = vsel %vm2064, %v4258, 0.0
  %v4320 = vadd.f32 %v4318, %v4319
  %v4321 = vsel %vm2064, %v4265, 0.0
  %v4322 = vadd.f32 %v4320, %v4321
  %v4323 = vsel %vm2064, %v4272, 0.0
  %v4324 = vadd.f32 %v4322, %v4323
  %v4325 = vsel %vm2064, %v4279, 0.0
  %v4326 = vadd.f32 %v4324, %v4325
  %v4327 = vsel %vm2064, %v4286, 0.0
  %v4328 = vadd.f32 %v4326, %v4327
  %v4329 = vsel %vm2064, %v4293, 0.0
  %v4330 = vadd.f32 %v4328, %v4329
  %v4331 = vsel %vm2064, %v4300, 0.0
  %v4332 = vadd.f32 %v4330, %v4331
  %v4333 = vsel %vm2080, %v4252, 0.0
  %v4334 = vsel %vm2080, %v4259, 0.0
  %v4335 = vadd.f32 %v4333, %v4334
  %v4336 = vsel %vm2080, %v4266, 0.0
  %v4337 = vadd.f32 %v4335, %v4336
  %v4338 = vsel %vm2080, %v4273, 0.0
  %v4339 = vadd.f32 %v4337, %v4338
  %v4340 = vsel %vm2080, %v4280, 0.0
  %v4341 = vadd.f32 %v4339, %v4340
  %v4342 = vsel %vm2080, %v4287, 0.0
  %v4343 = vadd.f32 %v4341, %v4342
  %v4344 = vsel %vm2080, %v4294, 0.0
  %v4345 = vadd.f32 %v4343, %v4344
  %v4346 = vsel %vm2080, %v4301, 0.0
  %v4347 = vadd.f32 %v4345, %v4346
  %v4348 = vsel %vm2064, %v4186, 0.0
  %v4349 = vsel %vm2080, %v4201, 0.0
  %v4350 = vadd.f32 %v4348, %v4349
  %v4351 = vrot.slane %v4350, 4
  %v4352 = vadd.f32 %v4350, %v4351
  %v4353 = vrot.slane %v4352, 2
  %v4354 = vadd.f32 %v4352, %v4353
  %v4355 = vrot.slane %v4354, 1
  %v4356 = vadd.f32 %v4354, %v4355
  %v4357 = vsel %vm2064, %v4332, 0.0
  %v4358 = vsel %vm2080, %v4347, 0.0
  %v4359 = vadd.f32 %v4357, %v4358
  %v4360 = vrot.slane %v4359, 4
  %v4361 = vadd.f32 %v4359, %v4360
  %v4362 = vrot.slane %v4361, 2
  %v4363 = vadd.f32 %v4361, %v4362
  %v4364 = vrot.slane %v4363, 1
  %v4365 = vadd.f32 %v4363, %v4364
  %v4366 = vmul.f32 %v4356, %v2266
  %v4367 = vmul.f32 %v4365, %v2266
  %v4368 = vmul.f32 %v4366, %v4366
  %v4369 = vsub.f32 %v4367, %v4368
  %v4370 = vmax.f32 %v4369, 0.0
  %v4371 = vadd.f32 %v4370, 1e-05
  %v4372 = vrsqrt.pop %v4371
  %v4373 = vmul.f32 %v4372, %v4371
  %v4374 = vmul.f32 %v4373, %v4372
  %v4375 = vmul.f32 0.5, %v4374
  %v4376 = vsub.f32 1.5, %v4375
  %v4377 = vmul.f32 %v4372, %v4376
  %vm4378 = vweird.f32 %v4371
  %vm4379 = vweird.f32 %v4372
  %vm4380 = vmor %vm4378, %vm4379
  %v4381 = vsel %vm4380, %v4372, %v4377
  %v4382 = vmul.f32 %v24, %v4381
  %v4384 = vrot.slane %v24, 2
  %v4386 = vmul.f32 %v4382, %v4384
  %v4388 = vrot.slane %v4366, 2
  %v4389 = vrot.slane %v4366, 4
  %v4390 = vrot.slane %v4366, 6
  %v4394 = vsub.f32 %v3976, %v4366
  %v4395 = vsub.f32 %v3977, %v4388
  %v4396 = vsub.f32 %v3978, %v4389
  %v4397 = vsub.f32 %v3979, %v4390
  %v4398 = vsub.f32 %v3980, %v4366
  %v4399 = vsub.f32 %v3981, %v4366
  %v4400 = vsub.f32 %v3982, %v4388
  %v4401 = vsub.f32 %v3983, %v4389
  %v4402 = vsub.f32 %v3984, %v4390
  %v4403 = vsub.f32 %v3985, %v4366
  %v4404 = vsub.f32 %v3986, %v4366
  %v4405 = vsub.f32 %v3987, %v4388
  %v4406 = vsub.f32 %v3988, %v4389
  %v4407 = vsub.f32 %v3989, %v4390
  %v4408 = vsub.f32 %v3990, %v4366
  %v4409 = vsub.f32 %v3991, %v4366
  %v4410 = vsub.f32 %v3992, %v4388
  %v4411 = vsub.f32 %v3993, %v4389
  %v4412 = vsub.f32 %v3994, %v4390
  %v4413 = vsub.f32 %v3995, %v4366
  %v4414 = vsub.f32 %v3996, %v4366
  %v4415 = vsub.f32 %v3997, %v4388
  %v4416 = vsub.f32 %v3998, %v4389
  %v4417 = vsub.f32 %v3999, %v4390
  %v4418 = vsub.f32 %v4000, %v4366
  %v4419 = vsub.f32 %v4001, %v4366
  %v4420 = vsub.f32 %v4002, %v4388
  %v4421 = vsub.f32 %v4003, %v4389
  %v4422 = vsub.f32 %v4004, %v4390
  %v4423 = vsub.f32 %v4005, %v4366
  %v4424 = vsub.f32 %v4006, %v4366
  %v4425 = vsub.f32 %v4007, %v4388
  %v4426 = vsub.f32 %v4008, %v4389
  %v4427 = vsub.f32 %v4009, %v4390
  %v4428 = vsub.f32 %v4010, %v4366
  %v4429 = vsub.f32 %v4011, %v4366
  %v4430 = vsub.f32 %v4012, %v4388
  %v4431 = vsub.f32 %v4013, %v4389
  %v4432 = vsub.f32 %v4014, %v4390
  %v4433 = vsub.f32 %v4015, %v4366
  %v4434 = vperm.slane %v4386, 4
  %v4436 = vrot.slane %v4434, 2
  %v4437 = vrot.slane %v4434, 4
  %v4438 = vrot.slane %v4434, 6
  %v4442 = vmul.f32 %v4394, %v4434
  %v4443 = vmul.f32 %v4395, %v4436
  %v4444 = vmul.f32 %v4396, %v4437
  %v4445 = vmul.f32 %v4397, %v4438
  %v4446 = vmul.f32 %v4398, %v4434
  %v4447 = vmul.f32 %v4399, %v4434
  %v4448 = vmul.f32 %v4400, %v4436
  %v4449 = vmul.f32 %v4401, %v4437
  %v4450 = vmul.f32 %v4402, %v4438
  %v4451 = vmul.f32 %v4403, %v4434
  %v4452 = vmul.f32 %v4404, %v4434
  %v4453 = vmul.f32 %v4405, %v4436
  %v4454 = vmul.f32 %v4406, %v4437
  %v4455 = vmul.f32 %v4407, %v4438
  %v4456 = vmul.f32 %v4408, %v4434
  %v4457 = vmul.f32 %v4409, %v4434
  %v4458 = vmul.f32 %v4410, %v4436
  %v4459 = vmul.f32 %v4411, %v4437
  %v4460 = vmul.f32 %v4412, %v4438
  %v4461 = vmul.f32 %v4413, %v4434
  %v4462 = vmul.f32 %v4414, %v4434
  %v4463 = vmul.f32 %v4415, %v4436
  %v4464 = vmul.f32 %v4416, %v4437
  %v4465 = vmul.f32 %v4417, %v4438
  %v4466 = vmul.f32 %v4418, %v4434
  %v4467 = vmul.f32 %v4419, %v4434
  %v4468 = vmul.f32 %v4420, %v4436
  %v4469 = vmul.f32 %v4421, %v4437
  %v4470 = vmul.f32 %v4422, %v4438
  %v4471 = vmul.f32 %v4423, %v4434
  %v4472 = vmul.f32 %v4424, %v4434
  %v4473 = vmul.f32 %v4425, %v4436
  %v4474 = vmul.f32 %v4426, %v4437
  %v4475 = vmul.f32 %v4427, %v4438
  %v4476 = vmul.f32 %v4428, %v4434
  %v4477 = vmul.f32 %v4429, %v4434
  %v4478 = vmul.f32 %v4430, %v4436
  %v4479 = vmul.f32 %v4431, %v4437
  %v4480 = vmul.f32 %v4432, %v4438
  %v4481 = vmul.f32 %v4433, %v4434
  %4522 = vst [vmem:[#allocation1] ss:$4 sm:$0xff] %v4442
  %s4523 = scalar_lea.vmem [#allocation1], 1
  %4524 = vst [vmem:[%s4523] ss:$4 sm:$0xff] %v4443
  %s4525 = scalar_lea.vmem [#allocation1], 2
  %4526 = vst [vmem:[%s4525] ss:$4 sm:$0xff] %v4444
  %s4527 = scalar_lea.vmem [#allocation1], 3
  %4528 = vst [vmem:[%s4527] ss:$4 sm:$0xff] %v4445
  %s4529 = scalar_lea.vmem [#allocation1], 32
  %4530 = vst [vmem:[%s4529] ss:$4 sm:$0xff] %v4446
  %v4531 = vld.sshfl [vmem:[#allocation1] sm:$0xff pattern:$0x73625140]
  %v4532 = vld.sshfl [vmem:[#allocation1 + $0x20] sm:$0xff pattern:$0x73625140]
  %4533 = vst [vmem:[#allocation1] ss:$4 sm:$0xff] %v4447
  %4534 = vst [vmem:[%s4523] ss:$4 sm:$0xff] %v4448
  %4535 = vst [vmem:[%s4525] ss:$4 sm:$0xff] %v4449
  %4536 = vst [vmem:[%s4527] ss:$4 sm:$0xff] %v4450
  %4537 = vst [vmem:[%s4529] ss:$4 sm:$0xff] %v4451
  %v4538 = vld.sshfl [vmem:[#allocation1] sm:$0xff pattern:$0x73625140]
  %v4539 = vld.sshfl [vmem:[#allocation1 + $0x20] sm:$0xff pattern:$0x73625140]
  %4540 = vst [vmem:[#allocation1] ss:$4 sm:$0xff] %v4452
  %4541 = vst [vmem:[%s4523] ss:$4 sm:$0xff] %v4453
  %4542 = vst [vmem:[%s4525] ss:$4 sm:$0xff] %v4454
  %4543 = vst [vmem:[%s4527] ss:$4 sm:$0xff] %v4455
  %4544 = vst [vmem:[%s4529] ss:$4 sm:$0xff] %v4456
  %v4545 = vld.sshfl [vmem:[#allocation1] sm:$0xff pattern:$0x73625140]
  %v4546 = vld.sshfl [vmem:[#allocation1 + $0x20] sm:$0xff pattern:$0x73625140]
  %4547 = vst [vmem:[#allocation1] ss:$4 sm:$0xff] %v4457
  %4548 = vst [vmem:[%s4523] ss:$4 sm:$0xff] %v4458
  %4549 = vst [vmem:[%s4525] ss:$4 sm:$0xff] %v4459
  %4550 = vst [vmem:[%s4527] ss:$4 sm:$0xff] %v4460
  %4551 = vst [vmem:[%s4529] ss:$4 sm:$0xff] %v4461
  %v4552 = vld.sshfl [vmem:[#allocation1] sm:$0xff pattern:$0x73625140]
  %v4553 = vld.sshfl [vmem:[#allocation1 + $0x20] sm:$0xff pattern:$0x73625140]
  %4554 = vst [vmem:[#allocation1] ss:$4 sm:$0xff] %v4462
  %4555 = vst [vmem:[%s4523] ss:$4 sm:$0xff] %v4463
  %4556 = vst [vmem:[%s4525] ss:$4 sm:$0xff] %v4464
  %4557 = vst [vmem:[%s4527] ss:$4 sm:$0xff] %v4465
  %4558 = vst [vmem:[%s4529] ss:$4 sm:$0xff] %v4466
  %v4559 = vld.sshfl [vmem:[#allocation1] sm:$0xff pattern:$0x73625140]
  %v4560 = vld.sshfl [vmem:[#allocation1 + $0x20] sm:$0xff pattern:$0x73625140]
  %4561 = vst [vmem:[#allocation1] ss:$4 sm:$0xff] %v4467
  %4562 = vst [vmem:[%s4523] ss:$4 sm:$0xff] %v4468
  %4563 = vst [vmem:[%s4525] ss:$4 sm:$0xff] %v4469
  %4564 = vst [vmem:[%s4527] ss:$4 sm:$0xff] %v4470
  %4565 = vst [vmem:[%s4529] ss:$4 sm:$0xff] %v4471
  %v4566 = vld.sshfl [vmem:[#allocation1] sm:$0xff pattern:$0x73625140]
  %v4567 = vld.sshfl [vmem:[#allocation1 + $0x20] sm:$0xff pattern:$0x73625140]
  %4568 = vst [vmem:[#allocation1] ss:$4 sm:$0xff] %v4472
  %4569 = vst [vmem:[%s4523] ss:$4 sm:$0xff] %v4473
  %4570 = vst [vmem:[%s4525] ss:$4 sm:$0xff] %v4474
  %4571 = vst [vmem:[%s4527] ss:$4 sm:$0xff] %v4475
  %4572 = vst [vmem:[%s4529] ss:$4 sm:$0xff] %v4476
  %v4573 = vld.sshfl [vmem:[#allocation1] sm:$0xff pattern:$0x73625140]
  %v4574 = vld.sshfl [vmem:[#allocation1 + $0x20] sm:$0xff pattern:$0x73625140]
  %4575 = vst [vmem:[#allocation1] ss:$4 sm:$0xff] %v4477
  %4576 = vst [vmem:[%s4523] ss:$4 sm:$0xff] %v4478
  %4577 = vst [vmem:[%s4525] ss:$4 sm:$0xff] %v4479
  %4578 = vst [vmem:[%s4527] ss:$4 sm:$0xff] %v4480
  %4579 = vst [vmem:[%s4529] ss:$4 sm:$0xff] %v4481
  %v4580 = vld.sshfl [vmem:[#allocation1] sm:$0xff pattern:$0x73625140]
  %v4581 = vld.sshfl [vmem:[#allocation1 + $0x20] sm:$0xff pattern:$0x73625140]
  %v4598 = vsel %vm2064, %v4531, 0.0
  %4599 = vadd.xlane.f32.xlu0 %v4598
  %v4600 = vpop.xlane.xlu0 %4599
  %v4601 = vsel %vm2080, %v4532, 0.0
  %4602 = vadd.xlane.f32.xlu0 %v4601
  %v4603 = vpop.xlane.xlu0 %4602
  %v4604 = vsel %vm2064, %v4538, 0.0
  %4605 = vadd.xlane.f32.xlu0 %v4604
  %v4606 = vpop.xlane.xlu0 %4605
  %v4607 = vsel %vm2080, %v4539, 0.0
  %4608 = vadd.xlane.f32.xlu0 %v4607
  %v4609 = vpop.xlane.xlu0 %4608
  %v4610 = vsel %vm2064, %v4545, 0.0
  %4611 = vadd.xlane.f32.xlu0 %v4610
  %v4612 = vpop.xlane.xlu0 %4611
  %v4613 = vsel %vm2080, %v4546, 0.0
  %4614 = vadd.xlane.f32.xlu0 %v4613
  %v4615 = vpop.xlane.xlu0 %4614
  %v4616 = vsel %vm2064, %v4552, 0.0
  %4617 = vadd.xlane.f32.xlu0 %v4616
  %v4618 = vpop.xlane.xlu0 %4617
  %v4619 = vsel %vm2080, %v4553, 0.0
  %4620 = vadd.xlane.f32.xlu0 %v4619
  %v4621 = vpop.xlane.xlu0 %4620
  %v4622 = vsel %vm2064, %v4559, 0.0
  %4623 = vadd.xlane.f32.xlu0 %v4622
  %v4624 = vpop.xlane.xlu0 %4623
  %v4625 = vsel %vm2080, %v4560, 0.0
  %4626 = vadd.xlane.f32.xlu0 %v4625
  %v4627 = vpop.xlane.xlu0 %4626
  %v4628 = vsel %vm2064, %v4566, 0.0
  %4629 = vadd.xlane.f32.xlu0 %v4628
  %v4630 = vpop.xlane.xlu0 %4629
  %v4631 = vsel %vm2080, %v4567, 0.0
  %4632 = vadd.xlane.f32.xlu0 %v4631
  %v4633 = vpop.xlane.xlu0 %4632
  %v4634 = vsel %vm2064, %v4573, 0.0
  %4635 = vadd.xlane.f32.xlu0 %v4634
  %v4636 = vpop.xlane.xlu0 %4635
  %v4637 = vsel %vm2080, %v4574, 0.0
  %4638 = vadd.xlane.f32.xlu0 %v4637
  %v4639 = vpop.xlane.xlu0 %4638
  %v4640 = vsel %vm2064, %v4580, 0.0
  %4641 = vadd.xlane.f32.xlu0 %v4640
  %v4642 = vpop.xlane.xlu0 %4641
  %v4643 = vsel %vm2080, %v4581, 0.0
  %4644 = vadd.xlane.f32.xlu0 %v4643
  %v4645 = vpop.xlane.xlu0 %4644
  %v4646 = vrot.slane %v24, 1
  %v4648 = vmul.f32 %v24, %v4646
  %vm4649 = vcmask 324613
  %v4650 = vsel %vm4649, %v4648, 0.0
  %4651 = vadd.xlane.f32.xlu0 %v4650
  %v4652 = vpop.xlane.xlu0 %4651
  %v4653 = vadd.f32 %v4652, %v4384
  %v4655 = vrot.slane %v4653, 5
  %s4656 = vtos %v4655
  %v4657 = vstv %s4656
  %v4659 = vadd.f32 %v4600, %v4657
  %v4660 = vadd.f32 %v4603, %v4657
  %v4661 = vadd.f32 %v4606, %v4657
  %v4662 = vadd.f32 %v4609, %v4657
  %v4663 = vadd.f32 %v4612, %v4657
  %v4664 = vadd.f32 %v4615, %v4657
  %v4665 = vadd.f32 %v4618, %v4657
  %v4666 = vadd.f32 %v4621, %v4657
  %v4667 = vadd.f32 %v4624, %v4657
  %v4668 = vadd.f32 %v4627, %v4657
  %v4669 = vadd.f32 %v4630, %v4657
  %v4670 = vadd.f32 %v4633, %v4657
  %v4671 = vadd.f32 %v4636, %v4657
  %v4672 = vadd.f32 %v4639, %v4657
  %v4673 = vadd.f32 %v4642, %v4657
  %v4674 = vadd.f32 %v4645, %v4657
  %v4675 = vsub.f32 0.0, %v4659
  %v4676 = vsub.f32 0.0, %v4660
  %v4677 = vsub.f32 0.0, %v4661
  %v4678 = vsub.f32 0.0, %v4662
  %v4679 = vsub.f32 0.0, %v4663
  %v4680 = vsub.f32 0.0, %v4664
  %v4681 = vsub.f32 0.0, %v4665
  %v4682 = vsub.f32 0.0, %v4666
  %v4683 = vsub.f32 0.0, %v4667
  %v4684 = vsub.f32 0.0, %v4668
  %v4685 = vsub.f32 0.0, %v4669
  %v4686 = vsub.f32 0.0, %v4670
  %v4687 = vsub.f32 0.0, %v4671
  %v4688 = vsub.f32 0.0, %v4672
  %v4689 = vsub.f32 0.0, %v4673
  %v4690 = vsub.f32 0.0, %v4674
  %v4691 = vmul.f32 %v4675, 1.442695
  %v4692 = vpow.pop %v4691
  %v4693 = vmul.f32 %v4676, 1.442695
  %v4694 = vpow.pop %v4693
  %v4695 = vmul.f32 %v4677, 1.442695
  %v4696 = vpow.pop %v4695
  %v4697 = vmul.f32 %v4678, 1.442695
  %v4698 = vpow.pop %v4697
  %v4699 = vmul.f32 %v4679, 1.442695
  %v4700 = vpow.pop %v4699
  %v4701 = vmul.f32 %v4680, 1.442695
  %v4702 = vpow.pop %v4701
  %v4703 = vmul.f32 %v4681, 1.442695
  %v4704 = vpow.pop %v4703
  %v4705 = vmul.f32 %v4682, 1.442695
  %v4706 = vpow.pop %v4705
  %v4707 = vmul.f32 %v4683, 1.442695
  %v4708 = vpow.pop %v4707
  %v4709 = vmul.f32 %v4684, 1.442695
  %v4710 = vpow.pop %v4709
  %v4711 = vmul.f32 %v4685, 1.442695
  %v4712 = vpow.pop %v4711
  %v4713 = vmul.f32 %v4686, 1.442695
  %v4714 = vpow.pop %v4713
  %v4715 = vmul.f32 %v4687, 1.442695
  %v4716 = vpow.pop %v4715
  %v4717 = vmul.f32 %v4688, 1.442695
  %v4718 = vpow.pop %v4717
  %v4719 = vmul.f32 %v4689, 1.442695
  %v4720 = vpow.pop %v4719
  %v4721 = vmul.f32 %v4690, 1.442695
  %v4722 = vpow.pop %v4721
  %v4723 = vadd.f32 %v4692, 1.0
  %v4724 = vadd.f32 %v4694, 1.0
  %v4725 = vadd.f32 %v4696, 1.0
  %v4726 = vadd.f32 %v4698, 1.0
  %v4727 = vadd.f32 %v4700, 1.0
  %v4728 = vadd.f32 %v4702, 1.0
  %v4729 = vadd.f32 %v4704, 1.0
  %v4730 = vadd.f32 %v4706, 1.0
  %v4731 = vadd.f32 %v4708, 1.0
  %v4732 = vadd.f32 %v4710, 1.0
  %v4733 = vadd.f32 %v4712, 1.0
  %v4734 = vadd.f32 %v4714, 1.0
  %v4735 = vadd.f32 %v4716, 1.0
  %v4736 = vadd.f32 %v4718, 1.0
  %v4737 = vadd.f32 %v4720, 1.0
  %v4738 = vadd.f32 %v4722, 1.0
  %v4739 = vrcp.pop %v4723
  %v4740 = vmul.f32 %v4723, %v4739
  %v4741 = vsub.f32 1.0, %v4740
  %v4742 = vmul.f32 %v4739, %v4741
  %v4743 = vadd.f32 %v4739, %v4742
  %vm4744 = vweird.f32 %v4723
  %vm4745 = vweird.f32 %v4739
  %vm4746 = vmor %vm4744, %vm4745
  %v4747 = vsel %vm4746, %v4739, %v4743
  %v4748 = vand.u32 2147483647, %v4723
  %vm4749 = vcmp.eq.f32.partialorder %v4748, 8.507059e+37
  %v4750 = vand.u32 %v4723, 2147483648
  %v4751 = vor.u32 1.1754944e-38, %v4750
  %v4752 = vsel %vm4749, %v4751, %v4747
  %v4753 = vmul.f32 1.0, %v4752
  %v4754 = vrcp.pop %v4724
  %v4755 = vmul.f32 %v4724, %v4754
  %v4756 = vsub.f32 1.0, %v4755
  %v4757 = vmul.f32 %v4754, %v4756
  %v4758 = vadd.f32 %v4754, %v4757
  %vm4759 = vweird.f32 %v4724
  %vm4760 = vweird.f32 %v4754
  %vm4761 = vmor %vm4759, %vm4760
  %v4762 = vsel %vm4761, %v4754, %v4758
  %v4763 = vand.u32 2147483647, %v4724
  %vm4764 = vcmp.eq.f32.partialorder %v4763, 8.507059e+37
  %v4765 = vand.u32 %v4724, 2147483648
  %v4766 = vor.u32 1.1754944e-38, %v4765
  %v4767 = vsel %vm4764, %v4766, %v4762
  %v4768 = vmul.f32 1.0, %v4767
  %v4769 = vrcp.pop %v4725
  %v4770 = vmul.f32 %v4725, %v4769
  %v4771 = vsub.f32 1.0, %v4770
  %v4772 = vmul.f32 %v4769, %v4771
  %v4773 = vadd.f32 %v4769, %v4772
  %vm4774 = vweird.f32 %v4725
  %vm4775 = vweird.f32 %v4769
  %vm4776 = vmor %vm4774, %vm4775
  %v4777 = vsel %vm4776, %v4769, %v4773
  %v4778 = vand.u32 2147483647, %v4725
  %vm4779 = vcmp.eq.f32.partialorder %v4778, 8.507059e+37
  %v4780 = vand.u32 %v4725, 2147483648
  %v4781 = vor.u32 1.1754944e-38, %v4780
  %v4782 = vsel %vm4779, %v4781, %v4777
  %v4783 = vmul.f32 1.0, %v4782
  %v4784 = vrcp.pop %v4726
  %v4785 = vmul.f32 %v4726, %v4784
  %v4786 = vsub.f32 1.0, %v4785
  %v4787 = vmul.f32 %v4784, %v4786
  %v4788 = vadd.f32 %v4784, %v4787
  %vm4789 = vweird.f32 %v4726
  %vm4790 = vweird.f32 %v4784
  %vm4791 = vmor %vm4789, %vm4790
  %v4792 = vsel %vm4791, %v4784, %v4788
  %v4793 = vand.u32 2147483647, %v4726
  %vm4794 = vcmp.eq.f32.partialorder %v4793, 8.507059e+37
  %v4795 = vand.u32 %v4726, 2147483648
  %v4796 = vor.u32 1.1754944e-38, %v4795
  %v4797 = vsel %vm4794, %v4796, %v4792
  %v4798 = vmul.f32 1.0, %v4797
  %v4799 = vrcp.pop %v4727
  %v4800 = vmul.f32 %v4727, %v4799
  %v4801 = vsub.f32 1.0, %v4800
  %v4802 = vmul.f32 %v4799, %v4801
  %v4803 = vadd.f32 %v4799, %v4802
  %vm4804 = vweird.f32 %v4727
  %vm4805 = vweird.f32 %v4799
  %vm4806 = vmor %vm4804, %vm4805
  %v4807 = vsel %vm4806, %v4799, %v4803
  %v4808 = vand.u32 2147483647, %v4727
  %vm4809 = vcmp.eq.f32.partialorder %v4808, 8.507059e+37
  %v4810 = vand.u32 %v4727, 2147483648
  %v4811 = vor.u32 1.1754944e-38, %v4810
  %v4812 = vsel %vm4809, %v4811, %v4807
  %v4813 = vmul.f32 1.0, %v4812
  %v4814 = vrcp.pop %v4728
  %v4815 = vmul.f32 %v4728, %v4814
  %v4816 = vsub.f32 1.0, %v4815
  %v4817 = vmul.f32 %v4814, %v4816
  %v4818 = vadd.f32 %v4814, %v4817
  %vm4819 = vweird.f32 %v4728
  %vm4820 = vweird.f32 %v4814
  %vm4821 = vmor %vm4819, %vm4820
  %v4822 = vsel %vm4821, %v4814, %v4818
  %v4823 = vand.u32 2147483647, %v4728
  %vm4824 = vcmp.eq.f32.partialorder %v4823, 8.507059e+37
  %v4825 = vand.u32 %v4728, 2147483648
  %v4826 = vor.u32 1.1754944e-38, %v4825
  %v4827 = vsel %vm4824, %v4826, %v4822
  %v4828 = vmul.f32 1.0, %v4827
  %v4829 = vrcp.pop %v4729
  %v4830 = vmul.f32 %v4729, %v4829
  %v4831 = vsub.f32 1.0, %v4830
  %v4832 = vmul.f32 %v4829, %v4831
  %v4833 = vadd.f32 %v4829, %v4832
  %vm4834 = vweird.f32 %v4729
  %vm4835 = vweird.f32 %v4829
  %vm4836 = vmor %vm4834, %vm4835
  %v4837 = vsel %vm4836, %v4829, %v4833
  %v4838 = vand.u32 2147483647, %v4729
  %vm4839 = vcmp.eq.f32.partialorder %v4838, 8.507059e+37
  %v4840 = vand.u32 %v4729, 2147483648
  %v4841 = vor.u32 1.1754944e-38, %v4840
  %v4842 = vsel %vm4839, %v4841, %v4837
  %v4843 = vmul.f32 1.0, %v4842
  %v4844 = vrcp.pop %v4730
  %v4845 = vmul.f32 %v4730, %v4844
  %v4846 = vsub.f32 1.0, %v4845
  %v4847 = vmul.f32 %v4844, %v4846
  %v4848 = vadd.f32 %v4844, %v4847
  %vm4849 = vweird.f32 %v4730
  %vm4850 = vweird.f32 %v4844
  %vm4851 = vmor %vm4849, %vm4850
  %v4852 = vsel %vm4851, %v4844, %v4848
  %v4853 = vand.u32 2147483647, %v4730
  %vm4854 = vcmp.eq.f32.partialorder %v4853, 8.507059e+37
  %v4855 = vand.u32 %v4730, 2147483648
  %v4856 = vor.u32 1.1754944e-38, %v4855
  %v4857 = vsel %vm4854, %v4856, %v4852
  %v4858 = vmul.f32 1.0, %v4857
  %v4859 = vrcp.pop %v4731
  %v4860 = vmul.f32 %v4731, %v4859
  %v4861 = vsub.f32 1.0, %v4860
  %v4862 = vmul.f32 %v4859, %v4861
  %v4863 = vadd.f32 %v4859, %v4862
  %vm4864 = vweird.f32 %v4731
  %vm4865 = vweird.f32 %v4859
  %vm4866 = vmor %vm4864, %vm4865
  %v4867 = vsel %vm4866, %v4859, %v4863
  %v4868 = vand.u32 2147483647, %v4731
  %vm4869 = vcmp.eq.f32.partialorder %v4868, 8.507059e+37
  %v4870 = vand.u32 %v4731, 2147483648
  %v4871 = vor.u32 1.1754944e-38, %v4870
  %v4872 = vsel %vm4869, %v4871, %v4867
  %v4873 = vmul.f32 1.0, %v4872
  %v4874 = vrcp.pop %v4732
  %v4875 = vmul.f32 %v4732, %v4874
  %v4876 = vsub.f32 1.0, %v4875
  %v4877 = vmul.f32 %v4874, %v4876
  %v4878 = vadd.f32 %v4874, %v4877
  %vm4879 = vweird.f32 %v4732
  %vm4880 = vweird.f32 %v4874
  %vm4881 = vmor %vm4879, %vm4880
  %v4882 = vsel %vm4881, %v4874, %v4878
  %v4883 = vand.u32 2147483647, %v4732
  %vm4884 = vcmp.eq.f32.partialorder %v4883, 8.507059e+37
  %v4885 = vand.u32 %v4732, 2147483648
  %v4886 = vor.u32 1.1754944e-38, %v4885
  %v4887 = vsel %vm4884, %v4886, %v4882
  %v4888 = vmul.f32 1.0, %v4887
  %v4889 = vrcp.pop %v4733
  %v4890 = vmul.f32 %v4733, %v4889
  %v4891 = vsub.f32 1.0, %v4890
  %v4892 = vmul.f32 %v4889, %v4891
  %v4893 = vadd.f32 %v4889, %v4892
  %vm4894 = vweird.f32 %v4733
  %vm4895 = vweird.f32 %v4889
  %vm4896 = vmor %vm4894, %vm4895
  %v4897 = vsel %vm4896, %v4889, %v4893
  %v4898 = vand.u32 2147483647, %v4733
  %vm4899 = vcmp.eq.f32.partialorder %v4898, 8.507059e+37
  %v4900 = vand.u32 %v4733, 2147483648
  %v4901 = vor.u32 1.1754944e-38, %v4900
  %v4902 = vsel %vm4899, %v4901, %v4897
  %v4903 = vmul.f32 1.0, %v4902
  %v4904 = vrcp.pop %v4734
  %v4905 = vmul.f32 %v4734, %v4904
  %v4906 = vsub.f32 1.0, %v4905
  %v4907 = vmul.f32 %v4904, %v4906
  %v4908 = vadd.f32 %v4904, %v4907
  %vm4909 = vweird.f32 %v4734
  %vm4910 = vweird.f32 %v4904
  %vm4911 = vmor %vm4909, %vm4910
  %v4912 = vsel %vm4911, %v4904, %v4908
  %v4913 = vand.u32 2147483647, %v4734
  %vm4914 = vcmp.eq.f32.partialorder %v4913, 8.507059e+37
  %v4915 = vand.u32 %v4734, 2147483648
  %v4916 = vor.u32 1.1754944e-38, %v4915
  %v4917 = vsel %vm4914, %v4916, %v4912
  %v4918 = vmul.f32 1.0, %v4917
  %v4919 = vrcp.pop %v4735
  %v4920 = vmul.f32 %v4735, %v4919
  %v4921 = vsub.f32 1.0, %v4920
  %v4922 = vmul.f32 %v4919, %v4921
  %v4923 = vadd.f32 %v4919, %v4922
  %vm4924 = vweird.f32 %v4735
  %vm4925 = vweird.f32 %v4919
  %vm4926 = vmor %vm4924, %vm4925
  %v4927 = vsel %vm4926, %v4919, %v4923
  %v4928 = vand.u32 2147483647, %v4735
  %vm4929 = vcmp.eq.f32.partialorder %v4928, 8.507059e+37
  %v4930 = vand.u32 %v4735, 2147483648
  %v4931 = vor.u32 1.1754944e-38, %v4930
  %v4932 = vsel %vm4929, %v4931, %v4927
  %v4933 = vmul.f32 1.0, %v4932
  %v4934 = vrcp.pop %v4736
  %v4935 = vmul.f32 %v4736, %v4934
  %v4936 = vsub.f32 1.0, %v4935
  %v4937 = vmul.f32 %v4934, %v4936
  %v4938 = vadd.f32 %v4934, %v4937
  %vm4939 = vweird.f32 %v4736
  %vm4940 = vweird.f32 %v4934
  %vm4941 = vmor %vm4939, %vm4940
  %v4942 = vsel %vm4941, %v4934, %v4938
  %v4943 = vand.u32 2147483647, %v4736
  %vm4944 = vcmp.eq.f32.partialorder %v4943, 8.507059e+37
  %v4945 = vand.u32 %v4736, 2147483648
  %v4946 = vor.u32 1.1754944e-38, %v4945
  %v4947 = vsel %vm4944, %v4946, %v4942
  %v4948 = vmul.f32 1.0, %v4947
  %v4949 = vrcp.pop %v4737
  %v4950 = vmul.f32 %v4737, %v4949
  %v4951 = vsub.f32 1.0, %v4950
  %v4952 = vmul.f32 %v4949, %v4951
  %v4953 = vadd.f32 %v4949, %v4952
  %vm4954 = vweird.f32 %v4737
  %vm4955 = vweird.f32 %v4949
  %vm4956 = vmor %vm4954, %vm4955
  %v4957 = vsel %vm4956, %v4949, %v4953
  %v4958 = vand.u32 2147483647, %v4737
  %vm4959 = vcmp.eq.f32.partialorder %v4958, 8.507059e+37
  %v4960 = vand.u32 %v4737, 2147483648
  %v4961 = vor.u32 1.1754944e-38, %v4960
  %v4962 = vsel %vm4959, %v4961, %v4957
  %v4963 = vmul.f32 1.0, %v4962
  %v4964 = vrcp.pop %v4738
  %v4965 = vmul.f32 %v4738, %v4964
  %v4966 = vsub.f32 1.0, %v4965
  %v4967 = vmul.f32 %v4964, %v4966
  %v4968 = vadd.f32 %v4964, %v4967
  %vm4969 = vweird.f32 %v4738
  %vm4970 = vweird.f32 %v4964
  %vm4971 = vmor %vm4969, %vm4970
  %v4972 = vsel %vm4971, %v4964, %v4968
  %v4973 = vand.u32 2147483647, %v4738
  %vm4974 = vcmp.eq.f32.partialorder %v4973, 8.507059e+37
  %v4975 = vand.u32 %v4738, 2147483648
  %v4976 = vor.u32 1.1754944e-38, %v4975
  %v4977 = vsel %vm4974, %v4976, %v4972
  %v4978 = vmul.f32 1.0, %v4977
  %v4995 = vlaneseq
  %v4996 = vand.u32 %v4995, 127
  %v4997 = vperm.slane %v4753, %v4996
  %v4998 = vadd.s32 %v4996, 4294967288
  %v4999 = vperm.slane %v4768, %v4998
  %vm5000 = vcmask 130112
  %v5001 = vsel %vm5000, %v4999, %v4997
  %v5002 = vperm.slane %v4783, %v4996
  %v5003 = vperm.slane %v4798, %v4998
  %v5004 = vsel %vm5000, %v5003, %v5002
  %v5005 = vperm.slane %v4813, %v4996
  %v5006 = vperm.slane %v4828, %v4998
  %v5007 = vsel %vm5000, %v5006, %v5005
  %v5008 = vperm.slane %v4843, %v4996
  %v5009 = vperm.slane %v4858, %v4998
  %v5010 = vsel %vm5000, %v5009, %v5008
  %v5011 = vperm.slane %v4873, %v4996
  %v5012 = vperm.slane %v4888, %v4998
  %v5013 = vsel %vm5000, %v5012, %v5011
  %v5014 = vperm.slane %v4903, %v4996
  %v5015 = vperm.slane %v4918, %v4998
  %v5016 = vsel %vm5000, %v5015, %v5014
  %v5017 = vperm.slane %v4933, %v4996
  %v5018 = vperm.slane %v4948, %v4998
  %v5019 = vsel %vm5000, %v5018, %v5017
  %v5020 = vperm.slane %v4963, %v4996
  %v5021 = vperm.slane %v4978, %v4998
  %v5022 = vsel %vm5000, %v5021, %v5020
  %v5023 = vsel %vm821, %v5004, %v5001
  %v5024 = vsel %vm825, %v5007, %v5023
  %v5025 = vsel %vm829, %v5010, %v5024
  %vm5026 = vcmask 1044484
  %v5027 = vsel %vm5026, %v5013, %v5025
  %vm5028 = vcmask 1045509
  %v5029 = vsel %vm5028, %v5016, %v5027
  %vm5030 = vcmask 1046534
  %v5031 = vsel %vm5030, %v5019, %v5029
  %vm5032 = vcmask 1047559
  %v5033 = vsel %vm5032, %v5022, %v5031
  %5035 = vst.msk [vmem:[%s6] sm:$0xff] %vm3053, %v5033
  // Predicated region
  $region26: #{class_model_forward.1} parent=0 // pred_check
    _
  $region27: #{class_model_forward.1} parent=0 // pred_check_branch
    %5037 = sbr.rel (0) target = $region29
  $region28: #{class_model_forward.1} parent=0 // pred_region
    _
  $region29: #{class_model_forward.1} parent=0 // pred_fallthru
    _
  // Predicated region
  $region30: #{class_model_forward.1} parent=0 // pred_check
    _
  $region31: #{class_model_forward.1} parent=0 // pred_check_branch
    %5039 = sbr.rel (0) target = $region33
  $region32: #{class_model_forward.1} parent=0 // pred_region
    _
  $region33: #{class_model_forward.1} parent=0 // pred_fallthru
    _

</llo_original>
